<compile_context>
chip_gen: v7x
topology: tpu7x:2x2x1
jax: 0.10.0
libtpu: 0.0.40
codegen_flags: <defaults>
</compile_context>

<pallas_src>
import numpy as np

import jax
import jax.numpy as jnp
from jax.experimental import pallas as pl
from jax.experimental.pallas import tpu as pltpu


# -----------------------------------------------------------------------------
# Parameters (PyTorch layout) and kernel-layout preparation
# -----------------------------------------------------------------------------
def init_params(key, *, width, channel):
    """Deterministic parameters in PyTorch layout (Conv2d/Linear (out, in)).

    Weights are rounded through bf16 once so the Pallas kernel (which stores
    them as bf16) and the f32 reference use identical effective weight values;
    the only kernel-vs-reference difference is bf16 rounding of activations.
    """
    assert channel == 1, "Conv2d(1, 8, 5) in the module requires 1 input channel"
    D = channel * width * width
    PH = (width - 4) // 2
    F = 8 * PH * PH
    ks = jax.random.split(key, 8)

    def xavier(k, shape, fan_in, fan_out):
        std = (2.0 / (fan_in + fan_out)) ** 0.5
        w = std * jax.random.normal(k, shape, dtype=jnp.float32)
        return w.astype(jnp.bfloat16).astype(jnp.float32)

    wc_i = xavier(ks[0], (8, 1, 5, 5), 25, 200)            # layer1_conv weight
    bc_i = 0.1 * jax.random.normal(ks[1], (8,), dtype=jnp.float32)
    wc_g = xavier(ks[2], (8, 1, 5, 5), 25, 200)            # layer2_conv weight
    bc_g = 0.1 * jax.random.normal(ks[3], (8,), dtype=jnp.float32)
    W3 = xavier(ks[4], (D, 2 * F), 2 * F, D)               # layer3 Linear weight
    b3 = 0.1 * jax.random.normal(ks[5], (D,), dtype=jnp.float32)
    W4 = xavier(ks[6], (D, D), D, D)                       # layer4 Linear weight
    b4 = 0.1 * jax.random.normal(ks[7], (D,), dtype=jnp.float32)
    return (wc_i, bc_i, wc_g, bc_g, W3, b3, W4, b4)


def _expand_conv_weight_packed(wconv, width, f_pad):
    """Expand an (8,1,5,5) conv kernel into ONE packed quadrant matrix.

    Returns W of shape (width*width, 4*f_pad).  Quadrant q=(di,dj) occupies
    lane slab [q*f_pad, q*f_pad + F) with feature index f = (pi*PH + pj)*8 + c,
    such that for the row-major flattened image x:
        (x @ W)[q*f_pad + f] == Conv2d_nobias(x)[c, 2*pi + di, 2*pj + dj].
    MaxPool2d(2) is the elementwise max over the 4 slabs.  Every entry is a
    single conv-kernel value (or zero), so bf16 rounding of the conv kernel
    commutes exactly with this expansion.
    """
    wconv = np.asarray(wconv, dtype=np.float32)
    OC, IC, KH, KW = wconv.shape
    assert IC == 1
    OH = width - KH + 1
    PH = OH // 2
    F = OC * PH * PH
    assert F <= f_pad
    W = np.zeros((width * width, 4 * f_pad), dtype=np.float32)
    for di in range(2):
        for dj in range(2):
            base = (di * 2 + dj) * f_pad
            for pi in range(PH):
                for pj in range(PH):
                    i, j = 2 * pi + di, 2 * pj + dj
                    f0 = base + (pi * PH + pj) * OC
                    for ki in range(KH):
                        for kj in range(KW):
                            src = (i + ki) * width + (j + kj)
                            W[src, f0:f0 + OC] += wconv[:, 0, ki, kj]
    return W


def prepare_kernel_params(params, *, width, channel):
    """Convert PyTorch-layout params to the kernel layout (bf16 matmul weights)."""
    wc_i, bc_i, wc_g, bc_g, W3, b3, W4, b4 = params
    D = channel * width * width
    PH = (width - 4) // 2
    F = 8 * PH * PH
    F_pad = ((F + 127) // 128) * 128           # lane-multiple feature width

    wci = _expand_conv_weight_packed(wc_i, width, F_pad)   # (D, 4*F_pad)
    wcg = _expand_conv_weight_packed(wc_g, width, F_pad)   # (D, 4*F_pad)

    def pad_bias(bc):
        # (position-major, channel-minor) conv bias, zero-padded F -> F_pad.
        b = np.zeros((1, F_pad), dtype=np.float32)
        b[0, :F] = np.tile(np.asarray(bc, dtype=np.float32), PH * PH)
        return jnp.asarray(b)

    bci = pad_bias(bc_i)
    bcg = pad_bias(bc_g)

    # Permute layer3 columns from torch order (c, pi, pj) to kernel order
    # (pi, pj, c), transpose to (in, out) for y = x @ W, zero-pad rows F->F_pad
    # so the padded conv features contribute nothing.
    p = np.arange(PH * PH)
    c = np.arange(8)
    perm = (c[None, :] * (PH * PH) + p[:, None]).reshape(-1)   # perm[p*8+c] = c*PH*PH+p
    W3np = np.asarray(W3, dtype=np.float32)

    def pack_w3(cols):
        w = np.zeros((F_pad, D), dtype=np.float32)
        w[:F, :] = cols.T
        return w

    w3a = pack_w3(W3np[:, perm])                # image-branch half of cat()
    w3b = pack_w3(W3np[:, F + perm])            # grad-branch half of cat()
    w4t = np.asarray(W4, dtype=np.float32).T    # (D, D)

    bf16 = lambda w: jnp.asarray(w).astype(jnp.bfloat16)
    return (bf16(wci), bci, bf16(wcg), bcg,
            bf16(w3a), bf16(w3b), jnp.asarray(b3)[None, :].astype(jnp.float32),
            bf16(w4t), jnp.asarray(b4)[None, :].astype(jnp.float32))


# -----------------------------------------------------------------------------
# Pallas kernel
# -----------------------------------------------------------------------------
def gatn_conv_kernel(xi_ref, xg_ref,
                     wci_ref, bci_ref,      # image-branch packed conv weight/bias
                     wcg_ref, bcg_ref,      # grad-branch  packed conv weight/bias
                     w3a_ref, w3b_ref, b3_ref,
                     w4_ref, b4_ref,
                     o_ref):
    xi = xi_ref[...]                        # (TB, D) f32 flattened x_image
    xg = xg_ref[...]                        # (TB, D) f32 flattened x_grad
    xi_bf = xi.astype(jnp.bfloat16)         # bf16 LHS for the MXU; epilogue stays f32
    xg_bf = xg.astype(jnp.bfloat16)
    f_pad = bci_ref.shape[-1]               # lane-multiple quadrant slab width

    def conv_branch(x_bf, wq_ref, b_ref):
        # Conv2d(1,8,5) + ReLU + MaxPool2d(2): one wide bf16 MXU push, then
        # max over the four 128-aligned quadrant lane slabs (pure VPU).
        y = jnp.dot(x_bf, wq_ref[...], preferred_element_type=jnp.float32)
        m = jnp.maximum(
            jnp.maximum(y[:, 0 * f_pad:1 * f_pad], y[:, 1 * f_pad:2 * f_pad]),
            jnp.maximum(y[:, 2 * f_pad:3 * f_pad], y[:, 3 * f_pad:4 * f_pad]))
        # Bias is constant across the pool window and ReLU is monotone, so
        # both commute with the max.
        return jnp.maximum(m + b_ref[...], 0.0)          # (TB, F_pad) f32

    f_img = conv_branch(xi_bf, wci_ref, bci_ref)
    f_grd = conv_branch(xg_bf, wcg_ref, bcg_ref)

    # layer3: Linear(2F -> D) + ReLU, the cat() realized as a split matmul.
    h = (jnp.dot(f_img.astype(jnp.bfloat16), w3a_ref[...],
                 preferred_element_type=jnp.float32)
         + jnp.dot(f_grd.astype(jnp.bfloat16), w3b_ref[...],
                   preferred_element_type=jnp.float32)
         + b3_ref[...])
    h = jnp.maximum(h, 0.0)

    # layer4: Linear(D -> D) applied to (h + x_grad.flat)
    z = jnp.dot((h + xg).astype(jnp.bfloat16), w4_ref[...],
                preferred_element_type=jnp.float32) + b4_ref[...]

    # out_image: sigmoid((z + x_image.flat - 0.5) * 5)   (f32 epilogue)
    o_ref[...] = jax.nn.sigmoid((z + xi - 0.5) * 5.0)


# -----------------------------------------------------------------------------
# Wrapper
# -----------------------------------------------------------------------------
def _pick_block_b(batch, max_tile=128):
    """Largest multiple-of-8 batch tile <= max_tile, but keep >= 2 grid steps
    when the batch allows so v7x's two TensorCores both get a tile
    (dimension_semantics=("parallel",)); on v5e/v6e one big tile is fine."""
    bp8 = max(8, ((batch + 7) // 8) * 8)
    tile = min(max_tile, bp8)
    if bp8 // tile < 2 and bp8 >= 16:
        tile = max(8, ((bp8 // 2 + 7) // 8) * 8)
    return tile


def _vmem_limit_bytes():
    # Per-generation scoped-VMEM limit: 3/4 of physical VMEM (128 MiB on
    # v5e/v6e, 64 MiB on v7x), capped, leaving headroom for compiler scratch.
    try:
        cap = int(pltpu.get_tpu_info().vmem_capacity_bytes)
    except Exception:
        cap = 64 * 1024 * 1024
    return min((cap * 3) // 4, 96 * 1024 * 1024)


def gatn_conv_forward(x_image, x_grad, kernel_params, *, block_b=None):
    """x_image, x_grad: (B, 1, W, W) float32 NCHW. Returns (B, 1, W, W)."""
    B, C, W, _ = x_image.shape
    assert C == 1
    D = C * W * W
    wci, bci, wcg, bcg, w3a, w3b, b3, w4, b4 = kernel_params
    F4 = wci.shape[-1]          # 4 * F_pad
    F_pad = w3a.shape[0]
    assert wci.shape[0] == D and F4 == 4 * F_pad

    if block_b is None:
        block_b = _pick_block_b(B)
    block_b = max(8, (block_b // 8) * 8)

    xi = x_image.reshape(B, D).astype(jnp.float32)
    xg = x_grad.reshape(B, D).astype(jnp.float32)

    # Pad batch to a multiple of the tile so every tile is a full lane/sublane-
    # dense (8k, D) block (never a (<8, ...) masked store). Padded rows compute
    # garbage and are sliced off before return.
    Bp = ((B + block_b - 1) // block_b) * block_b
    if Bp != B:
        xi = jnp.pad(xi, ((0, Bp - B), (0, 0)))
        xg = jnp.pad(xg, ((0, Bp - B), (0, 0)))

    act_spec = pl.BlockSpec((block_b, D), lambda b: (b, 0))
    # Constant index_map: weight blocks are identical for every grid step, so
    # they are DMA'd once and stay resident in VMEM while activations stream.
    resident = lambda shape: pl.BlockSpec(shape, lambda b, _n=len(shape): (0,) * _n)

    # Advisory cost estimate so XLA schedules the surrounding graph correctly.
    nbytes = lambda a: int(a.size) * int(a.dtype.itemsize)
    flops = (2 * Bp * D * F4 * 2            # two packed-quadrant conv matmuls
             + 2 * Bp * F_pad * D * 2       # layer3 split matmul
             + 2 * Bp * D * D)              # layer4
    weight_bytes = sum(nbytes(w) for w in (wci, bci, wcg, bcg, w3a, w3b, b3, w4, b4))
    cost = pl.CostEstimate(
        flops=int(flops),
        transcendentals=int(Bp * D),                          # sigmoid
        bytes_accessed=int(weight_bytes + nbytes(xi) + nbytes(xg) + Bp * D * 4))

    out_flat = pl.pallas_call(
        gatn_conv_kernel,
        out_shape=jax.ShapeDtypeStruct((Bp, D), jnp.float32),
        grid=(Bp // block_b,),
        in_specs=[
            act_spec, act_spec,
            resident((D, F4)), resident((1, F_pad)),
            resident((D, F4)), resident((1, F_pad)),
            resident((F_pad, D)), resident((F_pad, D)), resident((1, D)),
            resident((D, D)), resident((1, D)),
        ],
        out_specs=act_spec,
        compiler_params=pltpu.CompilerParams(
            dimension_semantics=("parallel",),        # v7x: split batch tiles over 2 TCs
            vmem_limit_bytes=_vmem_limit_bytes(),
        ),
        cost_estimate=cost,
    )(xi, xg, wci, bci, wcg, bcg, w3a, w3b, b3, w4, b4)

    return out_flat[:B].reshape(B, C, W, W)


# -----------------------------------------------------------------------------
# Pure-JAX reference of the PyTorch forward (real conv / pool ops, f32)
# -----------------------------------------------------------------------------
def reference_forward(x_image, x_grad, params):
    wc_i, bc_i, wc_g, bc_g, W3, b3, W4, b4 = params
    B, C, W, _ = x_image.shape
    D = C * W * W

    def branch(x, wc, bc):
        y = jax.lax.conv_general_dilated(
            x, wc, window_strides=(1, 1), padding="VALID",
            dimension_numbers=("NCHW", "OIHW", "NCHW"))
        y = jnp.maximum(y + bc.reshape(1, -1, 1, 1), 0.0)
        y = jax.lax.reduce_window(
            y, -jnp.inf, jax.lax.max,
            window_dimensions=(1, 1, 2, 2), window_strides=(1, 1, 2, 2),
            padding="VALID")
        return y.reshape(B, -1)                 # torch .view(B, -1) order

    x1 = branch(x_image, wc_i, bc_i)
    x2 = branch(x_grad, wc_g, bc_g)
    x = jnp.concatenate([x1, x2], axis=1)
    xi = x_image.reshape(B, D)
    xg = x_grad.reshape(B, D)
    h = jnp.maximum(x @ W3.T + b3, 0.0)
    z = (h + xg) @ W4.T + b4
    out = jax.nn.sigmoid((z + xi - 0.5) * 5.0)
    return out.reshape(B, C, W, W)


# -----------------------------------------------------------------------------
if __name__ == "__main__":
    # Shapes consistent with the module: channel must be 1 (Conv2d(1,8,5)).
    # width=16 -> D=256, conv 12x12 -> pool 6x6 -> F=288 (padded to 384).
    # batch=256 exercises the default 128-row tile with a 2-step grid
    # (one tile per v7x TensorCore) while staying tiny in absolute terms.
    width, channel, batch = 16, 1, 256

    key = jax.random.PRNGKey(0)
    k_params, k_xi, k_xg = jax.random.split(key, 3)

    params = init_params(k_params, width=width, channel=channel)
    kernel_params = prepare_kernel_params(params, width=width, channel=channel)

    x_image = jax.random.uniform(k_xi, (batch, channel, width, width), jnp.float32)
    x_grad = 0.1 * jax.random.normal(k_xg, (batch, channel, width, width), jnp.float32)

    out = gatn_conv_forward(x_image, x_grad, kernel_params)
    out = jax.block_until_ready(out)

    ref = reference_forward(x_image, x_grad, params)
    assert out.shape == (batch, channel, width, width)
    # bf16 LHS rounding at the MXU vs. the all-f32 reference -> relaxed tol.
    max_err = float(jnp.max(jnp.abs(out - ref)))
    assert max_err < 2e-2, f"mismatch vs reference: max_err={max_err}"

    print("KERNEL_OK")
</pallas_src>

<mosaic_0001>
module attributes {stable_mosaic.version = 11 : i64} {
  func.func @gatn_conv_kernel(%arg0: i32, %arg1: memref<128x256xf32, #tpu.memory_space<vmem>>, %arg2: memref<128x256xf32, #tpu.memory_space<vmem>>, %arg3: memref<256x1536xbf16, #tpu.memory_space<vmem>>, %arg4: memref<1x384xf32, #tpu.memory_space<vmem>>, %arg5: memref<256x1536xbf16, #tpu.memory_space<vmem>>, %arg6: memref<1x384xf32, #tpu.memory_space<vmem>>, %arg7: memref<384x256xbf16, #tpu.memory_space<vmem>>, %arg8: memref<384x256xbf16, #tpu.memory_space<vmem>>, %arg9: memref<1x256xf32, #tpu.memory_space<vmem>>, %arg10: memref<256x256xbf16, #tpu.memory_space<vmem>>, %arg11: memref<1x256xf32, #tpu.memory_space<vmem>>, %arg12: memref<128x256xf32, #tpu.memory_space<vmem>>) attributes {dimension_semantics = [#tpu.dimension_semantics<parallel>], iteration_bounds = array<i64: 2>, scalar_prefetch = 0 : i64, scratch_operands = 0 : i64, tpu.core_type = #tpu.core_type<tc>, window_params = [{transform_indices = @transform_0, window_bounds = array<i64: 128, 256>}, {transform_indices = @transform_1, window_bounds = array<i64: 128, 256>}, {pipeline_mode = #tpu.pipeline_mode<synchronous>, transform_indices = @transform_2, window_bounds = array<i64: 256, 1536>}, {pipeline_mode = #tpu.pipeline_mode<synchronous>, transform_indices = @transform_3, window_bounds = array<i64: 1, 384>}, {pipeline_mode = #tpu.pipeline_mode<synchronous>, transform_indices = @transform_4, window_bounds = array<i64: 256, 1536>}, {pipeline_mode = #tpu.pipeline_mode<synchronous>, transform_indices = @transform_5, window_bounds = array<i64: 1, 384>}, {pipeline_mode = #tpu.pipeline_mode<synchronous>, transform_indices = @transform_6, window_bounds = array<i64: 384, 256>}, {pipeline_mode = #tpu.pipeline_mode<synchronous>, transform_indices = @transform_7, window_bounds = array<i64: 384, 256>}, {pipeline_mode = #tpu.pipeline_mode<synchronous>, transform_indices = @transform_8, window_bounds = array<i64: 1, 256>}, {pipeline_mode = #tpu.pipeline_mode<synchronous>, transform_indices = @transform_9, window_bounds = array<i64: 256, 256>}, {pipeline_mode = #tpu.pipeline_mode<synchronous>, transform_indices = @transform_10, window_bounds = array<i64: 1, 256>}, {transform_indices = @transform_11, window_bounds = array<i64: 128, 256>}]} {
    %c0 = arith.constant 0 : index
    %c0_0 = arith.constant 0 : index
    %0 = vector.load %arg1[%c0, %c0_0] : memref<128x256xf32, #tpu.memory_space<vmem>>, vector<128x256xf32>
    %c0_1 = arith.constant 0 : index
    %c0_2 = arith.constant 0 : index
    %1 = vector.load %arg2[%c0_1, %c0_2] : memref<128x256xf32, #tpu.memory_space<vmem>>, vector<128x256xf32>
    %2 = arith.truncf %0 : vector<128x256xf32> to vector<128x256xbf16>
    %3 = arith.truncf %1 : vector<128x256xf32> to vector<128x256xbf16>
    %c0_3 = arith.constant 0 : index
    %c0_4 = arith.constant 0 : index
    %4 = vector.load %arg3[%c0_3, %c0_4] : memref<256x1536xbf16, #tpu.memory_space<vmem>>, vector<256x1536xbf16>
    %cst = arith.constant dense<0.000000e+00> : vector<128x1536xf32>
    %5 = tpu.matmul %2, %4, %cst {dimension_numbers = #tpu.dot_dimension_numbers<[1], [0], [0], [1], [0, 0, 1, 1], [], []>} : vector<128x256xbf16>, vector<256x1536xbf16>, vector<128x1536xf32> -> vector<128x1536xf32>
    %6 = vector.extract_strided_slice %5 {offsets = [0, 0], sizes = [128, 384], strides = [1, 1]} : vector<128x1536xf32> to vector<128x384xf32>
    %7 = vector.extract_strided_slice %5 {offsets = [0, 384], sizes = [128, 384], strides = [1, 1]} : vector<128x1536xf32> to vector<128x384xf32>
    %8 = arith.maximumf %6, %7 : vector<128x384xf32>
    %9 = vector.extract_strided_slice %5 {offsets = [0, 768], sizes = [128, 384], strides = [1, 1]} : vector<128x1536xf32> to vector<128x384xf32>
    %10 = vector.extract_strided_slice %5 {offsets = [0, 1152], sizes = [128, 384], strides = [1, 1]} : vector<128x1536xf32> to vector<128x384xf32>
    %11 = arith.maximumf %9, %10 : vector<128x384xf32>
    %12 = arith.maximumf %8, %11 : vector<128x384xf32>
    %c0_5 = arith.constant 0 : index
    %c0_6 = arith.constant 0 : index
    %13 = vector.load %arg4[%c0_5, %c0_6] : memref<1x384xf32, #tpu.memory_space<vmem>>, vector<1x384xf32>
    %14 = vector.broadcast %13 : vector<1x384xf32> to vector<128x384xf32>
    %15 = arith.addf %12, %14 : vector<128x384xf32>
    %cst_7 = arith.constant 0.000000e+00 : f32
    %16 = vector.broadcast %cst_7 : f32 to vector<128x384xf32>
    %17 = arith.maximumf %15, %16 : vector<128x384xf32>
    %c0_8 = arith.constant 0 : index
    %c0_9 = arith.constant 0 : index
    %18 = vector.load %arg5[%c0_8, %c0_9] : memref<256x1536xbf16, #tpu.memory_space<vmem>>, vector<256x1536xbf16>
    %cst_10 = arith.constant dense<0.000000e+00> : vector<128x1536xf32>
    %19 = tpu.matmul %3, %18, %cst_10 {dimension_numbers = #tpu.dot_dimension_numbers<[1], [0], [0], [1], [0, 0, 1, 1], [], []>} : vector<128x256xbf16>, vector<256x1536xbf16>, vector<128x1536xf32> -> vector<128x1536xf32>
    %20 = vector.extract_strided_slice %19 {offsets = [0, 0], sizes = [128, 384], strides = [1, 1]} : vector<128x1536xf32> to vector<128x384xf32>
    %21 = vector.extract_strided_slice %19 {offsets = [0, 384], sizes = [128, 384], strides = [1, 1]} : vector<128x1536xf32> to vector<128x384xf32>
    %22 = arith.maximumf %20, %21 : vector<128x384xf32>
    %23 = vector.extract_strided_slice %19 {offsets = [0, 768], sizes = [128, 384], strides = [1, 1]} : vector<128x1536xf32> to vector<128x384xf32>
    %24 = vector.extract_strided_slice %19 {offsets = [0, 1152], sizes = [128, 384], strides = [1, 1]} : vector<128x1536xf32> to vector<128x384xf32>
    %25 = arith.maximumf %23, %24 : vector<128x384xf32>
    %26 = arith.maximumf %22, %25 : vector<128x384xf32>
    %c0_11 = arith.constant 0 : index
    %c0_12 = arith.constant 0 : index
    %27 = vector.load %arg6[%c0_11, %c0_12] : memref<1x384xf32, #tpu.memory_space<vmem>>, vector<1x384xf32>
    %28 = vector.broadcast %27 : vector<1x384xf32> to vector<128x384xf32>
    %29 = arith.addf %26, %28 : vector<128x384xf32>
    %cst_13 = arith.constant 0.000000e+00 : f32
    %30 = vector.broadcast %cst_13 : f32 to vector<128x384xf32>
    %31 = arith.maximumf %29, %30 : vector<128x384xf32>
    %32 = arith.truncf %17 : vector<128x384xf32> to vector<128x384xbf16>
    %c0_14 = arith.constant 0 : index
    %c0_15 = arith.constant 0 : index
    %33 = vector.load %arg7[%c0_14, %c0_15] : memref<384x256xbf16, #tpu.memory_space<vmem>>, vector<384x256xbf16>
    %cst_16 = arith.constant dense<0.000000e+00> : vector<128x256xf32>
    %34 = tpu.matmul %32, %33, %cst_16 {dimension_numbers = #tpu.dot_dimension_numbers<[1], [0], [0], [1], [0, 0, 1, 1], [], []>} : vector<128x384xbf16>, vector<384x256xbf16>, vector<128x256xf32> -> vector<128x256xf32>
    %35 = arith.truncf %31 : vector<128x384xf32> to vector<128x384xbf16>
    %c0_17 = arith.constant 0 : index
    %c0_18 = arith.constant 0 : index
    %36 = vector.load %arg8[%c0_17, %c0_18] : memref<384x256xbf16, #tpu.memory_space<vmem>>, vector<384x256xbf16>
    %cst_19 = arith.constant dense<0.000000e+00> : vector<128x256xf32>
    %37 = tpu.matmul %35, %36, %cst_19 {dimension_numbers = #tpu.dot_dimension_numbers<[1], [0], [0], [1], [0, 0, 1, 1], [], []>} : vector<128x384xbf16>, vector<384x256xbf16>, vector<128x256xf32> -> vector<128x256xf32>
    %38 = arith.addf %34, %37 : vector<128x256xf32>
    %c0_20 = arith.constant 0 : index
    %c0_21 = arith.constant 0 : index
    %39 = vector.load %arg9[%c0_20, %c0_21] : memref<1x256xf32, #tpu.memory_space<vmem>>, vector<1x256xf32>
    %40 = vector.broadcast %39 : vector<1x256xf32> to vector<128x256xf32>
    %41 = arith.addf %38, %40 : vector<128x256xf32>
    %cst_22 = arith.constant 0.000000e+00 : f32
    %42 = vector.broadcast %cst_22 : f32 to vector<128x256xf32>
    %43 = arith.maximumf %41, %42 : vector<128x256xf32>
    %44 = arith.addf %43, %1 : vector<128x256xf32>
    %45 = arith.truncf %44 : vector<128x256xf32> to vector<128x256xbf16>
    %c0_23 = arith.constant 0 : index
    %c0_24 = arith.constant 0 : index
    %46 = vector.load %arg10[%c0_23, %c0_24] : memref<256x256xbf16, #tpu.memory_space<vmem>>, vector<256x256xbf16>
    %cst_25 = arith.constant dense<0.000000e+00> : vector<128x256xf32>
    %47 = tpu.matmul %45, %46, %cst_25 {dimension_numbers = #tpu.dot_dimension_numbers<[1], [0], [0], [1], [0, 0, 1, 1], [], []>} : vector<128x256xbf16>, vector<256x256xbf16>, vector<128x256xf32> -> vector<128x256xf32>
    %c0_26 = arith.constant 0 : index
    %c0_27 = arith.constant 0 : index
    %48 = vector.load %arg11[%c0_26, %c0_27] : memref<1x256xf32, #tpu.memory_space<vmem>>, vector<1x256xf32>
    %49 = vector.broadcast %48 : vector<1x256xf32> to vector<128x256xf32>
    %50 = arith.addf %47, %49 : vector<128x256xf32>
    %51 = arith.addf %50, %0 : vector<128x256xf32>
    %cst_28 = arith.constant 5.000000e-01 : f32
    %52 = vector.broadcast %cst_28 : f32 to vector<128x256xf32>
    %53 = arith.subf %51, %52 : vector<128x256xf32>
    %cst_29 = arith.constant 5.000000e+00 : f32
    %54 = vector.broadcast %cst_29 : f32 to vector<128x256xf32>
    %55 = arith.mulf %53, %54 : vector<128x256xf32>
    %56 = arith.negf %55 : vector<128x256xf32>
    %57 = math.exp %56 : vector<128x256xf32>
    %cst_30 = arith.constant 1.000000e+00 : f32
    %58 = vector.broadcast %cst_30 : f32 to vector<128x256xf32>
    %59 = arith.addf %58, %57 : vector<128x256xf32>
    %60 = arith.divf %58, %59 : vector<128x256xf32>
    %c0_31 = arith.constant 0 : index
    %c0_32 = arith.constant 0 : index
    %61 = vector.load %arg12[%c0_31, %c0_32] : memref<128x256xf32, #tpu.memory_space<vmem>>, vector<128x256xf32>
    tpu.vector_store %arg12[%c0_31, %c0_32], %60 {strides = array<i32>} : memref<128x256xf32, #tpu.memory_space<vmem>>, vector<128x256xf32>,
    return
  }
  func.func @transform_0(%arg0: i32) -> (i32, i32) {
    %c0_i32 = arith.constant 0 : i32
    %c0_i32_0 = arith.constant 0 : i32
    return %arg0, %c0_i32 : i32, i32
  }
  func.func @transform_1(%arg0: i32) -> (i32, i32) {
    %c0_i32 = arith.constant 0 : i32
    %c0_i32_0 = arith.constant 0 : i32
    return %arg0, %c0_i32 : i32, i32
  }
  func.func @transform_2(%arg0: i32) -> (i32, i32) {
    %c0_i32 = arith.constant 0 : i32
    %c0_i32_0 = arith.constant 0 : i32
    %c0_i32_1 = arith.constant 0 : i32
    return %c0_i32, %c0_i32_0 : i32, i32
  }
  func.func @transform_3(%arg0: i32) -> (i32, i32) {
    %c0_i32 = arith.constant 0 : i32
    %c0_i32_0 = arith.constant 0 : i32
    %c0_i32_1 = arith.constant 0 : i32
    return %c0_i32, %c0_i32_0 : i32, i32
  }
  func.func @transform_4(%arg0: i32) -> (i32, i32) {
    %c0_i32 = arith.constant 0 : i32
    %c0_i32_0 = arith.constant 0 : i32
    %c0_i32_1 = arith.constant 0 : i32
    return %c0_i32, %c0_i32_0 : i32, i32
  }
  func.func @transform_5(%arg0: i32) -> (i32, i32) {
    %c0_i32 = arith.constant 0 : i32
    %c0_i32_0 = arith.constant 0 : i32
    %c0_i32_1 = arith.constant 0 : i32
    return %c0_i32, %c0_i32_0 : i32, i32
  }
  func.func @transform_6(%arg0: i32) -> (i32, i32) {
    %c0_i32 = arith.constant 0 : i32
    %c0_i32_0 = arith.constant 0 : i32
    %c0_i32_1 = arith.constant 0 : i32
    return %c0_i32, %c0_i32_0 : i32, i32
  }
  func.func @transform_7(%arg0: i32) -> (i32, i32) {
    %c0_i32 = arith.constant 0 : i32
    %c0_i32_0 = arith.constant 0 : i32
    %c0_i32_1 = arith.constant 0 : i32
    return %c0_i32, %c0_i32_0 : i32, i32
  }
  func.func @transform_8(%arg0: i32) -> (i32, i32) {
    %c0_i32 = arith.constant 0 : i32
    %c0_i32_0 = arith.constant 0 : i32
    %c0_i32_1 = arith.constant 0 : i32
    return %c0_i32, %c0_i32_0 : i32, i32
  }
  func.func @transform_9(%arg0: i32) -> (i32, i32) {
    %c0_i32 = arith.constant 0 : i32
    %c0_i32_0 = arith.constant 0 : i32
    %c0_i32_1 = arith.constant 0 : i32
    return %c0_i32, %c0_i32_0 : i32, i32
  }
  func.func @transform_10(%arg0: i32) -> (i32, i32) {
    %c0_i32 = arith.constant 0 : i32
    %c0_i32_0 = arith.constant 0 : i32
    %c0_i32_1 = arith.constant 0 : i32
    return %c0_i32, %c0_i32_0 : i32, i32
  }
  func.func @transform_11(%arg0: i32) -> (i32, i32) {
    %c0_i32 = arith.constant 0 : i32
    %c0_i32_0 = arith.constant 0 : i32
    return %arg0, %c0_i32 : i32, i32
  }
}

</mosaic_0001>

<llo_original>
// kernel: tpu_custom_call.1
$region0: #{tpu_custom_call.1}
  #allocation0 [shape = 'u32[]', space=smem, size = 0x4, offset = 0x4, fixed_abs, tag = 'smem constant byte address 0x4 - core index']
  #allocation1 [shape = 'u32[144,128]{1,0:T(1,128)}', space=vmem, size = 0x12000, scoped, tag = 'internal scratch']
  %s0 = inlined_call_operand.hbm [shape: f32[256,256], index: 0, kind: input, shape index: {}]
  %s1 = inlined_call_operand.hbm [shape: f32[256,256], index: 1, kind: input, shape index: {}]
  %s2 = inlined_call_operand.hbm [shape: bf16[256,1536], index: 2, kind: input, shape index: {}]
  %s3 = inlined_call_operand.vmem [shape: f32[1,384], index: 3, kind: input, shape index: {}]
  %s4 = inlined_call_operand.hbm [shape: bf16[256,1536], index: 4, kind: input, shape index: {}]
  %s5 = inlined_call_operand.vmem [shape: f32[1,384], index: 5, kind: input, shape index: {}]
  %s6 = inlined_call_operand.hbm [shape: bf16[384,256], index: 6, kind: input, shape index: {}]
  %s7 = inlined_call_operand.hbm [shape: bf16[384,256], index: 7, kind: input, shape index: {}]
  %s8 = inlined_call_operand.vmem [shape: f32[1,256], index: 8, kind: input, shape index: {}]
  %s9 = inlined_call_operand.hbm [shape: bf16[256,256], index: 9, kind: input, shape index: {}]
  %s10 = inlined_call_operand.vmem [shape: f32[1,256], index: 10, kind: input, shape index: {}]
  %s11 = inlined_call_operand.hbm [shape: f32[256,256], index: 11, kind: output, shape index: {}]
  %s12 = sld [smem:[#allocation0]]
  $region105: #{tpu_custom_call.1} parent=0
    _
  %s14 = ssub.s32 1, %s12
  %s15 = scalar_select 0, %s14, %s12
  $region1: #{tpu_custom_call.1} parent=0
    #allocation2 [shape = 'u8[262144]{0}', space=vmem, size = 0x40000, scoped, tag = 'input window, operand 0']
    #allocation3 [shape = 's32[2]{0}', space=sflag, size = 0x8, scoped, tag = 'scoped memory for tpu_custom_call.1']
    #allocation4 [shape = 's32[2]{0}', space=sflag, size = 0x8, scoped, tag = 'scoped memory for tpu_custom_call.1']
    #allocation5 [shape = 'u8[262144]{0}', space=vmem, size = 0x40000, scoped, tag = 'input window, operand 1']
    #allocation6 [shape = 's32[2]{0}', space=sflag, size = 0x8, scoped, tag = 'scoped memory for tpu_custom_call.1']
    #allocation7 [shape = 'u8[786432]{0}', space=vmem, size = 0xc0000, scoped, tag = 'input window, operand 2, single buffered']
    #allocation8 [shape = 'u8[786432]{0}', space=vmem, size = 0xc0000, scoped, tag = 'input window, operand 4, single buffered']
    #allocation9 [shape = 's32[1]{0}', space=sflag, size = 0x4, scoped, tag = 'scoped memory for tpu_custom_call.1']
    #allocation10 [shape = 'u8[196608]{0}', space=vmem, size = 0x30000, scoped, tag = 'input window, operand 6, single buffered']
    #allocation11 [shape = 'u8[196608]{0}', space=vmem, size = 0x30000, scoped, tag = 'input window, operand 7, single buffered']
    #allocation12 [shape = 's32[1]{0}', space=sflag, size = 0x4, scoped, tag = 'scoped memory for tpu_custom_call.1']
    #allocation13 [shape = 'u8[131072]{0}', space=vmem, size = 0x20000, scoped, tag = 'input window, operand 9, single buffered']
    #allocation14 [shape = 'u8[262144]{0}', space=vmem, size = 0x40000, scoped, tag = 'output window, operand 0']
    %16 = vsyncpa [#allocation3], 0
    %s17 = scalar_lea.sflag [#allocation3], 1
    %18 = vsyncpa %s17, 0
    %19 = vsyncpa [#allocation6], 0
    %s20 = scalar_lea.sflag [#allocation6], 1
    %21 = vsyncpa %s20, 0
    %22 = vsyncpa [#allocation9], 0
    %23 = vsyncpa [#allocation12], 0
    %24 = vsyncpa [#allocation4], 0
    %s25 = scalar_lea.sflag [#allocation4], 1
    %26 = vsyncpa %s25, 0
    loop: start=0, step=1, limit=4
    $region2: #{tpu_custom_call.1} parent=1 // loop_pre_header
      _
    $region3: #{tpu_custom_call.1} parent=1 // loop_header
      %s28 = sphi 0, %s32
      %p29 = scmp.ge.s32.totalorder %s28, 4
      %s38 = sphi 0, %s40
      %s41 = sphi 0, %s38
      %s42 = sphi 0, %s41
      %s58 = sphi 0, %s42
      %s64 = sphi 0, %s66
      %s67 = sphi 0, %s64
      %s68 = sphi 0, %s67
      %s84 = sphi 0, %s68
      %s88 = sphi 0, %s88
      %s90 = sphi 0, %s88
      %s91 = sphi 0, %s90
      %s105 = sphi 0, %s91
      %s109 = sphi 0, %s109
      %s111 = sphi 0, %s109
      %s112 = sphi 0, %s111
      %s126 = sphi 0, %s112
      %s130 = sphi 0, %s130
      %s132 = sphi 0, %s130
      %s133 = sphi 0, %s132
      %s147 = sphi 0, %s133
      %s151 = sphi 0, %s151
      %s153 = sphi 0, %s151
      %s154 = sphi 0, %s153
      %s168 = sphi 0, %s154
      %s172 = sphi 0, %s172
      %s174 = sphi 0, %s172
      %s175 = sphi 0, %s174
      %s189 = sphi 0, %s175
      %s193 = sphi 0, %s193
      %s195 = sphi 0, %s193
      %s196 = sphi 0, %s195
      %s210 = sphi 0, %s196
      %s214 = sphi 0, %s214
      %s216 = sphi 0, %s214
      %s217 = sphi 0, %s216
      %s231 = sphi 0, %s217
      %s235 = sphi 0, %s235
      %s237 = sphi 0, %s235
      %s238 = sphi 0, %s237
      %s252 = sphi 0, %s238
      %s256 = sphi 0, %s256
      %s258 = sphi 0, %s256
      %s259 = sphi 0, %s258
      %s273 = sphi 0, %s259
      %s279 = sphi 0, %s281
      %s282 = sphi 0, %s279
      %s283 = sphi 0, %s282
      %s299 = sphi 0, %s283
    $region4: #{tpu_custom_call.1} parent=1 // loop_header_branch
      %31 = sbr.rel (%p29) target = $region8
    $region5: #{tpu_custom_call.1} parent=1 // loop_body
      %s33 = ssub.s32 %s28, 1
      %s34 = ssub.s32 %s28, 2
      %s35 = sadd.s32 %s28, 1
      %s36 = ssub.s32 %s28, %s35
      %p37 = scmp.eq.s32.totalorder %s36, 0
      %s39 = sadd.s32 %s38, 1
      %s40 = scalar_select %p37, %s38, %s39
      %p43 = pneg %p37
      %p44 = scmp.eq.s32.totalorder %s28, 1
      %p45 = por %p43, %p44
      %p46 = scmp.ne.s32.totalorder %s38, %s41
      %p47 = scmp.eq.s32.totalorder %s28, 0
      %p48 = por %p46, %p47
      %p49 = scmp.ne.s32.totalorder %s38, %s41
      %p50 = scmp.eq.s32.totalorder %s33, 1
      %p51 = por %p49, %p50
      %p52 = scmp.ne.s32.totalorder %s41, %s42
      %p53 = scmp.eq.s32.totalorder %s33, 0
      %p54 = por %p52, %p53
      %p55 = scmp.ne.s32.totalorder %s41, %s42
      %p56 = scmp.eq.s32.totalorder %s34, 1
      %p57 = por %p55, %p56
      %p59 = scmp.ne.s32.totalorder %s42, %s58
      %p60 = scmp.eq.s32.totalorder %s34, 0
      %p61 = por %p59, %p60
      %s62 = ssub.s32 %s28, %s35
      %p63 = scmp.eq.s32.totalorder %s62, 0
      %s65 = sadd.s32 %s64, 1
      %s66 = scalar_select %p63, %s64, %s65
      %p69 = pneg %p63
      %p70 = scmp.eq.s32.totalorder %s28, 1
      %p71 = por %p69, %p70
      %p72 = scmp.ne.s32.totalorder %s64, %s67
      %p73 = scmp.eq.s32.totalorder %s28, 0
      %p74 = por %p72, %p73
      %p75 = scmp.ne.s32.totalorder %s64, %s67
      %p76 = scmp.eq.s32.totalorder %s33, 1
      %p77 = por %p75, %p76
      %p78 = scmp.ne.s32.totalorder %s67, %s68
      %p79 = scmp.eq.s32.totalorder %s33, 0
      %p80 = por %p78, %p79
      %p81 = scmp.ne.s32.totalorder %s67, %s68
      %p82 = scmp.eq.s32.totalorder %s34, 1
      %p83 = por %p81, %p82
      %p85 = scmp.ne.s32.totalorder %s68, %s84
      %p86 = scmp.eq.s32.totalorder %s34, 0
      %p87 = por %p85, %p86
      %s89 = sadd.s32 %s88, 1
      %p92 = scmp.eq.s32.totalorder %s28, 1
      %p93 = scmp.ne.s32.totalorder %s88, %s90
      %p94 = scmp.eq.s32.totalorder %s28, 0
      %p95 = por %p93, %p94
      %p96 = scmp.ne.s32.totalorder %s88, %s90
      %p97 = scmp.eq.s32.totalorder %s33, 1
      %p98 = por %p96, %p97
      %p99 = scmp.ne.s32.totalorder %s90, %s91
      %p100 = scmp.eq.s32.totalorder %s33, 0
      %p101 = por %p99, %p100
      %p102 = scmp.ne.s32.totalorder %s90, %s91
      %p103 = scmp.eq.s32.totalorder %s34, 1
      %p104 = por %p102, %p103
      %p106 = scmp.ne.s32.totalorder %s91, %s105
      %p107 = scmp.eq.s32.totalorder %s34, 0
      %p108 = por %p106, %p107
      %s110 = sadd.s32 %s109, 1
      %p113 = scmp.eq.s32.totalorder %s28, 1
      %p114 = scmp.ne.s32.totalorder %s109, %s111
      %p115 = scmp.eq.s32.totalorder %s28, 0
      %p116 = por %p114, %p115
      %p117 = scmp.ne.s32.totalorder %s109, %s111
      %p118 = scmp.eq.s32.totalorder %s33, 1
      %p119 = por %p117, %p118
      %p120 = scmp.ne.s32.totalorder %s111, %s112
      %p121 = scmp.eq.s32.totalorder %s33, 0
      %p122 = por %p120, %p121
      %p123 = scmp.ne.s32.totalorder %s111, %s112
      %p124 = scmp.eq.s32.totalorder %s34, 1
      %p125 = por %p123, %p124
      %p127 = scmp.ne.s32.totalorder %s112, %s126
      %p128 = scmp.eq.s32.totalorder %s34, 0
      %p129 = por %p127, %p128
      %s131 = sadd.s32 %s130, 1
      %p134 = scmp.eq.s32.totalorder %s28, 1
      %p135 = scmp.ne.s32.totalorder %s130, %s132
      %p136 = scmp.eq.s32.totalorder %s28, 0
      %p137 = por %p135, %p136
      %p138 = scmp.ne.s32.totalorder %s130, %s132
      %p139 = scmp.eq.s32.totalorder %s33, 1
      %p140 = por %p138, %p139
      %p141 = scmp.ne.s32.totalorder %s132, %s133
      %p142 = scmp.eq.s32.totalorder %s33, 0
      %p143 = por %p141, %p142
      %p144 = scmp.ne.s32.totalorder %s132, %s133
      %p145 = scmp.eq.s32.totalorder %s34, 1
      %p146 = por %p144, %p145
      %p148 = scmp.ne.s32.totalorder %s133, %s147
      %p149 = scmp.eq.s32.totalorder %s34, 0
      %p150 = por %p148, %p149
      %s152 = sadd.s32 %s151, 1
      %p155 = scmp.eq.s32.totalorder %s28, 1
      %p156 = scmp.ne.s32.totalorder %s151, %s153
      %p157 = scmp.eq.s32.totalorder %s28, 0
      %p158 = por %p156, %p157
      %p159 = scmp.ne.s32.totalorder %s151, %s153
      %p160 = scmp.eq.s32.totalorder %s33, 1
      %p161 = por %p159, %p160
      %p162 = scmp.ne.s32.totalorder %s153, %s154
      %p163 = scmp.eq.s32.totalorder %s33, 0
      %p164 = por %p162, %p163
      %p165 = scmp.ne.s32.totalorder %s153, %s154
      %p166 = scmp.eq.s32.totalorder %s34, 1
      %p167 = por %p165, %p166
      %p169 = scmp.ne.s32.totalorder %s154, %s168
      %p170 = scmp.eq.s32.totalorder %s34, 0
      %p171 = por %p169, %p170
      %s173 = sadd.s32 %s172, 1
      %p176 = scmp.eq.s32.totalorder %s28, 1
      %p177 = scmp.ne.s32.totalorder %s172, %s174
      %p178 = scmp.eq.s32.totalorder %s28, 0
      %p179 = por %p177, %p178
      %p180 = scmp.ne.s32.totalorder %s172, %s174
      %p181 = scmp.eq.s32.totalorder %s33, 1
      %p182 = por %p180, %p181
      %p183 = scmp.ne.s32.totalorder %s174, %s175
      %p184 = scmp.eq.s32.totalorder %s33, 0
      %p185 = por %p183, %p184
      %p186 = scmp.ne.s32.totalorder %s174, %s175
      %p187 = scmp.eq.s32.totalorder %s34, 1
      %p188 = por %p186, %p187
      %p190 = scmp.ne.s32.totalorder %s175, %s189
      %p191 = scmp.eq.s32.totalorder %s34, 0
      %p192 = por %p190, %p191
      %s194 = sadd.s32 %s193, 1
      %p197 = scmp.eq.s32.totalorder %s28, 1
      %p198 = scmp.ne.s32.totalorder %s193, %s195
      %p199 = scmp.eq.s32.totalorder %s28, 0
      %p200 = por %p198, %p199
      %p201 = scmp.ne.s32.totalorder %s193, %s195
      %p202 = scmp.eq.s32.totalorder %s33, 1
      %p203 = por %p201, %p202
      %p204 = scmp.ne.s32.totalorder %s195, %s196
      %p205 = scmp.eq.s32.totalorder %s33, 0
      %p206 = por %p204, %p205
      %p207 = scmp.ne.s32.totalorder %s195, %s196
      %p208 = scmp.eq.s32.totalorder %s34, 1
      %p209 = por %p207, %p208
      %p211 = scmp.ne.s32.totalorder %s196, %s210
      %p212 = scmp.eq.s32.totalorder %s34, 0
      %p213 = por %p211, %p212
      %s215 = sadd.s32 %s214, 1
      %p218 = scmp.eq.s32.totalorder %s28, 1
      %p219 = scmp.ne.s32.totalorder %s214, %s216
      %p220 = scmp.eq.s32.totalorder %s28, 0
      %p221 = por %p219, %p220
      %p222 = scmp.ne.s32.totalorder %s214, %s216
      %p223 = scmp.eq.s32.totalorder %s33, 1
      %p224 = por %p222, %p223
      %p225 = scmp.ne.s32.totalorder %s216, %s217
      %p226 = scmp.eq.s32.totalorder %s33, 0
      %p227 = por %p225, %p226
      %p228 = scmp.ne.s32.totalorder %s216, %s217
      %p229 = scmp.eq.s32.totalorder %s34, 1
      %p230 = por %p228, %p229
      %p232 = scmp.ne.s32.totalorder %s217, %s231
      %p233 = scmp.eq.s32.totalorder %s34, 0
      %p234 = por %p232, %p233
      %s236 = sadd.s32 %s235, 1
      %p239 = scmp.eq.s32.totalorder %s28, 1
      %p240 = scmp.ne.s32.totalorder %s235, %s237
      %p241 = scmp.eq.s32.totalorder %s28, 0
      %p242 = por %p240, %p241
      %p243 = scmp.ne.s32.totalorder %s235, %s237
      %p244 = scmp.eq.s32.totalorder %s33, 1
      %p245 = por %p243, %p244
      %p246 = scmp.ne.s32.totalorder %s237, %s238
      %p247 = scmp.eq.s32.totalorder %s33, 0
      %p248 = por %p246, %p247
      %p249 = scmp.ne.s32.totalorder %s237, %s238
      %p250 = scmp.eq.s32.totalorder %s34, 1
      %p251 = por %p249, %p250
      %p253 = scmp.ne.s32.totalorder %s238, %s252
      %p254 = scmp.eq.s32.totalorder %s34, 0
      %p255 = por %p253, %p254
      %s257 = sadd.s32 %s256, 1
      %p260 = scmp.eq.s32.totalorder %s28, 1
      %p261 = scmp.ne.s32.totalorder %s256, %s258
      %p262 = scmp.eq.s32.totalorder %s28, 0
      %p263 = por %p261, %p262
      %p264 = scmp.ne.s32.totalorder %s256, %s258
      %p265 = scmp.eq.s32.totalorder %s33, 1
      %p266 = por %p264, %p265
      %p267 = scmp.ne.s32.totalorder %s258, %s259
      %p268 = scmp.eq.s32.totalorder %s33, 0
      %p269 = por %p267, %p268
      %p270 = scmp.ne.s32.totalorder %s258, %s259
      %p271 = scmp.eq.s32.totalorder %s34, 1
      %p272 = por %p270, %p271
      %p274 = scmp.ne.s32.totalorder %s259, %s273
      %p275 = scmp.eq.s32.totalorder %s34, 0
      %p276 = por %p274, %p275
      %s277 = ssub.s32 %s28, %s35
      %p278 = scmp.eq.s32.totalorder %s277, 0
      %s280 = sadd.s32 %s279, 1
      %s281 = scalar_select %p278, %s279, %s280
      %p284 = pneg %p278
      %p285 = scmp.eq.s32.totalorder %s28, 1
      %p286 = por %p284, %p285
      %p287 = scmp.ne.s32.totalorder %s279, %s282
      %p288 = scmp.eq.s32.totalorder %s28, 0
      %p289 = por %p287, %p288
      %p290 = scmp.ne.s32.totalorder %s279, %s282
      %p291 = scmp.eq.s32.totalorder %s33, 1
      %p292 = por %p290, %p291
      %p293 = scmp.ne.s32.totalorder %s282, %s283
      %p294 = scmp.eq.s32.totalorder %s33, 0
      %p295 = por %p293, %p294
      %p296 = scmp.ne.s32.totalorder %s282, %s283
      %p297 = scmp.eq.s32.totalorder %s34, 1
      %p298 = por %p296, %p297
      %p300 = scmp.ne.s32.totalorder %s283, %s299
      %p301 = scmp.eq.s32.totalorder %s34, 0
      %p302 = por %p300, %p301
      %p303 = scmp.le.s32.totalorder 1, %s28
      %p304 = scmp.lt.s32.totalorder %s28, 3
      %p305 = pnand %p303, %p304
      %p306 = pneg %p305
      // Predicated region
      $region9: #{tpu_custom_call.1} parent=5 // pred_check
        _
      $region10: #{tpu_custom_call.1} parent=5 // pred_check_branch
        %308 = sbr.rel (%p305) target = $region12
      $region11: #{tpu_custom_call.1} parent=5 // pred_region
        %s309 = ssub.s32 %s28, 1
        // Predicated region
        $region13: #{tpu_custom_call.1} parent=11 // pred_check
          %p310 = pneg %p101
        $region14: #{tpu_custom_call.1} parent=11 // pred_check_branch
          %312 = sbr.rel (%p310) target = $region16
        $region15: #{tpu_custom_call.1} parent=11 // pred_region
          %s314 = ssub.s32 24576, 24576
          %315 = vsyncadd [#allocation6], %s314
          %s316 = sshll.u32 [#allocation7], 4
          %s317 = int_to_ptr.vmem [resolvable:$true] %s316
          %322 = dma.hbm_to_vmem [thread:$0]  %s2, 24576, %s317, [#allocation6], 768, 768, 48
        $region16: #{tpu_custom_call.1} parent=11 // pred_fallthru
          _
        // Predicated region
        $region17: #{tpu_custom_call.1} parent=11 // pred_check
          %p323 = pneg %p122
        $region18: #{tpu_custom_call.1} parent=11 // pred_check_branch
          %325 = sbr.rel (%p323) target = $region20
        $region19: #{tpu_custom_call.1} parent=11 // pred_region
          _
        $region20: #{tpu_custom_call.1} parent=11 // pred_fallthru
          _
        // Predicated region
        $region21: #{tpu_custom_call.1} parent=11 // pred_check
          %p326 = pneg %p143
        $region22: #{tpu_custom_call.1} parent=11 // pred_check_branch
          %328 = sbr.rel (%p326) target = $region24
        $region23: #{tpu_custom_call.1} parent=11 // pred_region
          %s330 = ssub.s32 24576, 24576
          %331 = vsyncadd [#allocation9], %s330
          %s332 = sshll.u32 [#allocation8], 4
          %s333 = int_to_ptr.vmem [resolvable:$true] %s332
          %338 = dma.hbm_to_vmem [thread:$0]  %s4, 24576, %s333, [#allocation9], 768, 768, 48
        $region24: #{tpu_custom_call.1} parent=11 // pred_fallthru
          _
        // Predicated region
        $region25: #{tpu_custom_call.1} parent=11 // pred_check
          %p339 = pneg %p164
        $region26: #{tpu_custom_call.1} parent=11 // pred_check_branch
          %341 = sbr.rel (%p339) target = $region28
        $region27: #{tpu_custom_call.1} parent=11 // pred_region
          _
        $region28: #{tpu_custom_call.1} parent=11 // pred_fallthru
          _
        // Predicated region
        $region29: #{tpu_custom_call.1} parent=11 // pred_check
          %p342 = pneg %p185
        $region30: #{tpu_custom_call.1} parent=11 // pred_check_branch
          %344 = sbr.rel (%p342) target = $region32
        $region31: #{tpu_custom_call.1} parent=11 // pred_region
          %s346 = ssub.s32 6144, 6144
          %347 = vsyncadd [#allocation9], %s346
          %s348 = sshll.u32 [#allocation10], 4
          %s349 = int_to_ptr.vmem [resolvable:$true] %s348
          %354 = dma.hbm_to_vmem [thread:$0]  %s6, 6144, %s349, [#allocation9], 128, 128, 8
        $region32: #{tpu_custom_call.1} parent=11 // pred_fallthru
          _
        // Predicated region
        $region33: #{tpu_custom_call.1} parent=11 // pred_check
          %p355 = pneg %p206
        $region34: #{tpu_custom_call.1} parent=11 // pred_check_branch
          %357 = sbr.rel (%p355) target = $region36
        $region35: #{tpu_custom_call.1} parent=11 // pred_region
          %s359 = ssub.s32 6144, 6144
          %360 = vsyncadd [#allocation12], %s359
          %s361 = sshll.u32 [#allocation11], 4
          %s362 = int_to_ptr.vmem [resolvable:$true] %s361
          %367 = dma.hbm_to_vmem [thread:$0]  %s7, 6144, %s362, [#allocation12], 128, 128, 8
        $region36: #{tpu_custom_call.1} parent=11 // pred_fallthru
          _
        // Predicated region
        $region37: #{tpu_custom_call.1} parent=11 // pred_check
          %p368 = pneg %p227
        $region38: #{tpu_custom_call.1} parent=11 // pred_check_branch
          %370 = sbr.rel (%p368) target = $region40
        $region39: #{tpu_custom_call.1} parent=11 // pred_region
          _
        $region40: #{tpu_custom_call.1} parent=11 // pred_fallthru
          _
        // Predicated region
        $region41: #{tpu_custom_call.1} parent=11 // pred_check
          %p371 = pneg %p248
        $region42: #{tpu_custom_call.1} parent=11 // pred_check_branch
          %373 = sbr.rel (%p371) target = $region44
        $region43: #{tpu_custom_call.1} parent=11 // pred_region
          %s375 = ssub.s32 4096, 4096
          %376 = vsyncadd [#allocation12], %s375
          %s377 = sshll.u32 [#allocation13], 4
          %s378 = int_to_ptr.vmem [resolvable:$true] %s377
          %383 = dma.hbm_to_vmem [thread:$0]  %s9, 4096, %s378, [#allocation12], 128, 128, 8
        $region44: #{tpu_custom_call.1} parent=11 // pred_fallthru
          _
        // Predicated region
        $region45: #{tpu_custom_call.1} parent=11 // pred_check
          %p384 = pneg %p269
        $region46: #{tpu_custom_call.1} parent=11 // pred_check_branch
          %386 = sbr.rel (%p384) target = $region48
        $region47: #{tpu_custom_call.1} parent=11 // pred_region
          _
        $region48: #{tpu_custom_call.1} parent=11 // pred_fallthru
          _
      $region12: #{tpu_custom_call.1} parent=5 // pred_fallthru
        _
      %p387 = scmp.lt.s32.totalorder %s28, 2
      // Predicated region
      $region49: #{tpu_custom_call.1} parent=5 // pred_check
        %p388 = pneg %p387
      $region50: #{tpu_custom_call.1} parent=5 // pred_check_branch
        %390 = sbr.rel (%p388) target = $region52
      $region51: #{tpu_custom_call.1} parent=5 // pred_region
        // Predicated region
        $region53: #{tpu_custom_call.1} parent=51 // pred_check
          %p391 = pneg %p48
        $region54: #{tpu_custom_call.1} parent=51 // pred_check_branch
          %393 = sbr.rel (%p391) target = $region56
        $region55: #{tpu_custom_call.1} parent=51 // pred_region
          %s394 = sand.u32 %s38, 1
          %s395 = scalar_lea.sflag [#allocation3], %s394
          %s396 = sand.u32 %s38, 1
          %s397 = smul.addr %s396, 256
          %s398 = scalar_lea.vmem [#allocation2], %s397
          %s399 = smul.u32 16, %s28
          %s401 = ssub.s32 4096, 4096
          %402 = vsyncadd %s395, %s401
          %s403 = smul.addr %s399, 2
          %s404 = smul.addr %s403, 128
          %s405 = scalar_lea.hbm %s0, %s404
          %s406 = sshll.u32 %s398, 4
          %s407 = int_to_ptr.vmem [resolvable:$true] %s406
          %412 = dma.hbm_to_vmem [thread:$0]  %s405, 4096, %s407, %s395, 256, 256, 16
        $region56: #{tpu_custom_call.1} parent=51 // pred_fallthru
          _
        // Predicated region
        $region57: #{tpu_custom_call.1} parent=51 // pred_check
          %p413 = pneg %p74
        $region58: #{tpu_custom_call.1} parent=51 // pred_check_branch
          %415 = sbr.rel (%p413) target = $region60
        $region59: #{tpu_custom_call.1} parent=51 // pred_region
          %s416 = sand.u32 %s28, 1
          %s417 = scalar_lea.sflag [#allocation6], %s416
          %s418 = sand.u32 %s64, 1
          %s419 = smul.addr %s418, 256
          %s420 = scalar_lea.vmem [#allocation5], %s419
          %s421 = smul.u32 16, %s28
          %s423 = ssub.s32 4096, 4096
          %424 = vsyncadd %s417, %s423
          %s425 = smul.addr %s421, 2
          %s426 = smul.addr %s425, 128
          %s427 = scalar_lea.hbm %s1, %s426
          %s428 = sshll.u32 %s420, 4
          %s429 = int_to_ptr.vmem [resolvable:$true] %s428
          %434 = dma.hbm_to_vmem [thread:$0]  %s427, 4096, %s429, %s417, 256, 256, 16
        $region60: #{tpu_custom_call.1} parent=51 // pred_fallthru
          _
      $region52: #{tpu_custom_call.1} parent=5 // pred_fallthru
        _
      %p435 = scmp.le.s32.totalorder 1, %s28
      %p436 = scmp.lt.s32.totalorder %s28, 3
      %p437 = pnand %p435, %p436
      %p438 = pneg %p437
      // Predicated region
      $region61: #{tpu_custom_call.1} parent=5 // pred_check
        _
      $region62: #{tpu_custom_call.1} parent=5 // pred_check_branch
        %440 = sbr.rel (%p437) target = $region64
      $region63: #{tpu_custom_call.1} parent=5 // pred_region
        %s441 = ssub.s32 %s28, 1
        %s442 = sand.u32 %s41, 1
        %s443 = scalar_lea.sflag [#allocation3], %s442
        %s444 = sand.u32 %s41, 1
        %s445 = smul.addr %s444, 256
        %s446 = scalar_lea.vmem [#allocation2], %s445
        // Predicated region
        $region65: #{tpu_custom_call.1} parent=63 // pred_check
          %p447 = pneg %p54
        $region66: #{tpu_custom_call.1} parent=63 // pred_check_branch
          %449 = sbr.rel (%p447) target = $region68
        $region67: #{tpu_custom_call.1} parent=63 // pred_region
          %450 = dma.done %s443, 4096
        $region68: #{tpu_custom_call.1} parent=63 // pred_fallthru
          _
        %s451 = sand.u32 %s33, 1
        %s452 = scalar_lea.sflag [#allocation6], %s451
        %s453 = sand.u32 %s67, 1
        %s454 = smul.addr %s453, 256
        %s455 = scalar_lea.vmem [#allocation5], %s454
        // Predicated region
        $region69: #{tpu_custom_call.1} parent=63 // pred_check
          %p456 = pneg %p80
        $region70: #{tpu_custom_call.1} parent=63 // pred_check_branch
          %458 = sbr.rel (%p456) target = $region72
        $region71: #{tpu_custom_call.1} parent=63 // pred_region
          %459 = dma.done %s452, 4096
        $region72: #{tpu_custom_call.1} parent=63 // pred_fallthru
          _
        // Predicated region
        $region73: #{tpu_custom_call.1} parent=63 // pred_check
          %p460 = pneg %p101
        $region74: #{tpu_custom_call.1} parent=63 // pred_check_branch
          %462 = sbr.rel (%p460) target = $region76
        $region75: #{tpu_custom_call.1} parent=63 // pred_region
          %463 = dma.done [#allocation6], 24576
        $region76: #{tpu_custom_call.1} parent=63 // pred_fallthru
          _
        // Predicated region
        $region77: #{tpu_custom_call.1} parent=63 // pred_check
          %p464 = pneg %p143
        $region78: #{tpu_custom_call.1} parent=63 // pred_check_branch
          %466 = sbr.rel (%p464) target = $region80
        $region79: #{tpu_custom_call.1} parent=63 // pred_region
          %467 = dma.done [#allocation9], 24576
        $region80: #{tpu_custom_call.1} parent=63 // pred_fallthru
          _
        // Predicated region
        $region81: #{tpu_custom_call.1} parent=63 // pred_check
          %p468 = pneg %p185
        $region82: #{tpu_custom_call.1} parent=63 // pred_check_branch
          %470 = sbr.rel (%p468) target = $region84
        $region83: #{tpu_custom_call.1} parent=63 // pred_region
          %471 = dma.done [#allocation9], 6144
        $region84: #{tpu_custom_call.1} parent=63 // pred_fallthru
          _
        // Predicated region
        $region85: #{tpu_custom_call.1} parent=63 // pred_check
          %p472 = pneg %p206
        $region86: #{tpu_custom_call.1} parent=63 // pred_check_branch
          %474 = sbr.rel (%p472) target = $region88
        $region87: #{tpu_custom_call.1} parent=63 // pred_region
          %475 = dma.done [#allocation12], 6144
        $region88: #{tpu_custom_call.1} parent=63 // pred_fallthru
          _
        // Predicated region
        $region89: #{tpu_custom_call.1} parent=63 // pred_check
          %p476 = pneg %p248
        $region90: #{tpu_custom_call.1} parent=63 // pred_check_branch
          %478 = sbr.rel (%p476) target = $region92
        $region91: #{tpu_custom_call.1} parent=63 // pred_region
          %479 = dma.done [#allocation12], 4096
        $region92: #{tpu_custom_call.1} parent=63 // pred_fallthru
          _
        %s480 = sand.u32 %s41, 1
        %s481 = scalar_lea.sflag [#allocation3], %s480
        %s482 = sand.u32 %s41, 1
        %s483 = smul.addr %s482, 256
        %s484 = scalar_lea.vmem [#allocation2], %s483
        %p485 = pneg %p54
        %p486 = pneg %p51
        %s487 = sand.u32 %s33, 1
        %s488 = scalar_lea.sflag [#allocation6], %s487
        %s489 = sand.u32 %s67, 1
        %s490 = smul.addr %s489, 256
        %s491 = scalar_lea.vmem [#allocation5], %s490
        %p492 = pneg %p80
        %p493 = pneg %p77
        %p494 = pneg %p101
        %p495 = pneg %p98
        %p496 = pneg %p122
        %p497 = pneg %p119
        %p498 = pneg %p143
        %p499 = pneg %p140
        %p500 = pneg %p164
        %p501 = pneg %p161
        %p502 = pneg %p185
        %p503 = pneg %p182
        %p504 = pneg %p206
        %p505 = pneg %p203
        %p506 = pneg %p227
        %p507 = pneg %p224
        %p508 = pneg %p248
        %p509 = pneg %p245
        %p510 = pneg %p269
        %p511 = pneg %p266
        %p512 = pneg %p295
        %p513 = pneg %p292
        %s514 = sand.u32 %s282, 1
        %s515 = scalar_lea.sflag [#allocation4], %s514
        %s516 = sand.u32 %s282, 1
        %s517 = smul.addr %s516, 256
        %s518 = scalar_lea.vmem [#allocation14], %s517
        %s519 = smul.u32 16, %s33
        %s520 = smul.u32 16, %s33
        %s521 = smul.u32 16, %s33
        %v523 = vld [vmem:[%s446] sm:$0xff]
        %v524 = vld [vmem:[%s446 + $0x8] sm:$0xff]
        %v525 = vld [vmem:[%s446 + $0x10] sm:$0xff]
        %v526 = vld [vmem:[%s446 + $0x18] sm:$0xff]
        %v527 = vld [vmem:[%s446 + $0x20] sm:$0xff]
        %v528 = vld [vmem:[%s446 + $0x28] sm:$0xff]
        %v529 = vld [vmem:[%s446 + $0x30] sm:$0xff]
        %v530 = vld [vmem:[%s446 + $0x38] sm:$0xff]
        %v531 = vld [vmem:[%s446 + $0x40] sm:$0xff]
        %v532 = vld [vmem:[%s446 + $0x48] sm:$0xff]
        %v533 = vld [vmem:[%s446 + $0x50] sm:$0xff]
        %v534 = vld [vmem:[%s446 + $0x58] sm:$0xff]
        %v535 = vld [vmem:[%s446 + $0x60] sm:$0xff]
        %v536 = vld [vmem:[%s446 + $0x68] sm:$0xff]
        %v537 = vld [vmem:[%s446 + $0x70] sm:$0xff]
        %v538 = vld [vmem:[%s446 + $0x78] sm:$0xff]
        %v539 = vld [vmem:[%s446 + $0x80] sm:$0xff]
        %v540 = vld [vmem:[%s446 + $0x88] sm:$0xff]
        %v541 = vld [vmem:[%s446 + $0x90] sm:$0xff]
        %v542 = vld [vmem:[%s446 + $0x98] sm:$0xff]
        %v543 = vld [vmem:[%s446 + $0xa0] sm:$0xff]
        %v544 = vld [vmem:[%s446 + $0xa8] sm:$0xff]
        %v545 = vld [vmem:[%s446 + $0xb0] sm:$0xff]
        %v546 = vld [vmem:[%s446 + $0xb8] sm:$0xff]
        %v547 = vld [vmem:[%s446 + $0xc0] sm:$0xff]
        %v548 = vld [vmem:[%s446 + $0xc8] sm:$0xff]
        %v549 = vld [vmem:[%s446 + $0xd0] sm:$0xff]
        %v550 = vld [vmem:[%s446 + $0xd8] sm:$0xff]
        %v551 = vld [vmem:[%s446 + $0xe0] sm:$0xff]
        %v552 = vld [vmem:[%s446 + $0xe8] sm:$0xff]
        %v553 = vld [vmem:[%s446 + $0xf0] sm:$0xff]
        %v554 = vld [vmem:[%s446 + $0xf8] sm:$0xff]
        %v555 = vld [vmem:[%s455] sm:$0xff]
        %v556 = vld [vmem:[%s455 + $0x8] sm:$0xff]
        %v557 = vld [vmem:[%s455 + $0x10] sm:$0xff]
        %v558 = vld [vmem:[%s455 + $0x18] sm:$0xff]
        %v559 = vld [vmem:[%s455 + $0x20] sm:$0xff]
        %v560 = vld [vmem:[%s455 + $0x28] sm:$0xff]
        %v561 = vld [vmem:[%s455 + $0x30] sm:$0xff]
        %v562 = vld [vmem:[%s455 + $0x38] sm:$0xff]
        %v563 = vld [vmem:[%s455 + $0x40] sm:$0xff]
        %v564 = vld [vmem:[%s455 + $0x48] sm:$0xff]
        %v565 = vld [vmem:[%s455 + $0x50] sm:$0xff]
        %v566 = vld [vmem:[%s455 + $0x58] sm:$0xff]
        %v567 = vld [vmem:[%s455 + $0x60] sm:$0xff]
        %v568 = vld [vmem:[%s455 + $0x68] sm:$0xff]
        %v569 = vld [vmem:[%s455 + $0x70] sm:$0xff]
        %v570 = vld [vmem:[%s455 + $0x78] sm:$0xff]
        %v571 = vld [vmem:[%s455 + $0x80] sm:$0xff]
        %v572 = vld [vmem:[%s455 + $0x88] sm:$0xff]
        %v573 = vld [vmem:[%s455 + $0x90] sm:$0xff]
        %v574 = vld [vmem:[%s455 + $0x98] sm:$0xff]
        %v575 = vld [vmem:[%s455 + $0xa0] sm:$0xff]
        %v576 = vld [vmem:[%s455 + $0xa8] sm:$0xff]
        %v577 = vld [vmem:[%s455 + $0xb0] sm:$0xff]
        %v578 = vld [vmem:[%s455 + $0xb8] sm:$0xff]
        %v579 = vld [vmem:[%s455 + $0xc0] sm:$0xff]
        %v580 = vld [vmem:[%s455 + $0xc8] sm:$0xff]
        %v581 = vld [vmem:[%s455 + $0xd0] sm:$0xff]
        %v582 = vld [vmem:[%s455 + $0xd8] sm:$0xff]
        %v583 = vld [vmem:[%s455 + $0xe0] sm:$0xff]
        %v584 = vld [vmem:[%s455 + $0xe8] sm:$0xff]
        %v585 = vld [vmem:[%s455 + $0xf0] sm:$0xff]
        %v586 = vld [vmem:[%s455 + $0xf8] sm:$0xff]
        %v587 = vpack.c.bf16 %v525, %v523
        %v588 = vpack.c.bf16 %v526, %v524
        %v589 = vpack.c.bf16 %v529, %v527
        %v590 = vpack.c.bf16 %v530, %v528
        %v591 = vpack.c.bf16 %v533, %v531
        %v592 = vpack.c.bf16 %v534, %v532
        %v593 = vpack.c.bf16 %v537, %v535
        %v594 = vpack.c.bf16 %v538, %v536
        %v595 = vpack.c.bf16 %v541, %v539
        %v596 = vpack.c.bf16 %v542, %v540
        %v597 = vpack.c.bf16 %v545, %v543
        %v598 = vpack.c.bf16 %v546, %v544
        %v599 = vpack.c.bf16 %v549, %v547
        %v600 = vpack.c.bf16 %v550, %v548
        %v601 = vpack.c.bf16 %v553, %v551
        %v602 = vpack.c.bf16 %v554, %v552
        %v603 = vpack.c.bf16 %v557, %v555
        %v604 = vpack.c.bf16 %v558, %v556
        %v605 = vpack.c.bf16 %v561, %v559
        %v606 = vpack.c.bf16 %v562, %v560
        %v607 = vpack.c.bf16 %v565, %v563
        %v608 = vpack.c.bf16 %v566, %v564
        %v609 = vpack.c.bf16 %v569, %v567
        %v610 = vpack.c.bf16 %v570, %v568
        %v611 = vpack.c.bf16 %v573, %v571
        %v612 = vpack.c.bf16 %v574, %v572
        %v613 = vpack.c.bf16 %v577, %v575
        %v614 = vpack.c.bf16 %v578, %v576
        %v615 = vpack.c.bf16 %v581, %v579
        %v616 = vpack.c.bf16 %v582, %v580
        %v617 = vpack.c.bf16 %v585, %v583
        %v618 = vpack.c.bf16 %v586, %v584
        %v619 = vld [vmem:[#allocation7] sm:$0xff]
        %v620 = vld [vmem:[#allocation7 + $0x8] sm:$0xff]
        %v621 = vld [vmem:[#allocation7 + $0x10] sm:$0xff]
        %v622 = vld [vmem:[#allocation7 + $0x18] sm:$0xff]
        %v623 = vld [vmem:[#allocation7 + $0x20] sm:$0xff]
        %v624 = vld [vmem:[#allocation7 + $0x28] sm:$0xff]
        %v625 = vld [vmem:[#allocation7 + $0x30] sm:$0xff]
        %v626 = vld [vmem:[#allocation7 + $0x38] sm:$0xff]
        %v627 = vld [vmem:[#allocation7 + $0x40] sm:$0xff]
        %v628 = vld [vmem:[#allocation7 + $0x48] sm:$0xff]
        %v629 = vld [vmem:[#allocation7 + $0x50] sm:$0xff]
        %v630 = vld [vmem:[#allocation7 + $0x58] sm:$0xff]
        %v631 = vld [vmem:[#allocation7 + $0x60] sm:$0xff]
        %v632 = vld [vmem:[#allocation7 + $0x68] sm:$0xff]
        %v633 = vld [vmem:[#allocation7 + $0x70] sm:$0xff]
        %v634 = vld [vmem:[#allocation7 + $0x78] sm:$0xff]
        %v635 = vld [vmem:[#allocation7 + $0x80] sm:$0xff]
        %v636 = vld [vmem:[#allocation7 + $0x88] sm:$0xff]
        %v637 = vld [vmem:[#allocation7 + $0x90] sm:$0xff]
        %v638 = vld [vmem:[#allocation7 + $0x98] sm:$0xff]
        %v639 = vld [vmem:[#allocation7 + $0xa0] sm:$0xff]
        %v640 = vld [vmem:[#allocation7 + $0xa8] sm:$0xff]
        %v641 = vld [vmem:[#allocation7 + $0xb0] sm:$0xff]
        %v642 = vld [vmem:[#allocation7 + $0xb8] sm:$0xff]
        %v643 = vld [vmem:[#allocation7 + $0xc0] sm:$0xff]
        %v644 = vld [vmem:[#allocation7 + $0xc8] sm:$0xff]
        %v645 = vld [vmem:[#allocation7 + $0xd0] sm:$0xff]
        %v646 = vld [vmem:[#allocation7 + $0xd8] sm:$0xff]
        %v647 = vld [vmem:[#allocation7 + $0xe0] sm:$0xff]
        %v648 = vld [vmem:[#allocation7 + $0xe8] sm:$0xff]
        %v649 = vld [vmem:[#allocation7 + $0xf0] sm:$0xff]
        %v650 = vld [vmem:[#allocation7 + $0xf8] sm:$0xff]
        %v651 = vld [vmem:[#allocation7 + $0x100] sm:$0xff]
        %v652 = vld [vmem:[#allocation7 + $0x108] sm:$0xff]
        %v653 = vld [vmem:[#allocation7 + $0x110] sm:$0xff]
        %v654 = vld [vmem:[#allocation7 + $0x118] sm:$0xff]
        %v655 = vld [vmem:[#allocation7 + $0x120] sm:$0xff]
        %v656 = vld [vmem:[#allocation7 + $0x128] sm:$0xff]
        %v657 = vld [vmem:[#allocation7 + $0x130] sm:$0xff]
        %v658 = vld [vmem:[#allocation7 + $0x138] sm:$0xff]
        %v659 = vld [vmem:[#allocation7 + $0x140] sm:$0xff]
        %v660 = vld [vmem:[#allocation7 + $0x148] sm:$0xff]
        %v661 = vld [vmem:[#allocation7 + $0x150] sm:$0xff]
        %v662 = vld [vmem:[#allocation7 + $0x158] sm:$0xff]
        %v663 = vld [vmem:[#allocation7 + $0x160] sm:$0xff]
        %v664 = vld [vmem:[#allocation7 + $0x168] sm:$0xff]
        %v665 = vld [vmem:[#allocation7 + $0x170] sm:$0xff]
        %v666 = vld [vmem:[#allocation7 + $0x178] sm:$0xff]
        %v667 = vld [vmem:[#allocation7 + $0x180] sm:$0xff]
        %v668 = vld [vmem:[#allocation7 + $0x188] sm:$0xff]
        %v669 = vld [vmem:[#allocation7 + $0x190] sm:$0xff]
        %v670 = vld [vmem:[#allocation7 + $0x198] sm:$0xff]
        %v671 = vld [vmem:[#allocation7 + $0x1a0] sm:$0xff]
        %v672 = vld [vmem:[#allocation7 + $0x1a8] sm:$0xff]
        %v673 = vld [vmem:[#allocation7 + $0x1b0] sm:$0xff]
        %v674 = vld [vmem:[#allocation7 + $0x1b8] sm:$0xff]
        %v675 = vld [vmem:[#allocation7 + $0x1c0] sm:$0xff]
        %v676 = vld [vmem:[#allocation7 + $0x1c8] sm:$0xff]
        %v677 = vld [vmem:[#allocation7 + $0x1d0] sm:$0xff]
        %v678 = vld [vmem:[#allocation7 + $0x1d8] sm:$0xff]
        %v679 = vld [vmem:[#allocation7 + $0x1e0] sm:$0xff]
        %v680 = vld [vmem:[#allocation7 + $0x1e8] sm:$0xff]
        %v681 = vld [vmem:[#allocation7 + $0x1f0] sm:$0xff]
        %v682 = vld [vmem:[#allocation7 + $0x1f8] sm:$0xff]
        %v683 = vld [vmem:[#allocation7 + $0x200] sm:$0xff]
        %v684 = vld [vmem:[#allocation7 + $0x208] sm:$0xff]
        %v685 = vld [vmem:[#allocation7 + $0x210] sm:$0xff]
        %v686 = vld [vmem:[#allocation7 + $0x218] sm:$0xff]
        %v687 = vld [vmem:[#allocation7 + $0x220] sm:$0xff]
        %v688 = vld [vmem:[#allocation7 + $0x228] sm:$0xff]
        %v689 = vld [vmem:[#allocation7 + $0x230] sm:$0xff]
        %v690 = vld [vmem:[#allocation7 + $0x238] sm:$0xff]
        %v691 = vld [vmem:[#allocation7 + $0x240] sm:$0xff]
        %v692 = vld [vmem:[#allocation7 + $0x248] sm:$0xff]
        %v693 = vld [vmem:[#allocation7 + $0x250] sm:$0xff]
        %v694 = vld [vmem:[#allocation7 + $0x258] sm:$0xff]
        %v695 = vld [vmem:[#allocation7 + $0x260] sm:$0xff]
        %v696 = vld [vmem:[#allocation7 + $0x268] sm:$0xff]
        %v697 = vld [vmem:[#allocation7 + $0x270] sm:$0xff]
        %v698 = vld [vmem:[#allocation7 + $0x278] sm:$0xff]
        %v699 = vld [vmem:[#allocation7 + $0x280] sm:$0xff]
        %v700 = vld [vmem:[#allocation7 + $0x288] sm:$0xff]
        %v701 = vld [vmem:[#allocation7 + $0x290] sm:$0xff]
        %v702 = vld [vmem:[#allocation7 + $0x298] sm:$0xff]
        %v703 = vld [vmem:[#allocation7 + $0x2a0] sm:$0xff]
        %v704 = vld [vmem:[#allocation7 + $0x2a8] sm:$0xff]
        %v705 = vld [vmem:[#allocation7 + $0x2b0] sm:$0xff]
        %v706 = vld [vmem:[#allocation7 + $0x2b8] sm:$0xff]
        %v707 = vld [vmem:[#allocation7 + $0x2c0] sm:$0xff]
        %v708 = vld [vmem:[#allocation7 + $0x2c8] sm:$0xff]
        %v709 = vld [vmem:[#allocation7 + $0x2d0] sm:$0xff]
        %v710 = vld [vmem:[#allocation7 + $0x2d8] sm:$0xff]
        %v711 = vld [vmem:[#allocation7 + $0x2e0] sm:$0xff]
        %v712 = vld [vmem:[#allocation7 + $0x2e8] sm:$0xff]
        %v713 = vld [vmem:[#allocation7 + $0x2f0] sm:$0xff]
        %v714 = vld [vmem:[#allocation7 + $0x2f8] sm:$0xff]
        %v715 = vld [vmem:[#allocation7 + $0x300] sm:$0xff]
        %v716 = vld [vmem:[#allocation7 + $0x308] sm:$0xff]
        %v717 = vld [vmem:[#allocation7 + $0x310] sm:$0xff]
        %v718 = vld [vmem:[#allocation7 + $0x318] sm:$0xff]
        %v719 = vld [vmem:[#allocation7 + $0x320] sm:$0xff]
        %v720 = vld [vmem:[#allocation7 + $0x328] sm:$0xff]
        %v721 = vld [vmem:[#allocation7 + $0x330] sm:$0xff]
        %v722 = vld [vmem:[#allocation7 + $0x338] sm:$0xff]
        %v723 = vld [vmem:[#allocation7 + $0x340] sm:$0xff]
        %v724 = vld [vmem:[#allocation7 + $0x348] sm:$0xff]
        %v725 = vld [vmem:[#allocation7 + $0x350] sm:$0xff]
        %v726 = vld [vmem:[#allocation7 + $0x358] sm:$0xff]
        %v727 = vld [vmem:[#allocation7 + $0x360] sm:$0xff]
        %v728 = vld [vmem:[#allocation7 + $0x368] sm:$0xff]
        %v729 = vld [vmem:[#allocation7 + $0x370] sm:$0xff]
        %v730 = vld [vmem:[#allocation7 + $0x378] sm:$0xff]
        %v731 = vld [vmem:[#allocation7 + $0x380] sm:$0xff]
        %v732 = vld [vmem:[#allocation7 + $0x388] sm:$0xff]
        %v733 = vld [vmem:[#allocation7 + $0x390] sm:$0xff]
        %v734 = vld [vmem:[#allocation7 + $0x398] sm:$0xff]
        %v735 = vld [vmem:[#allocation7 + $0x3a0] sm:$0xff]
        %v736 = vld [vmem:[#allocation7 + $0x3a8] sm:$0xff]
        %v737 = vld [vmem:[#allocation7 + $0x3b0] sm:$0xff]
        %v738 = vld [vmem:[#allocation7 + $0x3b8] sm:$0xff]
        %v739 = vld [vmem:[#allocation7 + $0x3c0] sm:$0xff]
        %v740 = vld [vmem:[#allocation7 + $0x3c8] sm:$0xff]
        %v741 = vld [vmem:[#allocation7 + $0x3d0] sm:$0xff]
        %v742 = vld [vmem:[#allocation7 + $0x3d8] sm:$0xff]
        %v743 = vld [vmem:[#allocation7 + $0x3e0] sm:$0xff]
        %v744 = vld [vmem:[#allocation7 + $0x3e8] sm:$0xff]
        %v745 = vld [vmem:[#allocation7 + $0x3f0] sm:$0xff]
        %v746 = vld [vmem:[#allocation7 + $0x3f8] sm:$0xff]
        %v747 = vld [vmem:[#allocation7 + $0x400] sm:$0xff]
        %v748 = vld [vmem:[#allocation7 + $0x408] sm:$0xff]
        %v749 = vld [vmem:[#allocation7 + $0x410] sm:$0xff]
        %v750 = vld [vmem:[#allocation7 + $0x418] sm:$0xff]
        %v751 = vld [vmem:[#allocation7 + $0x420] sm:$0xff]
        %v752 = vld [vmem:[#allocation7 + $0x428] sm:$0xff]
        %v753 = vld [vmem:[#allocation7 + $0x430] sm:$0xff]
        %v754 = vld [vmem:[#allocation7 + $0x438] sm:$0xff]
        %v755 = vld [vmem:[#allocation7 + $0x440] sm:$0xff]
        %v756 = vld [vmem:[#allocation7 + $0x448] sm:$0xff]
        %v757 = vld [vmem:[#allocation7 + $0x450] sm:$0xff]
        %v758 = vld [vmem:[#allocation7 + $0x458] sm:$0xff]
        %v759 = vld [vmem:[#allocation7 + $0x460] sm:$0xff]
        %v760 = vld [vmem:[#allocation7 + $0x468] sm:$0xff]
        %v761 = vld [vmem:[#allocation7 + $0x470] sm:$0xff]
        %v762 = vld [vmem:[#allocation7 + $0x478] sm:$0xff]
        %v763 = vld [vmem:[#allocation7 + $0x480] sm:$0xff]
        %v764 = vld [vmem:[#allocation7 + $0x488] sm:$0xff]
        %v765 = vld [vmem:[#allocation7 + $0x490] sm:$0xff]
        %v766 = vld [vmem:[#allocation7 + $0x498] sm:$0xff]
        %v767 = vld [vmem:[#allocation7 + $0x4a0] sm:$0xff]
        %v768 = vld [vmem:[#allocation7 + $0x4a8] sm:$0xff]
        %v769 = vld [vmem:[#allocation7 + $0x4b0] sm:$0xff]
        %v770 = vld [vmem:[#allocation7 + $0x4b8] sm:$0xff]
        %v771 = vld [vmem:[#allocation7 + $0x4c0] sm:$0xff]
        %v772 = vld [vmem:[#allocation7 + $0x4c8] sm:$0xff]
        %v773 = vld [vmem:[#allocation7 + $0x4d0] sm:$0xff]
        %v774 = vld [vmem:[#allocation7 + $0x4d8] sm:$0xff]
        %v775 = vld [vmem:[#allocation7 + $0x4e0] sm:$0xff]
        %v776 = vld [vmem:[#allocation7 + $0x4e8] sm:$0xff]
        %v777 = vld [vmem:[#allocation7 + $0x4f0] sm:$0xff]
        %v778 = vld [vmem:[#allocation7 + $0x4f8] sm:$0xff]
        %v779 = vld [vmem:[#allocation7 + $0x500] sm:$0xff]
        %v780 = vld [vmem:[#allocation7 + $0x508] sm:$0xff]
        %v781 = vld [vmem:[#allocation7 + $0x510] sm:$0xff]
        %v782 = vld [vmem:[#allocation7 + $0x518] sm:$0xff]
        %v783 = vld [vmem:[#allocation7 + $0x520] sm:$0xff]
        %v784 = vld [vmem:[#allocation7 + $0x528] sm:$0xff]
        %v785 = vld [vmem:[#allocation7 + $0x530] sm:$0xff]
        %v786 = vld [vmem:[#allocation7 + $0x538] sm:$0xff]
        %v787 = vld [vmem:[#allocation7 + $0x540] sm:$0xff]
        %v788 = vld [vmem:[#allocation7 + $0x548] sm:$0xff]
        %v789 = vld [vmem:[#allocation7 + $0x550] sm:$0xff]
        %v790 = vld [vmem:[#allocation7 + $0x558] sm:$0xff]
        %v791 = vld [vmem:[#allocation7 + $0x560] sm:$0xff]
        %v792 = vld [vmem:[#allocation7 + $0x568] sm:$0xff]
        %v793 = vld [vmem:[#allocation7 + $0x570] sm:$0xff]
        %v794 = vld [vmem:[#allocation7 + $0x578] sm:$0xff]
        %v795 = vld [vmem:[#allocation7 + $0x580] sm:$0xff]
        %v796 = vld [vmem:[#allocation7 + $0x588] sm:$0xff]
        %v797 = vld [vmem:[#allocation7 + $0x590] sm:$0xff]
        %v798 = vld [vmem:[#allocation7 + $0x598] sm:$0xff]
        %v799 = vld [vmem:[#allocation7 + $0x5a0] sm:$0xff]
        %v800 = vld [vmem:[#allocation7 + $0x5a8] sm:$0xff]
        %v801 = vld [vmem:[#allocation7 + $0x5b0] sm:$0xff]
        %v802 = vld [vmem:[#allocation7 + $0x5b8] sm:$0xff]
        %v803 = vld [vmem:[#allocation7 + $0x5c0] sm:$0xff]
        %v804 = vld [vmem:[#allocation7 + $0x5c8] sm:$0xff]
        %v805 = vld [vmem:[#allocation7 + $0x5d0] sm:$0xff]
        %v806 = vld [vmem:[#allocation7 + $0x5d8] sm:$0xff]
        %v807 = vld [vmem:[#allocation7 + $0x5e0] sm:$0xff]
        %v808 = vld [vmem:[#allocation7 + $0x5e8] sm:$0xff]
        %v809 = vld [vmem:[#allocation7 + $0x5f0] sm:$0xff]
        %v810 = vld [vmem:[#allocation7 + $0x5f8] sm:$0xff]
        %v1003 = vunpack.c.l.b16 %v619
        %v1004 = vunpack.c.h.b16 %v619
        %v1005 = vunpack.c.l.b16 %v620
        %v1006 = vunpack.c.h.b16 %v620
        %v1007 = vunpack.c.l.b16 %v621
        %v1008 = vunpack.c.h.b16 %v621
        %v1009 = vunpack.c.l.b16 %v622
        %v1010 = vunpack.c.h.b16 %v622
        %v1011 = vunpack.c.l.b16 %v623
        %v1012 = vunpack.c.h.b16 %v623
        %v1013 = vunpack.c.l.b16 %v624
        %v1014 = vunpack.c.h.b16 %v624
        %v1015 = vunpack.c.l.b16 %v625
        %v1016 = vunpack.c.h.b16 %v625
        %v1017 = vunpack.c.l.b16 %v626
        %v1018 = vunpack.c.h.b16 %v626
        %v1019 = vunpack.c.l.b16 %v627
        %v1020 = vunpack.c.h.b16 %v627
        %v1021 = vunpack.c.l.b16 %v628
        %v1022 = vunpack.c.h.b16 %v628
        %v1023 = vunpack.c.l.b16 %v629
        %v1024 = vunpack.c.h.b16 %v629
        %v1025 = vunpack.c.l.b16 %v630
        %v1026 = vunpack.c.h.b16 %v630
        %v1027 = vunpack.c.l.b16 %v631
        %v1028 = vunpack.c.h.b16 %v631
        %v1029 = vunpack.c.l.b16 %v632
        %v1030 = vunpack.c.h.b16 %v632
        %v1031 = vunpack.c.l.b16 %v633
        %v1032 = vunpack.c.h.b16 %v633
        %v1033 = vunpack.c.l.b16 %v634
        %v1034 = vunpack.c.h.b16 %v634
        %v1035 = vunpack.c.l.b16 %v635
        %v1036 = vunpack.c.h.b16 %v635
        %v1037 = vunpack.c.l.b16 %v636
        %v1038 = vunpack.c.h.b16 %v636
        %v1039 = vunpack.c.l.b16 %v637
        %v1040 = vunpack.c.h.b16 %v637
        %v1041 = vunpack.c.l.b16 %v638
        %v1042 = vunpack.c.h.b16 %v638
        %v1043 = vunpack.c.l.b16 %v639
        %v1044 = vunpack.c.h.b16 %v639
        %v1045 = vunpack.c.l.b16 %v640
        %v1046 = vunpack.c.h.b16 %v640
        %v1047 = vunpack.c.l.b16 %v641
        %v1048 = vunpack.c.h.b16 %v641
        %v1049 = vunpack.c.l.b16 %v642
        %v1050 = vunpack.c.h.b16 %v642
        %v1051 = vunpack.c.l.b16 %v643
        %v1052 = vunpack.c.h.b16 %v643
        %v1053 = vunpack.c.l.b16 %v644
        %v1054 = vunpack.c.h.b16 %v644
        %v1055 = vunpack.c.l.b16 %v645
        %v1056 = vunpack.c.h.b16 %v645
        %v1057 = vunpack.c.l.b16 %v646
        %v1058 = vunpack.c.h.b16 %v646
        %v1059 = vunpack.c.l.b16 %v647
        %v1060 = vunpack.c.h.b16 %v647
        %v1061 = vunpack.c.l.b16 %v648
        %v1062 = vunpack.c.h.b16 %v648
        %v1063 = vunpack.c.l.b16 %v649
        %v1064 = vunpack.c.h.b16 %v649
        %v1065 = vunpack.c.l.b16 %v650
        %v1066 = vunpack.c.h.b16 %v650
        %v1067 = vunpack.c.l.b16 %v651
        %v1068 = vunpack.c.h.b16 %v651
        %v1069 = vunpack.c.l.b16 %v652
        %v1070 = vunpack.c.h.b16 %v652
        %v1071 = vunpack.c.l.b16 %v653
        %v1072 = vunpack.c.h.b16 %v653
        %v1073 = vunpack.c.l.b16 %v654
        %v1074 = vunpack.c.h.b16 %v654
        %v1075 = vunpack.c.l.b16 %v655
        %v1076 = vunpack.c.h.b16 %v655
        %v1077 = vunpack.c.l.b16 %v656
        %v1078 = vunpack.c.h.b16 %v656
        %v1079 = vunpack.c.l.b16 %v657
        %v1080 = vunpack.c.h.b16 %v657
        %v1081 = vunpack.c.l.b16 %v658
        %v1082 = vunpack.c.h.b16 %v658
        %v1083 = vunpack.c.l.b16 %v659
        %v1084 = vunpack.c.h.b16 %v659
        %v1085 = vunpack.c.l.b16 %v660
        %v1086 = vunpack.c.h.b16 %v660
        %v1087 = vunpack.c.l.b16 %v661
        %v1088 = vunpack.c.h.b16 %v661
        %v1089 = vunpack.c.l.b16 %v662
        %v1090 = vunpack.c.h.b16 %v662
        %v1091 = vunpack.c.l.b16 %v663
        %v1092 = vunpack.c.h.b16 %v663
        %v1093 = vunpack.c.l.b16 %v664
        %v1094 = vunpack.c.h.b16 %v664
        %v1095 = vunpack.c.l.b16 %v665
        %v1096 = vunpack.c.h.b16 %v665
        %v1097 = vunpack.c.l.b16 %v666
        %v1098 = vunpack.c.h.b16 %v666
        %v1099 = vunpack.c.l.b16 %v667
        %v1100 = vunpack.c.h.b16 %v667
        %v1101 = vunpack.c.l.b16 %v668
        %v1102 = vunpack.c.h.b16 %v668
        %v1103 = vunpack.c.l.b16 %v669
        %v1104 = vunpack.c.h.b16 %v669
        %v1105 = vunpack.c.l.b16 %v670
        %v1106 = vunpack.c.h.b16 %v670
        %v1107 = vunpack.c.l.b16 %v671
        %v1108 = vunpack.c.h.b16 %v671
        %v1109 = vunpack.c.l.b16 %v672
        %v1110 = vunpack.c.h.b16 %v672
        %v1111 = vunpack.c.l.b16 %v673
        %v1112 = vunpack.c.h.b16 %v673
        %v1113 = vunpack.c.l.b16 %v674
        %v1114 = vunpack.c.h.b16 %v674
        %v1115 = vunpack.c.l.b16 %v675
        %v1116 = vunpack.c.h.b16 %v675
        %v1117 = vunpack.c.l.b16 %v676
        %v1118 = vunpack.c.h.b16 %v676
        %v1119 = vunpack.c.l.b16 %v677
        %v1120 = vunpack.c.h.b16 %v677
        %v1121 = vunpack.c.l.b16 %v678
        %v1122 = vunpack.c.h.b16 %v678
        %v1123 = vunpack.c.l.b16 %v679
        %v1124 = vunpack.c.h.b16 %v679
        %v1125 = vunpack.c.l.b16 %v680
        %v1126 = vunpack.c.h.b16 %v680
        %v1127 = vunpack.c.l.b16 %v681
        %v1128 = vunpack.c.h.b16 %v681
        %v1129 = vunpack.c.l.b16 %v682
        %v1130 = vunpack.c.h.b16 %v682
        %v1131 = vunpack.c.l.b16 %v683
        %v1132 = vunpack.c.h.b16 %v683
        %v1133 = vunpack.c.l.b16 %v684
        %v1134 = vunpack.c.h.b16 %v684
        %v1135 = vunpack.c.l.b16 %v685
        %v1136 = vunpack.c.h.b16 %v685
        %v1137 = vunpack.c.l.b16 %v686
        %v1138 = vunpack.c.h.b16 %v686
        %v1139 = vunpack.c.l.b16 %v687
        %v1140 = vunpack.c.h.b16 %v687
        %v1141 = vunpack.c.l.b16 %v688
        %v1142 = vunpack.c.h.b16 %v688
        %v1143 = vunpack.c.l.b16 %v689
        %v1144 = vunpack.c.h.b16 %v689
        %v1145 = vunpack.c.l.b16 %v690
        %v1146 = vunpack.c.h.b16 %v690
        %v1147 = vunpack.c.l.b16 %v691
        %v1148 = vunpack.c.h.b16 %v691
        %v1149 = vunpack.c.l.b16 %v692
        %v1150 = vunpack.c.h.b16 %v692
        %v1151 = vunpack.c.l.b16 %v693
        %v1152 = vunpack.c.h.b16 %v693
        %v1153 = vunpack.c.l.b16 %v694
        %v1154 = vunpack.c.h.b16 %v694
        %v1155 = vunpack.c.l.b16 %v695
        %v1156 = vunpack.c.h.b16 %v695
        %v1157 = vunpack.c.l.b16 %v696
        %v1158 = vunpack.c.h.b16 %v696
        %v1159 = vunpack.c.l.b16 %v697
        %v1160 = vunpack.c.h.b16 %v697
        %v1161 = vunpack.c.l.b16 %v698
        %v1162 = vunpack.c.h.b16 %v698
        %v1163 = vunpack.c.l.b16 %v699
        %v1164 = vunpack.c.h.b16 %v699
        %v1165 = vunpack.c.l.b16 %v700
        %v1166 = vunpack.c.h.b16 %v700
        %v1167 = vunpack.c.l.b16 %v701
        %v1168 = vunpack.c.h.b16 %v701
        %v1169 = vunpack.c.l.b16 %v702
        %v1170 = vunpack.c.h.b16 %v702
        %v1171 = vunpack.c.l.b16 %v703
        %v1172 = vunpack.c.h.b16 %v703
        %v1173 = vunpack.c.l.b16 %v704
        %v1174 = vunpack.c.h.b16 %v704
        %v1175 = vunpack.c.l.b16 %v705
        %v1176 = vunpack.c.h.b16 %v705
        %v1177 = vunpack.c.l.b16 %v706
        %v1178 = vunpack.c.h.b16 %v706
        %v1179 = vunpack.c.l.b16 %v707
        %v1180 = vunpack.c.h.b16 %v707
        %v1181 = vunpack.c.l.b16 %v708
        %v1182 = vunpack.c.h.b16 %v708
        %v1183 = vunpack.c.l.b16 %v709
        %v1184 = vunpack.c.h.b16 %v709
        %v1185 = vunpack.c.l.b16 %v710
        %v1186 = vunpack.c.h.b16 %v710
        %v1187 = vunpack.c.l.b16 %v711
        %v1188 = vunpack.c.h.b16 %v711
        %v1189 = vunpack.c.l.b16 %v712
        %v1190 = vunpack.c.h.b16 %v712
        %v1191 = vunpack.c.l.b16 %v713
        %v1192 = vunpack.c.h.b16 %v713
        %v1193 = vunpack.c.l.b16 %v714
        %v1194 = vunpack.c.h.b16 %v714
        %v1195 = vunpack.c.l.b16 %v715
        %v1196 = vunpack.c.h.b16 %v715
        %v1197 = vunpack.c.l.b16 %v716
        %v1198 = vunpack.c.h.b16 %v716
        %v1199 = vunpack.c.l.b16 %v717
        %v1200 = vunpack.c.h.b16 %v717
        %v1201 = vunpack.c.l.b16 %v718
        %v1202 = vunpack.c.h.b16 %v718
        %v1203 = vunpack.c.l.b16 %v719
        %v1204 = vunpack.c.h.b16 %v719
        %v1205 = vunpack.c.l.b16 %v720
        %v1206 = vunpack.c.h.b16 %v720
        %v1207 = vunpack.c.l.b16 %v721
        %v1208 = vunpack.c.h.b16 %v721
        %v1209 = vunpack.c.l.b16 %v722
        %v1210 = vunpack.c.h.b16 %v722
        %v1211 = vunpack.c.l.b16 %v723
        %v1212 = vunpack.c.h.b16 %v723
        %v1213 = vunpack.c.l.b16 %v724
        %v1214 = vunpack.c.h.b16 %v724
        %v1215 = vunpack.c.l.b16 %v725
        %v1216 = vunpack.c.h.b16 %v725
        %v1217 = vunpack.c.l.b16 %v726
        %v1218 = vunpack.c.h.b16 %v726
        %v1219 = vunpack.c.l.b16 %v727
        %v1220 = vunpack.c.h.b16 %v727
        %v1221 = vunpack.c.l.b16 %v728
        %v1222 = vunpack.c.h.b16 %v728
        %v1223 = vunpack.c.l.b16 %v729
        %v1224 = vunpack.c.h.b16 %v729
        %v1225 = vunpack.c.l.b16 %v730
        %v1226 = vunpack.c.h.b16 %v730
        %v1227 = vunpack.c.l.b16 %v731
        %v1228 = vunpack.c.h.b16 %v731
        %v1229 = vunpack.c.l.b16 %v732
        %v1230 = vunpack.c.h.b16 %v732
        %v1231 = vunpack.c.l.b16 %v733
        %v1232 = vunpack.c.h.b16 %v733
        %v1233 = vunpack.c.l.b16 %v734
        %v1234 = vunpack.c.h.b16 %v734
        %v1235 = vunpack.c.l.b16 %v735
        %v1236 = vunpack.c.h.b16 %v735
        %v1237 = vunpack.c.l.b16 %v736
        %v1238 = vunpack.c.h.b16 %v736
        %v1239 = vunpack.c.l.b16 %v737
        %v1240 = vunpack.c.h.b16 %v737
        %v1241 = vunpack.c.l.b16 %v738
        %v1242 = vunpack.c.h.b16 %v738
        %v1243 = vunpack.c.l.b16 %v739
        %v1244 = vunpack.c.h.b16 %v739
        %v1245 = vunpack.c.l.b16 %v740
        %v1246 = vunpack.c.h.b16 %v740
        %v1247 = vunpack.c.l.b16 %v741
        %v1248 = vunpack.c.h.b16 %v741
        %v1249 = vunpack.c.l.b16 %v742
        %v1250 = vunpack.c.h.b16 %v742
        %v1251 = vunpack.c.l.b16 %v743
        %v1252 = vunpack.c.h.b16 %v743
        %v1253 = vunpack.c.l.b16 %v744
        %v1254 = vunpack.c.h.b16 %v744
        %v1255 = vunpack.c.l.b16 %v745
        %v1256 = vunpack.c.h.b16 %v745
        %v1257 = vunpack.c.l.b16 %v746
        %v1258 = vunpack.c.h.b16 %v746
        %v1259 = vunpack.c.l.b16 %v747
        %v1260 = vunpack.c.h.b16 %v747
        %v1261 = vunpack.c.l.b16 %v748
        %v1262 = vunpack.c.h.b16 %v748
        %v1263 = vunpack.c.l.b16 %v749
        %v1264 = vunpack.c.h.b16 %v749
        %v1265 = vunpack.c.l.b16 %v750
        %v1266 = vunpack.c.h.b16 %v750
        %v1267 = vunpack.c.l.b16 %v751
        %v1268 = vunpack.c.h.b16 %v751
        %v1269 = vunpack.c.l.b16 %v752
        %v1270 = vunpack.c.h.b16 %v752
        %v1271 = vunpack.c.l.b16 %v753
        %v1272 = vunpack.c.h.b16 %v753
        %v1273 = vunpack.c.l.b16 %v754
        %v1274 = vunpack.c.h.b16 %v754
        %v1275 = vunpack.c.l.b16 %v755
        %v1276 = vunpack.c.h.b16 %v755
        %v1277 = vunpack.c.l.b16 %v756
        %v1278 = vunpack.c.h.b16 %v756
        %v1279 = vunpack.c.l.b16 %v757
        %v1280 = vunpack.c.h.b16 %v757
        %v1281 = vunpack.c.l.b16 %v758
        %v1282 = vunpack.c.h.b16 %v758
        %v1283 = vunpack.c.l.b16 %v759
        %v1284 = vunpack.c.h.b16 %v759
        %v1285 = vunpack.c.l.b16 %v760
        %v1286 = vunpack.c.h.b16 %v760
        %v1287 = vunpack.c.l.b16 %v761
        %v1288 = vunpack.c.h.b16 %v761
        %v1289 = vunpack.c.l.b16 %v762
        %v1290 = vunpack.c.h.b16 %v762
        %v1291 = vunpack.c.l.b16 %v763
        %v1292 = vunpack.c.h.b16 %v763
        %v1293 = vunpack.c.l.b16 %v764
        %v1294 = vunpack.c.h.b16 %v764
        %v1295 = vunpack.c.l.b16 %v765
        %v1296 = vunpack.c.h.b16 %v765
        %v1297 = vunpack.c.l.b16 %v766
        %v1298 = vunpack.c.h.b16 %v766
        %v1299 = vunpack.c.l.b16 %v767
        %v1300 = vunpack.c.h.b16 %v767
        %v1301 = vunpack.c.l.b16 %v768
        %v1302 = vunpack.c.h.b16 %v768
        %v1303 = vunpack.c.l.b16 %v769
        %v1304 = vunpack.c.h.b16 %v769
        %v1305 = vunpack.c.l.b16 %v770
        %v1306 = vunpack.c.h.b16 %v770
        %v1307 = vunpack.c.l.b16 %v771
        %v1308 = vunpack.c.h.b16 %v771
        %v1309 = vunpack.c.l.b16 %v772
        %v1310 = vunpack.c.h.b16 %v772
        %v1311 = vunpack.c.l.b16 %v773
        %v1312 = vunpack.c.h.b16 %v773
        %v1313 = vunpack.c.l.b16 %v774
        %v1314 = vunpack.c.h.b16 %v774
        %v1315 = vunpack.c.l.b16 %v775
        %v1316 = vunpack.c.h.b16 %v775
        %v1317 = vunpack.c.l.b16 %v776
        %v1318 = vunpack.c.h.b16 %v776
        %v1319 = vunpack.c.l.b16 %v777
        %v1320 = vunpack.c.h.b16 %v777
        %v1321 = vunpack.c.l.b16 %v778
        %v1322 = vunpack.c.h.b16 %v778
        %v1323 = vunpack.c.l.b16 %v779
        %v1324 = vunpack.c.h.b16 %v779
        %v1325 = vunpack.c.l.b16 %v780
        %v1326 = vunpack.c.h.b16 %v780
        %v1327 = vunpack.c.l.b16 %v781
        %v1328 = vunpack.c.h.b16 %v781
        %v1329 = vunpack.c.l.b16 %v782
        %v1330 = vunpack.c.h.b16 %v782
        %v1331 = vunpack.c.l.b16 %v783
        %v1332 = vunpack.c.h.b16 %v783
        %v1333 = vunpack.c.l.b16 %v784
        %v1334 = vunpack.c.h.b16 %v784
        %v1335 = vunpack.c.l.b16 %v785
        %v1336 = vunpack.c.h.b16 %v785
        %v1337 = vunpack.c.l.b16 %v786
        %v1338 = vunpack.c.h.b16 %v786
        %v1339 = vunpack.c.l.b16 %v787
        %v1340 = vunpack.c.h.b16 %v787
        %v1341 = vunpack.c.l.b16 %v788
        %v1342 = vunpack.c.h.b16 %v788
        %v1343 = vunpack.c.l.b16 %v789
        %v1344 = vunpack.c.h.b16 %v789
        %v1345 = vunpack.c.l.b16 %v790
        %v1346 = vunpack.c.h.b16 %v790
        %v1347 = vunpack.c.l.b16 %v791
        %v1348 = vunpack.c.h.b16 %v791
        %v1349 = vunpack.c.l.b16 %v792
        %v1350 = vunpack.c.h.b16 %v792
        %v1351 = vunpack.c.l.b16 %v793
        %v1352 = vunpack.c.h.b16 %v793
        %v1353 = vunpack.c.l.b16 %v794
        %v1354 = vunpack.c.h.b16 %v794
        %v1355 = vunpack.c.l.b16 %v795
        %v1356 = vunpack.c.h.b16 %v795
        %v1357 = vunpack.c.l.b16 %v796
        %v1358 = vunpack.c.h.b16 %v796
        %v1359 = vunpack.c.l.b16 %v797
        %v1360 = vunpack.c.h.b16 %v797
        %v1361 = vunpack.c.l.b16 %v798
        %v1362 = vunpack.c.h.b16 %v798
        %v1363 = vunpack.c.l.b16 %v799
        %v1364 = vunpack.c.h.b16 %v799
        %v1365 = vunpack.c.l.b16 %v800
        %v1366 = vunpack.c.h.b16 %v800
        %v1367 = vunpack.c.l.b16 %v801
        %v1368 = vunpack.c.h.b16 %v801
        %v1369 = vunpack.c.l.b16 %v802
        %v1370 = vunpack.c.h.b16 %v802
        %v1371 = vunpack.c.l.b16 %v803
        %v1372 = vunpack.c.h.b16 %v803
        %v1373 = vunpack.c.l.b16 %v804
        %v1374 = vunpack.c.h.b16 %v804
        %v1375 = vunpack.c.l.b16 %v805
        %v1376 = vunpack.c.h.b16 %v805
        %v1377 = vunpack.c.l.b16 %v806
        %v1378 = vunpack.c.h.b16 %v806
        %v1379 = vunpack.c.l.b16 %v807
        %v1380 = vunpack.c.h.b16 %v807
        %v1381 = vunpack.c.l.b16 %v808
        %v1382 = vunpack.c.h.b16 %v808
        %v1383 = vunpack.c.l.b16 %v809
        %v1384 = vunpack.c.h.b16 %v809
        %v1385 = vunpack.c.l.b16 %v810
        %v1386 = vunpack.c.h.b16 %v810
        %v1387 = vpack.c.b16 %v1015, %v1003
        %v1388 = vpack.c.b16 %v1016, %v1004
        %v1389 = vpack.c.b16 %v1017, %v1005
        %v1390 = vpack.c.b16 %v1018, %v1006
        %v1391 = vpack.c.b16 %v1019, %v1007
        %v1392 = vpack.c.b16 %v1020, %v1008
        %v1393 = vpack.c.b16 %v1021, %v1009
        %v1394 = vpack.c.b16 %v1022, %v1010
        %v1395 = vpack.c.b16 %v1023, %v1011
        %v1396 = vpack.c.b16 %v1024, %v1012
        %v1397 = vpack.c.b16 %v1025, %v1013
        %v1398 = vpack.c.b16 %v1026, %v1014
        %v1399 = vpack.c.b16 %v1039, %v1027
        %v1400 = vpack.c.b16 %v1040, %v1028
        %v1401 = vpack.c.b16 %v1041, %v1029
        %v1402 = vpack.c.b16 %v1042, %v1030
        %v1403 = vpack.c.b16 %v1043, %v1031
        %v1404 = vpack.c.b16 %v1044, %v1032
        %v1405 = vpack.c.b16 %v1045, %v1033
        %v1406 = vpack.c.b16 %v1046, %v1034
        %v1407 = vpack.c.b16 %v1047, %v1035
        %v1408 = vpack.c.b16 %v1048, %v1036
        %v1409 = vpack.c.b16 %v1049, %v1037
        %v1410 = vpack.c.b16 %v1050, %v1038
        %v1411 = vpack.c.b16 %v1063, %v1051
        %v1412 = vpack.c.b16 %v1064, %v1052
        %v1413 = vpack.c.b16 %v1065, %v1053
        %v1414 = vpack.c.b16 %v1066, %v1054
        %v1415 = vpack.c.b16 %v1067, %v1055
        %v1416 = vpack.c.b16 %v1068, %v1056
        %v1417 = vpack.c.b16 %v1069, %v1057
        %v1418 = vpack.c.b16 %v1070, %v1058
        %v1419 = vpack.c.b16 %v1071, %v1059
        %v1420 = vpack.c.b16 %v1072, %v1060
        %v1421 = vpack.c.b16 %v1073, %v1061
        %v1422 = vpack.c.b16 %v1074, %v1062
        %v1423 = vpack.c.b16 %v1087, %v1075
        %v1424 = vpack.c.b16 %v1088, %v1076
        %v1425 = vpack.c.b16 %v1089, %v1077
        %v1426 = vpack.c.b16 %v1090, %v1078
        %v1427 = vpack.c.b16 %v1091, %v1079
        %v1428 = vpack.c.b16 %v1092, %v1080
        %v1429 = vpack.c.b16 %v1093, %v1081
        %v1430 = vpack.c.b16 %v1094, %v1082
        %v1431 = vpack.c.b16 %v1095, %v1083
        %v1432 = vpack.c.b16 %v1096, %v1084
        %v1433 = vpack.c.b16 %v1097, %v1085
        %v1434 = vpack.c.b16 %v1098, %v1086
        %v1435 = vpack.c.b16 %v1111, %v1099
        %v1436 = vpack.c.b16 %v1112, %v1100
        %v1437 = vpack.c.b16 %v1113, %v1101
        %v1438 = vpack.c.b16 %v1114, %v1102
        %v1439 = vpack.c.b16 %v1115, %v1103
        %v1440 = vpack.c.b16 %v1116, %v1104
        %v1441 = vpack.c.b16 %v1117, %v1105
        %v1442 = vpack.c.b16 %v1118, %v1106
        %v1443 = vpack.c.b16 %v1119, %v1107
        %v1444 = vpack.c.b16 %v1120, %v1108
        %v1445 = vpack.c.b16 %v1121, %v1109
        %v1446 = vpack.c.b16 %v1122, %v1110
        %v1447 = vpack.c.b16 %v1135, %v1123
        %v1448 = vpack.c.b16 %v1136, %v1124
        %v1449 = vpack.c.b16 %v1137, %v1125
        %v1450 = vpack.c.b16 %v1138, %v1126
        %v1451 = vpack.c.b16 %v1139, %v1127
        %v1452 = vpack.c.b16 %v1140, %v1128
        %v1453 = vpack.c.b16 %v1141, %v1129
        %v1454 = vpack.c.b16 %v1142, %v1130
        %v1455 = vpack.c.b16 %v1143, %v1131
        %v1456 = vpack.c.b16 %v1144, %v1132
        %v1457 = vpack.c.b16 %v1145, %v1133
        %v1458 = vpack.c.b16 %v1146, %v1134
        %v1459 = vpack.c.b16 %v1159, %v1147
        %v1460 = vpack.c.b16 %v1160, %v1148
        %v1461 = vpack.c.b16 %v1161, %v1149
        %v1462 = vpack.c.b16 %v1162, %v1150
        %v1463 = vpack.c.b16 %v1163, %v1151
        %v1464 = vpack.c.b16 %v1164, %v1152
        %v1465 = vpack.c.b16 %v1165, %v1153
        %v1466 = vpack.c.b16 %v1166, %v1154
        %v1467 = vpack.c.b16 %v1167, %v1155
        %v1468 = vpack.c.b16 %v1168, %v1156
        %v1469 = vpack.c.b16 %v1169, %v1157
        %v1470 = vpack.c.b16 %v1170, %v1158
        %v1471 = vpack.c.b16 %v1183, %v1171
        %v1472 = vpack.c.b16 %v1184, %v1172
        %v1473 = vpack.c.b16 %v1185, %v1173
        %v1474 = vpack.c.b16 %v1186, %v1174
        %v1475 = vpack.c.b16 %v1187, %v1175
        %v1476 = vpack.c.b16 %v1188, %v1176
        %v1477 = vpack.c.b16 %v1189, %v1177
        %v1478 = vpack.c.b16 %v1190, %v1178
        %v1479 = vpack.c.b16 %v1191, %v1179
        %v1480 = vpack.c.b16 %v1192, %v1180
        %v1481 = vpack.c.b16 %v1193, %v1181
        %v1482 = vpack.c.b16 %v1194, %v1182
        %v1483 = vpack.c.b16 %v1207, %v1195
        %v1484 = vpack.c.b16 %v1208, %v1196
        %v1485 = vpack.c.b16 %v1209, %v1197
        %v1486 = vpack.c.b16 %v1210, %v1198
        %v1487 = vpack.c.b16 %v1211, %v1199
        %v1488 = vpack.c.b16 %v1212, %v1200
        %v1489 = vpack.c.b16 %v1213, %v1201
        %v1490 = vpack.c.b16 %v1214, %v1202
        %v1491 = vpack.c.b16 %v1215, %v1203
        %v1492 = vpack.c.b16 %v1216, %v1204
        %v1493 = vpack.c.b16 %v1217, %v1205
        %v1494 = vpack.c.b16 %v1218, %v1206
        %v1495 = vpack.c.b16 %v1231, %v1219
        %v1496 = vpack.c.b16 %v1232, %v1220
        %v1497 = vpack.c.b16 %v1233, %v1221
        %v1498 = vpack.c.b16 %v1234, %v1222
        %v1499 = vpack.c.b16 %v1235, %v1223
        %v1500 = vpack.c.b16 %v1236, %v1224
        %v1501 = vpack.c.b16 %v1237, %v1225
        %v1502 = vpack.c.b16 %v1238, %v1226
        %v1503 = vpack.c.b16 %v1239, %v1227
        %v1504 = vpack.c.b16 %v1240, %v1228
        %v1505 = vpack.c.b16 %v1241, %v1229
        %v1506 = vpack.c.b16 %v1242, %v1230
        %v1507 = vpack.c.b16 %v1255, %v1243
        %v1508 = vpack.c.b16 %v1256, %v1244
        %v1509 = vpack.c.b16 %v1257, %v1245
        %v1510 = vpack.c.b16 %v1258, %v1246
        %v1511 = vpack.c.b16 %v1259, %v1247
        %v1512 = vpack.c.b16 %v1260, %v1248
        %v1513 = vpack.c.b16 %v1261, %v1249
        %v1514 = vpack.c.b16 %v1262, %v1250
        %v1515 = vpack.c.b16 %v1263, %v1251
        %v1516 = vpack.c.b16 %v1264, %v1252
        %v1517 = vpack.c.b16 %v1265, %v1253
        %v1518 = vpack.c.b16 %v1266, %v1254
        %v1519 = vpack.c.b16 %v1279, %v1267
        %v1520 = vpack.c.b16 %v1280, %v1268
        %v1521 = vpack.c.b16 %v1281, %v1269
        %v1522 = vpack.c.b16 %v1282, %v1270
        %v1523 = vpack.c.b16 %v1283, %v1271
        %v1524 = vpack.c.b16 %v1284, %v1272
        %v1525 = vpack.c.b16 %v1285, %v1273
        %v1526 = vpack.c.b16 %v1286, %v1274
        %v1527 = vpack.c.b16 %v1287, %v1275
        %v1528 = vpack.c.b16 %v1288, %v1276
        %v1529 = vpack.c.b16 %v1289, %v1277
        %v1530 = vpack.c.b16 %v1290, %v1278
        %v1531 = vpack.c.b16 %v1303, %v1291
        %v1532 = vpack.c.b16 %v1304, %v1292
        %v1533 = vpack.c.b16 %v1305, %v1293
        %v1534 = vpack.c.b16 %v1306, %v1294
        %v1535 = vpack.c.b16 %v1307, %v1295
        %v1536 = vpack.c.b16 %v1308, %v1296
        %v1537 = vpack.c.b16 %v1309, %v1297
        %v1538 = vpack.c.b16 %v1310, %v1298
        %v1539 = vpack.c.b16 %v1311, %v1299
        %v1540 = vpack.c.b16 %v1312, %v1300
        %v1541 = vpack.c.b16 %v1313, %v1301
        %v1542 = vpack.c.b16 %v1314, %v1302
        %v1543 = vpack.c.b16 %v1327, %v1315
        %v1544 = vpack.c.b16 %v1328, %v1316
        %v1545 = vpack.c.b16 %v1329, %v1317
        %v1546 = vpack.c.b16 %v1330, %v1318
        %v1547 = vpack.c.b16 %v1331, %v1319
        %v1548 = vpack.c.b16 %v1332, %v1320
        %v1549 = vpack.c.b16 %v1333, %v1321
        %v1550 = vpack.c.b16 %v1334, %v1322
        %v1551 = vpack.c.b16 %v1335, %v1323
        %v1552 = vpack.c.b16 %v1336, %v1324
        %v1553 = vpack.c.b16 %v1337, %v1325
        %v1554 = vpack.c.b16 %v1338, %v1326
        %v1555 = vpack.c.b16 %v1351, %v1339
        %v1556 = vpack.c.b16 %v1352, %v1340
        %v1557 = vpack.c.b16 %v1353, %v1341
        %v1558 = vpack.c.b16 %v1354, %v1342
        %v1559 = vpack.c.b16 %v1355, %v1343
        %v1560 = vpack.c.b16 %v1356, %v1344
        %v1561 = vpack.c.b16 %v1357, %v1345
        %v1562 = vpack.c.b16 %v1358, %v1346
        %v1563 = vpack.c.b16 %v1359, %v1347
        %v1564 = vpack.c.b16 %v1360, %v1348
        %v1565 = vpack.c.b16 %v1361, %v1349
        %v1566 = vpack.c.b16 %v1362, %v1350
        %v1567 = vpack.c.b16 %v1375, %v1363
        %v1568 = vpack.c.b16 %v1376, %v1364
        %v1569 = vpack.c.b16 %v1377, %v1365
        %v1570 = vpack.c.b16 %v1378, %v1366
        %v1571 = vpack.c.b16 %v1379, %v1367
        %v1572 = vpack.c.b16 %v1380, %v1368
        %v1573 = vpack.c.b16 %v1381, %v1369
        %v1574 = vpack.c.b16 %v1382, %v1370
        %v1575 = vpack.c.b16 %v1383, %v1371
        %v1576 = vpack.c.b16 %v1384, %v1372
        %v1577 = vpack.c.b16 %v1385, %v1373
        %v1578 = vpack.c.b16 %v1386, %v1374
        %1771 = vmatprep.subr.bf16.mxu0 %v1388
        %1772 = vmatpush1.bf16.msra.mxu0 %v1387
        %1773 = vmatprep.subr.bf16.mxu0 %v1400
        %1774 = vmatpush1.bf16.msra.mxu0 %v1399
        %1775 = vmatprep.subr.bf16.mxu0 %v1412
        %1776 = vmatpush1.bf16.msra.mxu0 %v1411
        %1777 = vmatprep.subr.bf16.mxu0 %v1424
        %1778 = vmatpush1.bf16.msra.mxu0 %v1423
        %1779 = vmatprep.subr.bf16.mxu0 %v1436
        %1780 = vmatpush1.bf16.msra.mxu0 %v1435
        %1781 = vmatprep.subr.bf16.mxu0 %v1448
        %1782 = vmatpush1.bf16.msra.mxu0 %v1447
        %1783 = vmatprep.subr.bf16.mxu0 %v1460
        %1784 = vmatpush1.bf16.msra.mxu0 %v1459
        %1785 = vmatprep.subr.bf16.mxu0 %v1472
        %1786 = vmatpush1.bf16.msra.mxu0 %v1471
        %1787 = vmatprep.subr.bf16.mxu0 %v1484
        %1788 = vmatpush1.bf16.msra.mxu0 %v1483
        %1789 = vmatprep.subr.bf16.mxu0 %v1496
        %1790 = vmatpush1.bf16.msra.mxu0 %v1495
        %1791 = vmatprep.subr.bf16.mxu0 %v1508
        %1792 = vmatpush1.bf16.msra.mxu0 %v1507
        %1793 = vmatprep.subr.bf16.mxu0 %v1520
        %1794 = vmatpush1.bf16.msra.mxu0 %v1519
        %1795 = vmatprep.subr.bf16.mxu0 %v1532
        %1796 = vmatpush1.bf16.msra.mxu0 %v1531
        %1797 = vmatprep.subr.bf16.mxu0 %v1544
        %1798 = vmatpush1.bf16.msra.mxu0 %v1543
        %1799 = vmatprep.subr.bf16.mxu0 %v1556
        %1800 = vmatpush1.bf16.msra.mxu0 %v1555
        %1801 = vmatprep.subr.bf16.mxu0 %v1568
        %1802 = vmatpush1.bf16.msra.mxu0 %v1567
        %1803 = vmatprep.mubr.bf16.mxu0 %v588
        %1804 = vmatmul.mubr.bf16.gmra.mrb[0].mxu0 %v587
        %v1805 = vpop.f32.mrb[0].mxu0
        %v1806 = vadd.f32 0.0, %v1805
        %v1807 = vpop.f32.mrb[0].mxu0
        %v1808 = vadd.f32 0.0, %v1807
        %v1809 = vpop.f32.mrb[0].mxu0
        %v1810 = vadd.f32 0.0, %v1809
        %v1811 = vpop.f32.mrb[0].mxu0
        %v1812 = vadd.f32 0.0, %v1811
        %1813 = vmatprep.mubr.bf16.mxu0 %v590
        %1814 = vmatmul.mubr.bf16.gmra.mrb[0].mxu0 %v589
        %v1815 = vpop.f32.mrb[0].mxu0
        %v1816 = vadd.f32 0.0, %v1815
        %v1817 = vpop.f32.mrb[0].mxu0
        %v1818 = vadd.f32 0.0, %v1817
        %v1819 = vpop.f32.mrb[0].mxu0
        %v1820 = vadd.f32 0.0, %v1819
        %v1821 = vpop.f32.mrb[0].mxu0
        %v1822 = vadd.f32 0.0, %v1821
        %1823 = vmatprep.mubr.bf16.mxu0 %v592
        %1824 = vmatmul.mubr.bf16.gmra.mrb[0].mxu0 %v591
        %v1825 = vpop.f32.mrb[0].mxu0
        %v1826 = vadd.f32 0.0, %v1825
        %v1827 = vpop.f32.mrb[0].mxu0
        %v1828 = vadd.f32 0.0, %v1827
        %v1829 = vpop.f32.mrb[0].mxu0
        %v1830 = vadd.f32 0.0, %v1829
        %v1831 = vpop.f32.mrb[0].mxu0
        %v1832 = vadd.f32 0.0, %v1831
        %1833 = vmatprep.mubr.bf16.mxu0 %v594
        %1834 = vmatmul.mubr.bf16.gmra.mrb[0].mxu0 %v593
        %v1835 = vpop.f32.mrb[0].mxu0
        %v1836 = vadd.f32 0.0, %v1835
        %v1837 = vpop.f32.mrb[0].mxu0
        %v1838 = vadd.f32 0.0, %v1837
        %v1839 = vpop.f32.mrb[0].mxu0
        %v1840 = vadd.f32 0.0, %v1839
        %v1841 = vpop.f32.mrb[0].mxu0
        %v1842 = vadd.f32 0.0, %v1841
        %1843 = vmatprep.mubr.bf16.mxu0 %v596
        %1844 = vmatmul.mubr.bf16.gmra.mrb[0].mxu0 %v595
        %v1845 = vpop.f32.mrb[0].mxu0
        %v1846 = vadd.f32 0.0, %v1845
        %v1847 = vpop.f32.mrb[0].mxu0
        %v1848 = vadd.f32 0.0, %v1847
        %v1849 = vpop.f32.mrb[0].mxu0
        %v1850 = vadd.f32 0.0, %v1849
        %v1851 = vpop.f32.mrb[0].mxu0
        %v1852 = vadd.f32 0.0, %v1851
        %1853 = vmatprep.mubr.bf16.mxu0 %v598
        %1854 = vmatmul.mubr.bf16.gmra.mrb[0].mxu0 %v597
        %v1855 = vpop.f32.mrb[0].mxu0
        %v1856 = vadd.f32 0.0, %v1855
        %v1857 = vpop.f32.mrb[0].mxu0
        %v1858 = vadd.f32 0.0, %v1857
        %v1859 = vpop.f32.mrb[0].mxu0
        %v1860 = vadd.f32 0.0, %v1859
        %v1861 = vpop.f32.mrb[0].mxu0
        %v1862 = vadd.f32 0.0, %v1861
        %1863 = vmatprep.mubr.bf16.mxu0 %v600
        %1864 = vmatmul.mubr.bf16.gmra.mrb[0].mxu0 %v599
        %v1865 = vpop.f32.mrb[0].mxu0
        %v1866 = vadd.f32 0.0, %v1865
        %v1867 = vpop.f32.mrb[0].mxu0
        %v1868 = vadd.f32 0.0, %v1867
        %v1869 = vpop.f32.mrb[0].mxu0
        %v1870 = vadd.f32 0.0, %v1869
        %v1871 = vpop.f32.mrb[0].mxu0
        %v1872 = vadd.f32 0.0, %v1871
        %1873 = vmatprep.mubr.bf16.mxu0 %v602
        %1874 = vmatmul.mubr.bf16.gmra.mrb[0].mxu0 %v601
        %v1875 = vpop.f32.mrb[0].mxu0
        %v1876 = vadd.f32 0.0, %v1875
        %v1877 = vpop.f32.mrb[0].mxu0
        %v1878 = vadd.f32 0.0, %v1877
        %v1879 = vpop.f32.mrb[0].mxu0
        %v1880 = vadd.f32 0.0, %v1879
        %v1881 = vpop.f32.mrb[0].mxu0
        %v1882 = vadd.f32 0.0, %v1881
        %1883 = vdwg.mxu0
        %1884 = vmatprep.subr.bf16.mxu0 %v1390
        %1885 = vmatpush1.bf16.msra.mxu0 %v1389
        %1886 = vmatprep.subr.bf16.mxu0 %v1402
        %1887 = vmatpush1.bf16.msra.mxu0 %v1401
        %1888 = vmatprep.subr.bf16.mxu0 %v1414
        %1889 = vmatpush1.bf16.msra.mxu0 %v1413
        %1890 = vmatprep.subr.bf16.mxu0 %v1426
        %1891 = vmatpush1.bf16.msra.mxu0 %v1425
        %1892 = vmatprep.subr.bf16.mxu0 %v1438
        %1893 = vmatpush1.bf16.msra.mxu0 %v1437
        %1894 = vmatprep.subr.bf16.mxu0 %v1450
        %1895 = vmatpush1.bf16.msra.mxu0 %v1449
        %1896 = vmatprep.subr.bf16.mxu0 %v1462
        %1897 = vmatpush1.bf16.msra.mxu0 %v1461
        %1898 = vmatprep.subr.bf16.mxu0 %v1474
        %1899 = vmatpush1.bf16.msra.mxu0 %v1473
        %1900 = vmatprep.subr.bf16.mxu0 %v1486
        %1901 = vmatpush1.bf16.msra.mxu0 %v1485
        %1902 = vmatprep.subr.bf16.mxu0 %v1498
        %1903 = vmatpush1.bf16.msra.mxu0 %v1497
        %1904 = vmatprep.subr.bf16.mxu0 %v1510
        %1905 = vmatpush1.bf16.msra.mxu0 %v1509
        %1906 = vmatprep.subr.bf16.mxu0 %v1522
        %1907 = vmatpush1.bf16.msra.mxu0 %v1521
        %1908 = vmatprep.subr.bf16.mxu0 %v1534
        %1909 = vmatpush1.bf16.msra.mxu0 %v1533
        %1910 = vmatprep.subr.bf16.mxu0 %v1546
        %1911 = vmatpush1.bf16.msra.mxu0 %v1545
        %1912 = vmatprep.subr.bf16.mxu0 %v1558
        %1913 = vmatpush1.bf16.msra.mxu0 %v1557
        %1914 = vmatprep.subr.bf16.mxu0 %v1570
        %1915 = vmatpush1.bf16.msra.mxu0 %v1569
        %1916 = vmatprep.mubr.bf16.mxu0 %v588
        %1917 = vmatmul.mubr.bf16.gmra.mrb[0].mxu0 %v587
        %v1918 = vpop.f32.mrb[0].mxu0
        %v1919 = vadd.f32 0.0, %v1918
        %v1920 = vpop.f32.mrb[0].mxu0
        %v1921 = vadd.f32 0.0, %v1920
        %v1922 = vpop.f32.mrb[0].mxu0
        %v1923 = vadd.f32 0.0, %v1922
        %v1924 = vpop.f32.mrb[0].mxu0
        %v1925 = vadd.f32 0.0, %v1924
        %1926 = vmatprep.mubr.bf16.mxu0 %v590
        %1927 = vmatmul.mubr.bf16.gmra.mrb[0].mxu0 %v589
        %v1928 = vpop.f32.mrb[0].mxu0
        %v1929 = vadd.f32 0.0, %v1928
        %v1930 = vpop.f32.mrb[0].mxu0
        %v1931 = vadd.f32 0.0, %v1930
        %v1932 = vpop.f32.mrb[0].mxu0
        %v1933 = vadd.f32 0.0, %v1932
        %v1934 = vpop.f32.mrb[0].mxu0
        %v1935 = vadd.f32 0.0, %v1934
        %1936 = vmatprep.mubr.bf16.mxu0 %v592
        %1937 = vmatmul.mubr.bf16.gmra.mrb[0].mxu0 %v591
        %v1938 = vpop.f32.mrb[0].mxu0
        %v1939 = vadd.f32 0.0, %v1938
        %v1940 = vpop.f32.mrb[0].mxu0
        %v1941 = vadd.f32 0.0, %v1940
        %v1942 = vpop.f32.mrb[0].mxu0
        %v1943 = vadd.f32 0.0, %v1942
        %v1944 = vpop.f32.mrb[0].mxu0
        %v1945 = vadd.f32 0.0, %v1944
        %1946 = vmatprep.mubr.bf16.mxu0 %v594
        %1947 = vmatmul.mubr.bf16.gmra.mrb[0].mxu0 %v593
        %v1948 = vpop.f32.mrb[0].mxu0
        %v1949 = vadd.f32 0.0, %v1948
        %v1950 = vpop.f32.mrb[0].mxu0
        %v1951 = vadd.f32 0.0, %v1950
        %v1952 = vpop.f32.mrb[0].mxu0
        %v1953 = vadd.f32 0.0, %v1952
        %v1954 = vpop.f32.mrb[0].mxu0
        %v1955 = vadd.f32 0.0, %v1954
        %1956 = vmatprep.mubr.bf16.mxu0 %v596
        %1957 = vmatmul.mubr.bf16.gmra.mrb[0].mxu0 %v595
        %v1958 = vpop.f32.mrb[0].mxu0
        %v1959 = vadd.f32 0.0, %v1958
        %v1960 = vpop.f32.mrb[0].mxu0
        %v1961 = vadd.f32 0.0, %v1960
        %v1962 = vpop.f32.mrb[0].mxu0
        %v1963 = vadd.f32 0.0, %v1962
        %v1964 = vpop.f32.mrb[0].mxu0
        %v1965 = vadd.f32 0.0, %v1964
        %1966 = vmatprep.mubr.bf16.mxu0 %v598
        %1967 = vmatmul.mubr.bf16.gmra.mrb[0].mxu0 %v597
        %v1968 = vpop.f32.mrb[0].mxu0
        %v1969 = vadd.f32 0.0, %v1968
        %v1970 = vpop.f32.mrb[0].mxu0
        %v1971 = vadd.f32 0.0, %v1970
        %v1972 = vpop.f32.mrb[0].mxu0
        %v1973 = vadd.f32 0.0, %v1972
        %v1974 = vpop.f32.mrb[0].mxu0
        %v1975 = vadd.f32 0.0, %v1974
        %1976 = vmatprep.mubr.bf16.mxu0 %v600
        %1977 = vmatmul.mubr.bf16.gmra.mrb[0].mxu0 %v599
        %v1978 = vpop.f32.mrb[0].mxu0
        %v1979 = vadd.f32 0.0, %v1978
        %v1980 = vpop.f32.mrb[0].mxu0
        %v1981 = vadd.f32 0.0, %v1980
        %v1982 = vpop.f32.mrb[0].mxu0
        %v1983 = vadd.f32 0.0, %v1982
        %v1984 = vpop.f32.mrb[0].mxu0
        %v1985 = vadd.f32 0.0, %v1984
        %1986 = vmatprep.mubr.bf16.mxu0 %v602
        %1987 = vmatmul.mubr.bf16.gmra.mrb[0].mxu0 %v601
        %v1988 = vpop.f32.mrb[0].mxu0
        %v1989 = vadd.f32 0.0, %v1988
        %v1990 = vpop.f32.mrb[0].mxu0
        %v1991 = vadd.f32 0.0, %v1990
        %v1992 = vpop.f32.mrb[0].mxu0
        %v1993 = vadd.f32 0.0, %v1992
        %v1994 = vpop.f32.mrb[0].mxu0
        %v1995 = vadd.f32 0.0, %v1994
        %1996 = vdwg.mxu0
        %1997 = vmatprep.subr.bf16.mxu0 %v1392
        %1998 = vmatpush1.bf16.msra.mxu0 %v1391
        %1999 = vmatprep.subr.bf16.mxu0 %v1404
        %2000 = vmatpush1.bf16.msra.mxu0 %v1403
        %2001 = vmatprep.subr.bf16.mxu0 %v1416
        %2002 = vmatpush1.bf16.msra.mxu0 %v1415
        %2003 = vmatprep.subr.bf16.mxu0 %v1428
        %2004 = vmatpush1.bf16.msra.mxu0 %v1427
        %2005 = vmatprep.subr.bf16.mxu0 %v1440
        %2006 = vmatpush1.bf16.msra.mxu0 %v1439
        %2007 = vmatprep.subr.bf16.mxu0 %v1452
        %2008 = vmatpush1.bf16.msra.mxu0 %v1451
        %2009 = vmatprep.subr.bf16.mxu0 %v1464
        %2010 = vmatpush1.bf16.msra.mxu0 %v1463
        %2011 = vmatprep.subr.bf16.mxu0 %v1476
        %2012 = vmatpush1.bf16.msra.mxu0 %v1475
        %2013 = vmatprep.subr.bf16.mxu0 %v1488
        %2014 = vmatpush1.bf16.msra.mxu0 %v1487
        %2015 = vmatprep.subr.bf16.mxu0 %v1500
        %2016 = vmatpush1.bf16.msra.mxu0 %v1499
        %2017 = vmatprep.subr.bf16.mxu0 %v1512
        %2018 = vmatpush1.bf16.msra.mxu0 %v1511
        %2019 = vmatprep.subr.bf16.mxu0 %v1524
        %2020 = vmatpush1.bf16.msra.mxu0 %v1523
        %2021 = vmatprep.subr.bf16.mxu0 %v1536
        %2022 = vmatpush1.bf16.msra.mxu0 %v1535
        %2023 = vmatprep.subr.bf16.mxu0 %v1548
        %2024 = vmatpush1.bf16.msra.mxu0 %v1547
        %2025 = vmatprep.subr.bf16.mxu0 %v1560
        %2026 = vmatpush1.bf16.msra.mxu0 %v1559
        %2027 = vmatprep.subr.bf16.mxu0 %v1572
        %2028 = vmatpush1.bf16.msra.mxu0 %v1571
        %2029 = vmatprep.mubr.bf16.mxu0 %v588
        %2030 = vmatmul.mubr.bf16.gmra.mrb[0].mxu0 %v587
        %v2031 = vpop.f32.mrb[0].mxu0
        %v2032 = vadd.f32 0.0, %v2031
        %v2033 = vpop.f32.mrb[0].mxu0
        %v2034 = vadd.f32 0.0, %v2033
        %v2035 = vpop.f32.mrb[0].mxu0
        %v2036 = vadd.f32 0.0, %v2035
        %v2037 = vpop.f32.mrb[0].mxu0
        %v2038 = vadd.f32 0.0, %v2037
        %2039 = vmatprep.mubr.bf16.mxu0 %v590
        %2040 = vmatmul.mubr.bf16.gmra.mrb[0].mxu0 %v589
        %v2041 = vpop.f32.mrb[0].mxu0
        %v2042 = vadd.f32 0.0, %v2041
        %v2043 = vpop.f32.mrb[0].mxu0
        %v2044 = vadd.f32 0.0, %v2043
        %v2045 = vpop.f32.mrb[0].mxu0
        %v2046 = vadd.f32 0.0, %v2045
        %v2047 = vpop.f32.mrb[0].mxu0
        %v2048 = vadd.f32 0.0, %v2047
        %2049 = vmatprep.mubr.bf16.mxu0 %v592
        %2050 = vmatmul.mubr.bf16.gmra.mrb[0].mxu0 %v591
        %v2051 = vpop.f32.mrb[0].mxu0
        %v2052 = vadd.f32 0.0, %v2051
        %v2053 = vpop.f32.mrb[0].mxu0
        %v2054 = vadd.f32 0.0, %v2053
        %v2055 = vpop.f32.mrb[0].mxu0
        %v2056 = vadd.f32 0.0, %v2055
        %v2057 = vpop.f32.mrb[0].mxu0
        %v2058 = vadd.f32 0.0, %v2057
        %2059 = vmatprep.mubr.bf16.mxu0 %v594
        %2060 = vmatmul.mubr.bf16.gmra.mrb[0].mxu0 %v593
        %v2061 = vpop.f32.mrb[0].mxu0
        %v2062 = vadd.f32 0.0, %v2061
        %v2063 = vpop.f32.mrb[0].mxu0
        %v2064 = vadd.f32 0.0, %v2063
        %v2065 = vpop.f32.mrb[0].mxu0
        %v2066 = vadd.f32 0.0, %v2065
        %v2067 = vpop.f32.mrb[0].mxu0
        %v2068 = vadd.f32 0.0, %v2067
        %2069 = vmatprep.mubr.bf16.mxu0 %v596
        %2070 = vmatmul.mubr.bf16.gmra.mrb[0].mxu0 %v595
        %v2071 = vpop.f32.mrb[0].mxu0
        %v2072 = vadd.f32 0.0, %v2071
        %v2073 = vpop.f32.mrb[0].mxu0
        %v2074 = vadd.f32 0.0, %v2073
        %v2075 = vpop.f32.mrb[0].mxu0
        %v2076 = vadd.f32 0.0, %v2075
        %v2077 = vpop.f32.mrb[0].mxu0
        %v2078 = vadd.f32 0.0, %v2077
        %2079 = vmatprep.mubr.bf16.mxu0 %v598
        %2080 = vmatmul.mubr.bf16.gmra.mrb[0].mxu0 %v597
        %v2081 = vpop.f32.mrb[0].mxu0
        %v2082 = vadd.f32 0.0, %v2081
        %v2083 = vpop.f32.mrb[0].mxu0
        %v2084 = vadd.f32 0.0, %v2083
        %v2085 = vpop.f32.mrb[0].mxu0
        %v2086 = vadd.f32 0.0, %v2085
        %v2087 = vpop.f32.mrb[0].mxu0
        %v2088 = vadd.f32 0.0, %v2087
        %2089 = vmatprep.mubr.bf16.mxu0 %v600
        %2090 = vmatmul.mubr.bf16.gmra.mrb[0].mxu0 %v599
        %v2091 = vpop.f32.mrb[0].mxu0
        %v2092 = vadd.f32 0.0, %v2091
        %v2093 = vpop.f32.mrb[0].mxu0
        %v2094 = vadd.f32 0.0, %v2093
        %v2095 = vpop.f32.mrb[0].mxu0
        %v2096 = vadd.f32 0.0, %v2095
        %v2097 = vpop.f32.mrb[0].mxu0
        %v2098 = vadd.f32 0.0, %v2097
        %2099 = vmatprep.mubr.bf16.mxu0 %v602
        %2100 = vmatmul.mubr.bf16.gmra.mrb[0].mxu0 %v601
        %v2101 = vpop.f32.mrb[0].mxu0
        %v2102 = vadd.f32 0.0, %v2101
        %v2103 = vpop.f32.mrb[0].mxu0
        %v2104 = vadd.f32 0.0, %v2103
        %v2105 = vpop.f32.mrb[0].mxu0
        %v2106 = vadd.f32 0.0, %v2105
        %v2107 = vpop.f32.mrb[0].mxu0
        %v2108 = vadd.f32 0.0, %v2107
        %2109 = vdwg.mxu0
        %2110 = vmatprep.subr.bf16.mxu0 %v1394
        %2111 = vmatpush1.bf16.msra.mxu0 %v1393
        %2112 = vmatprep.subr.bf16.mxu0 %v1406
        %2113 = vmatpush1.bf16.msra.mxu0 %v1405
        %2114 = vmatprep.subr.bf16.mxu0 %v1418
        %2115 = vmatpush1.bf16.msra.mxu0 %v1417
        %2116 = vmatprep.subr.bf16.mxu0 %v1430
        %2117 = vmatpush1.bf16.msra.mxu0 %v1429
        %2118 = vmatprep.subr.bf16.mxu0 %v1442
        %2119 = vmatpush1.bf16.msra.mxu0 %v1441
        %2120 = vmatprep.subr.bf16.mxu0 %v1454
        %2121 = vmatpush1.bf16.msra.mxu0 %v1453
        %2122 = vmatprep.subr.bf16.mxu0 %v1466
        %2123 = vmatpush1.bf16.msra.mxu0 %v1465
        %2124 = vmatprep.subr.bf16.mxu0 %v1478
        %2125 = vmatpush1.bf16.msra.mxu0 %v1477
        %2126 = vmatprep.subr.bf16.mxu0 %v1490
        %2127 = vmatpush1.bf16.msra.mxu0 %v1489
        %2128 = vmatprep.subr.bf16.mxu0 %v1502
        %2129 = vmatpush1.bf16.msra.mxu0 %v1501
        %2130 = vmatprep.subr.bf16.mxu0 %v1514
        %2131 = vmatpush1.bf16.msra.mxu0 %v1513
        %2132 = vmatprep.subr.bf16.mxu0 %v1526
        %2133 = vmatpush1.bf16.msra.mxu0 %v1525
        %2134 = vmatprep.subr.bf16.mxu0 %v1538
        %2135 = vmatpush1.bf16.msra.mxu0 %v1537
        %2136 = vmatprep.subr.bf16.mxu0 %v1550
        %2137 = vmatpush1.bf16.msra.mxu0 %v1549
        %2138 = vmatprep.subr.bf16.mxu0 %v1562
        %2139 = vmatpush1.bf16.msra.mxu0 %v1561
        %2140 = vmatprep.subr.bf16.mxu0 %v1574
        %2141 = vmatpush1.bf16.msra.mxu0 %v1573
        %2142 = vmatprep.mubr.bf16.mxu0 %v588
        %2143 = vmatmul.mubr.bf16.gmra.mrb[0].mxu0 %v587
        %v2144 = vpop.f32.mrb[0].mxu0
        %v2145 = vadd.f32 0.0, %v2144
        %v2146 = vpop.f32.mrb[0].mxu0
        %v2147 = vadd.f32 0.0, %v2146
        %v2148 = vpop.f32.mrb[0].mxu0
        %v2149 = vadd.f32 0.0, %v2148
        %v2150 = vpop.f32.mrb[0].mxu0
        %v2151 = vadd.f32 0.0, %v2150
        %2152 = vmatprep.mubr.bf16.mxu0 %v590
        %2153 = vmatmul.mubr.bf16.gmra.mrb[0].mxu0 %v589
        %v2154 = vpop.f32.mrb[0].mxu0
        %v2155 = vadd.f32 0.0, %v2154
        %v2156 = vpop.f32.mrb[0].mxu0
        %v2157 = vadd.f32 0.0, %v2156
        %v2158 = vpop.f32.mrb[0].mxu0
        %v2159 = vadd.f32 0.0, %v2158
        %v2160 = vpop.f32.mrb[0].mxu0
        %v2161 = vadd.f32 0.0, %v2160
        %2162 = vmatprep.mubr.bf16.mxu0 %v592
        %2163 = vmatmul.mubr.bf16.gmra.mrb[0].mxu0 %v591
        %v2164 = vpop.f32.mrb[0].mxu0
        %v2165 = vadd.f32 0.0, %v2164
        %v2166 = vpop.f32.mrb[0].mxu0
        %v2167 = vadd.f32 0.0, %v2166
        %v2168 = vpop.f32.mrb[0].mxu0
        %v2169 = vadd.f32 0.0, %v2168
        %v2170 = vpop.f32.mrb[0].mxu0
        %v2171 = vadd.f32 0.0, %v2170
        %2172 = vmatprep.mubr.bf16.mxu0 %v594
        %2173 = vmatmul.mubr.bf16.gmra.mrb[0].mxu0 %v593
        %v2174 = vpop.f32.mrb[0].mxu0
        %v2175 = vadd.f32 0.0, %v2174
        %v2176 = vpop.f32.mrb[0].mxu0
        %v2177 = vadd.f32 0.0, %v2176
        %v2178 = vpop.f32.mrb[0].mxu0
        %v2179 = vadd.f32 0.0, %v2178
        %v2180 = vpop.f32.mrb[0].mxu0
        %v2181 = vadd.f32 0.0, %v2180
        %2182 = vmatprep.mubr.bf16.mxu0 %v596
        %2183 = vmatmul.mubr.bf16.gmra.mrb[0].mxu0 %v595
        %v2184 = vpop.f32.mrb[0].mxu0
        %v2185 = vadd.f32 0.0, %v2184
        %v2186 = vpop.f32.mrb[0].mxu0
        %v2187 = vadd.f32 0.0, %v2186
        %v2188 = vpop.f32.mrb[0].mxu0
        %v2189 = vadd.f32 0.0, %v2188
        %v2190 = vpop.f32.mrb[0].mxu0
        %v2191 = vadd.f32 0.0, %v2190
        %2192 = vmatprep.mubr.bf16.mxu0 %v598
        %2193 = vmatmul.mubr.bf16.gmra.mrb[0].mxu0 %v597
        %v2194 = vpop.f32.mrb[0].mxu0
        %v2195 = vadd.f32 0.0, %v2194
        %v2196 = vpop.f32.mrb[0].mxu0
        %v2197 = vadd.f32 0.0, %v2196
        %v2198 = vpop.f32.mrb[0].mxu0
        %v2199 = vadd.f32 0.0, %v2198
        %v2200 = vpop.f32.mrb[0].mxu0
        %v2201 = vadd.f32 0.0, %v2200
        %2202 = vmatprep.mubr.bf16.mxu0 %v600
        %2203 = vmatmul.mubr.bf16.gmra.mrb[0].mxu0 %v599
        %v2204 = vpop.f32.mrb[0].mxu0
        %v2205 = vadd.f32 0.0, %v2204
        %v2206 = vpop.f32.mrb[0].mxu0
        %v2207 = vadd.f32 0.0, %v2206
        %v2208 = vpop.f32.mrb[0].mxu0
        %v2209 = vadd.f32 0.0, %v2208
        %v2210 = vpop.f32.mrb[0].mxu0
        %v2211 = vadd.f32 0.0, %v2210
        %2212 = vmatprep.mubr.bf16.mxu0 %v602
        %2213 = vmatmul.mubr.bf16.gmra.mrb[0].mxu0 %v601
        %v2214 = vpop.f32.mrb[0].mxu0
        %v2215 = vadd.f32 0.0, %v2214
        %v2216 = vpop.f32.mrb[0].mxu0
        %v2217 = vadd.f32 0.0, %v2216
        %v2218 = vpop.f32.mrb[0].mxu0
        %v2219 = vadd.f32 0.0, %v2218
        %v2220 = vpop.f32.mrb[0].mxu0
        %v2221 = vadd.f32 0.0, %v2220
        %2222 = vdwg.mxu0
        %2223 = vmatprep.subr.bf16.mxu0 %v1396
        %2224 = vmatpush1.bf16.msra.mxu0 %v1395
        %2225 = vmatprep.subr.bf16.mxu0 %v1408
        %2226 = vmatpush1.bf16.msra.mxu0 %v1407
        %2227 = vmatprep.subr.bf16.mxu0 %v1420
        %2228 = vmatpush1.bf16.msra.mxu0 %v1419
        %2229 = vmatprep.subr.bf16.mxu0 %v1432
        %2230 = vmatpush1.bf16.msra.mxu0 %v1431
        %2231 = vmatprep.subr.bf16.mxu0 %v1444
        %2232 = vmatpush1.bf16.msra.mxu0 %v1443
        %2233 = vmatprep.subr.bf16.mxu0 %v1456
        %2234 = vmatpush1.bf16.msra.mxu0 %v1455
        %2235 = vmatprep.subr.bf16.mxu0 %v1468
        %2236 = vmatpush1.bf16.msra.mxu0 %v1467
        %2237 = vmatprep.subr.bf16.mxu0 %v1480
        %2238 = vmatpush1.bf16.msra.mxu0 %v1479
        %2239 = vmatprep.subr.bf16.mxu0 %v1492
        %2240 = vmatpush1.bf16.msra.mxu0 %v1491
        %2241 = vmatprep.subr.bf16.mxu0 %v1504
        %2242 = vmatpush1.bf16.msra.mxu0 %v1503
        %2243 = vmatprep.subr.bf16.mxu0 %v1516
        %2244 = vmatpush1.bf16.msra.mxu0 %v1515
        %2245 = vmatprep.subr.bf16.mxu0 %v1528
        %2246 = vmatpush1.bf16.msra.mxu0 %v1527
        %2247 = vmatprep.subr.bf16.mxu0 %v1540
        %2248 = vmatpush1.bf16.msra.mxu0 %v1539
        %2249 = vmatprep.subr.bf16.mxu0 %v1552
        %2250 = vmatpush1.bf16.msra.mxu0 %v1551
        %2251 = vmatprep.subr.bf16.mxu0 %v1564
        %2252 = vmatpush1.bf16.msra.mxu0 %v1563
        %2253 = vmatprep.subr.bf16.mxu0 %v1576
        %2254 = vmatpush1.bf16.msra.mxu0 %v1575
        %2255 = vmatprep.mubr.bf16.mxu0 %v588
        %2256 = vmatmul.mubr.bf16.gmra.mrb[0].mxu0 %v587
        %v2257 = vpop.f32.mrb[0].mxu0
        %v2258 = vadd.f32 0.0, %v2257
        %v2259 = vpop.f32.mrb[0].mxu0
        %v2260 = vadd.f32 0.0, %v2259
        %v2261 = vpop.f32.mrb[0].mxu0
        %v2262 = vadd.f32 0.0, %v2261
        %v2263 = vpop.f32.mrb[0].mxu0
        %v2264 = vadd.f32 0.0, %v2263
        %2265 = vmatprep.mubr.bf16.mxu0 %v590
        %2266 = vmatmul.mubr.bf16.gmra.mrb[0].mxu0 %v589
        %v2267 = vpop.f32.mrb[0].mxu0
        %v2268 = vadd.f32 0.0, %v2267
        %v2269 = vpop.f32.mrb[0].mxu0
        %v2270 = vadd.f32 0.0, %v2269
        %v2271 = vpop.f32.mrb[0].mxu0
        %v2272 = vadd.f32 0.0, %v2271
        %v2273 = vpop.f32.mrb[0].mxu0
        %v2274 = vadd.f32 0.0, %v2273
        %2275 = vmatprep.mubr.bf16.mxu0 %v592
        %2276 = vmatmul.mubr.bf16.gmra.mrb[0].mxu0 %v591
        %v2277 = vpop.f32.mrb[0].mxu0
        %v2278 = vadd.f32 0.0, %v2277
        %v2279 = vpop.f32.mrb[0].mxu0
        %v2280 = vadd.f32 0.0, %v2279
        %v2281 = vpop.f32.mrb[0].mxu0
        %v2282 = vadd.f32 0.0, %v2281
        %v2283 = vpop.f32.mrb[0].mxu0
        %v2284 = vadd.f32 0.0, %v2283
        %2285 = vmatprep.mubr.bf16.mxu0 %v594
        %2286 = vmatmul.mubr.bf16.gmra.mrb[0].mxu0 %v593
        %v2287 = vpop.f32.mrb[0].mxu0
        %v2288 = vadd.f32 0.0, %v2287
        %v2289 = vpop.f32.mrb[0].mxu0
        %v2290 = vadd.f32 0.0, %v2289
        %v2291 = vpop.f32.mrb[0].mxu0
        %v2292 = vadd.f32 0.0, %v2291
        %v2293 = vpop.f32.mrb[0].mxu0
        %v2294 = vadd.f32 0.0, %v2293
        %2295 = vmatprep.mubr.bf16.mxu0 %v596
        %2296 = vmatmul.mubr.bf16.gmra.mrb[0].mxu0 %v595
        %v2297 = vpop.f32.mrb[0].mxu0
        %v2298 = vadd.f32 0.0, %v2297
        %v2299 = vpop.f32.mrb[0].mxu0
        %v2300 = vadd.f32 0.0, %v2299
        %v2301 = vpop.f32.mrb[0].mxu0
        %v2302 = vadd.f32 0.0, %v2301
        %v2303 = vpop.f32.mrb[0].mxu0
        %v2304 = vadd.f32 0.0, %v2303
        %2305 = vmatprep.mubr.bf16.mxu0 %v598
        %2306 = vmatmul.mubr.bf16.gmra.mrb[0].mxu0 %v597
        %v2307 = vpop.f32.mrb[0].mxu0
        %v2308 = vadd.f32 0.0, %v2307
        %v2309 = vpop.f32.mrb[0].mxu0
        %v2310 = vadd.f32 0.0, %v2309
        %v2311 = vpop.f32.mrb[0].mxu0
        %v2312 = vadd.f32 0.0, %v2311
        %v2313 = vpop.f32.mrb[0].mxu0
        %v2314 = vadd.f32 0.0, %v2313
        %2315 = vmatprep.mubr.bf16.mxu0 %v600
        %2316 = vmatmul.mubr.bf16.gmra.mrb[0].mxu0 %v599
        %v2317 = vpop.f32.mrb[0].mxu0
        %v2318 = vadd.f32 0.0, %v2317
        %v2319 = vpop.f32.mrb[0].mxu0
        %v2320 = vadd.f32 0.0, %v2319
        %v2321 = vpop.f32.mrb[0].mxu0
        %v2322 = vadd.f32 0.0, %v2321
        %v2323 = vpop.f32.mrb[0].mxu0
        %v2324 = vadd.f32 0.0, %v2323
        %2325 = vmatprep.mubr.bf16.mxu0 %v602
        %2326 = vmatmul.mubr.bf16.gmra.mrb[0].mxu0 %v601
        %v2327 = vpop.f32.mrb[0].mxu0
        %v2328 = vadd.f32 0.0, %v2327
        %v2329 = vpop.f32.mrb[0].mxu0
        %v2330 = vadd.f32 0.0, %v2329
        %v2331 = vpop.f32.mrb[0].mxu0
        %v2332 = vadd.f32 0.0, %v2331
        %v2333 = vpop.f32.mrb[0].mxu0
        %v2334 = vadd.f32 0.0, %v2333
        %2335 = vdwg.mxu0
        %2336 = vmatprep.subr.bf16.mxu0 %v1398
        %2337 = vmatpush1.bf16.msra.mxu0 %v1397
        %2338 = vmatprep.subr.bf16.mxu0 %v1410
        %2339 = vmatpush1.bf16.msra.mxu0 %v1409
        %2340 = vmatprep.subr.bf16.mxu0 %v1422
        %2341 = vmatpush1.bf16.msra.mxu0 %v1421
        %2342 = vmatprep.subr.bf16.mxu0 %v1434
        %2343 = vmatpush1.bf16.msra.mxu0 %v1433
        %2344 = vmatprep.subr.bf16.mxu0 %v1446
        %2345 = vmatpush1.bf16.msra.mxu0 %v1445
        %2346 = vmatprep.subr.bf16.mxu0 %v1458
        %2347 = vmatpush1.bf16.msra.mxu0 %v1457
        %2348 = vmatprep.subr.bf16.mxu0 %v1470
        %2349 = vmatpush1.bf16.msra.mxu0 %v1469
        %2350 = vmatprep.subr.bf16.mxu0 %v1482
        %2351 = vmatpush1.bf16.msra.mxu0 %v1481
        %2352 = vmatprep.subr.bf16.mxu0 %v1494
        %2353 = vmatpush1.bf16.msra.mxu0 %v1493
        %2354 = vmatprep.subr.bf16.mxu0 %v1506
        %2355 = vmatpush1.bf16.msra.mxu0 %v1505
        %2356 = vmatprep.subr.bf16.mxu0 %v1518
        %2357 = vmatpush1.bf16.msra.mxu0 %v1517
        %2358 = vmatprep.subr.bf16.mxu0 %v1530
        %2359 = vmatpush1.bf16.msra.mxu0 %v1529
        %2360 = vmatprep.subr.bf16.mxu0 %v1542
        %2361 = vmatpush1.bf16.msra.mxu0 %v1541
        %2362 = vmatprep.subr.bf16.mxu0 %v1554
        %2363 = vmatpush1.bf16.msra.mxu0 %v1553
        %2364 = vmatprep.subr.bf16.mxu0 %v1566
        %2365 = vmatpush1.bf16.msra.mxu0 %v1565
        %2366 = vmatprep.subr.bf16.mxu0 %v1578
        %2367 = vmatpush1.bf16.msra.mxu0 %v1577
        %2368 = vmatprep.mubr.bf16.mxu0 %v588
        %2369 = vmatmul.mubr.bf16.gmra.mrb[0].mxu0 %v587
        %v2370 = vpop.f32.mrb[0].mxu0
        %v2371 = vadd.f32 0.0, %v2370
        %v2372 = vpop.f32.mrb[0].mxu0
        %v2373 = vadd.f32 0.0, %v2372
        %v2374 = vpop.f32.mrb[0].mxu0
        %v2375 = vadd.f32 0.0, %v2374
        %v2376 = vpop.f32.mrb[0].mxu0
        %v2377 = vadd.f32 0.0, %v2376
        %2378 = vmatprep.mubr.bf16.mxu0 %v590
        %2379 = vmatmul.mubr.bf16.gmra.mrb[0].mxu0 %v589
        %v2380 = vpop.f32.mrb[0].mxu0
        %v2381 = vadd.f32 0.0, %v2380
        %v2382 = vpop.f32.mrb[0].mxu0
        %v2383 = vadd.f32 0.0, %v2382
        %v2384 = vpop.f32.mrb[0].mxu0
        %v2385 = vadd.f32 0.0, %v2384
        %v2386 = vpop.f32.mrb[0].mxu0
        %v2387 = vadd.f32 0.0, %v2386
        %2388 = vmatprep.mubr.bf16.mxu0 %v592
        %2389 = vmatmul.mubr.bf16.gmra.mrb[0].mxu0 %v591
        %v2390 = vpop.f32.mrb[0].mxu0
        %v2391 = vadd.f32 0.0, %v2390
        %v2392 = vpop.f32.mrb[0].mxu0
        %v2393 = vadd.f32 0.0, %v2392
        %v2394 = vpop.f32.mrb[0].mxu0
        %v2395 = vadd.f32 0.0, %v2394
        %v2396 = vpop.f32.mrb[0].mxu0
        %v2397 = vadd.f32 0.0, %v2396
        %2398 = vmatprep.mubr.bf16.mxu0 %v594
        %2399 = vmatmul.mubr.bf16.gmra.mrb[0].mxu0 %v593
        %v2400 = vpop.f32.mrb[0].mxu0
        %v2401 = vadd.f32 0.0, %v2400
        %v2402 = vpop.f32.mrb[0].mxu0
        %v2403 = vadd.f32 0.0, %v2402
        %v2404 = vpop.f32.mrb[0].mxu0
        %v2405 = vadd.f32 0.0, %v2404
        %v2406 = vpop.f32.mrb[0].mxu0
        %v2407 = vadd.f32 0.0, %v2406
        %2408 = vmatprep.mubr.bf16.mxu0 %v596
        %2409 = vmatmul.mubr.bf16.gmra.mrb[0].mxu0 %v595
        %v2410 = vpop.f32.mrb[0].mxu0
        %v2411 = vadd.f32 0.0, %v2410
        %v2412 = vpop.f32.mrb[0].mxu0
        %v2413 = vadd.f32 0.0, %v2412
        %v2414 = vpop.f32.mrb[0].mxu0
        %v2415 = vadd.f32 0.0, %v2414
        %v2416 = vpop.f32.mrb[0].mxu0
        %v2417 = vadd.f32 0.0, %v2416
        %2418 = vmatprep.mubr.bf16.mxu0 %v598
        %2419 = vmatmul.mubr.bf16.gmra.mrb[0].mxu0 %v597
        %v2420 = vpop.f32.mrb[0].mxu0
        %v2421 = vadd.f32 0.0, %v2420
        %v2422 = vpop.f32.mrb[0].mxu0
        %v2423 = vadd.f32 0.0, %v2422
        %v2424 = vpop.f32.mrb[0].mxu0
        %v2425 = vadd.f32 0.0, %v2424
        %v2426 = vpop.f32.mrb[0].mxu0
        %v2427 = vadd.f32 0.0, %v2426
        %2428 = vmatprep.mubr.bf16.mxu0 %v600
        %2429 = vmatmul.mubr.bf16.gmra.mrb[0].mxu0 %v599
        %v2430 = vpop.f32.mrb[0].mxu0
        %v2431 = vadd.f32 0.0, %v2430
        %v2432 = vpop.f32.mrb[0].mxu0
        %v2433 = vadd.f32 0.0, %v2432
        %v2434 = vpop.f32.mrb[0].mxu0
        %v2435 = vadd.f32 0.0, %v2434
        %v2436 = vpop.f32.mrb[0].mxu0
        %v2437 = vadd.f32 0.0, %v2436
        %2438 = vmatprep.mubr.bf16.mxu0 %v602
        %2439 = vmatmul.mubr.bf16.gmra.mrb[0].mxu0 %v601
        %v2440 = vpop.f32.mrb[0].mxu0
        %v2441 = vadd.f32 0.0, %v2440
        %v2442 = vpop.f32.mrb[0].mxu0
        %v2443 = vadd.f32 0.0, %v2442
        %v2444 = vpop.f32.mrb[0].mxu0
        %v2445 = vadd.f32 0.0, %v2444
        %v2446 = vpop.f32.mrb[0].mxu0
        %v2447 = vadd.f32 0.0, %v2446
        %2448 = vdwg.mxu0
        %v2449 = vmax.f32 %v1806, %v1921
        %v2450 = vmax.f32 %v1808, %v2032
        %v2451 = vmax.f32 %v1919, %v2034
        %v2452 = vmax.f32 %v1810, %v1925
        %v2453 = vmax.f32 %v1812, %v2036
        %v2454 = vmax.f32 %v1923, %v2038
        %v2455 = vmax.f32 %v1816, %v1931
        %v2456 = vmax.f32 %v1818, %v2042
        %v2457 = vmax.f32 %v1929, %v2044
        %v2458 = vmax.f32 %v1820, %v1935
        %v2459 = vmax.f32 %v1822, %v2046
        %v2460 = vmax.f32 %v1933, %v2048
        %v2461 = vmax.f32 %v1826, %v1941
        %v2462 = vmax.f32 %v1828, %v2052
        %v2463 = vmax.f32 %v1939, %v2054
        %v2464 = vmax.f32 %v1830, %v1945
        %v2465 = vmax.f32 %v1832, %v2056
        %v2466 = vmax.f32 %v1943, %v2058
        %v2467 = vmax.f32 %v1836, %v1951
        %v2468 = vmax.f32 %v1838, %v2062
        %v2469 = vmax.f32 %v1949, %v2064
        %v2470 = vmax.f32 %v1840, %v1955
        %v2471 = vmax.f32 %v1842, %v2066
        %v2472 = vmax.f32 %v1953, %v2068
        %v2473 = vmax.f32 %v1846, %v1961
        %v2474 = vmax.f32 %v1848, %v2072
        %v2475 = vmax.f32 %v1959, %v2074
        %v2476 = vmax.f32 %v1850, %v1965
        %v2477 = vmax.f32 %v1852, %v2076
        %v2478 = vmax.f32 %v1963, %v2078
        %v2479 = vmax.f32 %v1856, %v1971
        %v2480 = vmax.f32 %v1858, %v2082
        %v2481 = vmax.f32 %v1969, %v2084
        %v2482 = vmax.f32 %v1860, %v1975
        %v2483 = vmax.f32 %v1862, %v2086
        %v2484 = vmax.f32 %v1973, %v2088
        %v2485 = vmax.f32 %v1866, %v1981
        %v2486 = vmax.f32 %v1868, %v2092
        %v2487 = vmax.f32 %v1979, %v2094
        %v2488 = vmax.f32 %v1870, %v1985
        %v2489 = vmax.f32 %v1872, %v2096
        %v2490 = vmax.f32 %v1983, %v2098
        %v2491 = vmax.f32 %v1876, %v1991
        %v2492 = vmax.f32 %v1878, %v2102
        %v2493 = vmax.f32 %v1989, %v2104
        %v2494 = vmax.f32 %v1880, %v1995
        %v2495 = vmax.f32 %v1882, %v2106
        %v2496 = vmax.f32 %v1993, %v2108
        %v2497 = vmax.f32 %v2145, %v2260
        %v2498 = vmax.f32 %v2147, %v2371
        %v2499 = vmax.f32 %v2258, %v2373
        %v2500 = vmax.f32 %v2149, %v2264
        %v2501 = vmax.f32 %v2151, %v2375
        %v2502 = vmax.f32 %v2262, %v2377
        %v2503 = vmax.f32 %v2155, %v2270
        %v2504 = vmax.f32 %v2157, %v2381
        %v2505 = vmax.f32 %v2268, %v2383
        %v2506 = vmax.f32 %v2159, %v2274
        %v2507 = vmax.f32 %v2161, %v2385
        %v2508 = vmax.f32 %v2272, %v2387
        %v2509 = vmax.f32 %v2165, %v2280
        %v2510 = vmax.f32 %v2167, %v2391
        %v2511 = vmax.f32 %v2278, %v2393
        %v2512 = vmax.f32 %v2169, %v2284
        %v2513 = vmax.f32 %v2171, %v2395
        %v2514 = vmax.f32 %v2282, %v2397
        %v2515 = vmax.f32 %v2175, %v2290
        %v2516 = vmax.f32 %v2177, %v2401
        %v2517 = vmax.f32 %v2288, %v2403
        %v2518 = vmax.f32 %v2179, %v2294
        %v2519 = vmax.f32 %v2181, %v2405
        %v2520 = vmax.f32 %v2292, %v2407
        %v2521 = vmax.f32 %v2185, %v2300
        %v2522 = vmax.f32 %v2187, %v2411
        %v2523 = vmax.f32 %v2298, %v2413
        %v2524 = vmax.f32 %v2189, %v2304
        %v2525 = vmax.f32 %v2191, %v2415
        %v2526 = vmax.f32 %v2302, %v2417
        %v2527 = vmax.f32 %v2195, %v2310
        %v2528 = vmax.f32 %v2197, %v2421
        %v2529 = vmax.f32 %v2308, %v2423
        %v2530 = vmax.f32 %v2199, %v2314
        %v2531 = vmax.f32 %v2201, %v2425
        %v2532 = vmax.f32 %v2312, %v2427
        %v2533 = vmax.f32 %v2205, %v2320
        %v2534 = vmax.f32 %v2207, %v2431
        %v2535 = vmax.f32 %v2318, %v2433
        %v2536 = vmax.f32 %v2209, %v2324
        %v2537 = vmax.f32 %v2211, %v2435
        %v2538 = vmax.f32 %v2322, %v2437
        %v2539 = vmax.f32 %v2215, %v2330
        %v2540 = vmax.f32 %v2217, %v2441
        %v2541 = vmax.f32 %v2328, %v2443
        %v2542 = vmax.f32 %v2219, %v2334
        %v2543 = vmax.f32 %v2221, %v2445
        %v2544 = vmax.f32 %v2332, %v2447
        %v2545 = vmax.f32 %v2449, %v2497
        %v2546 = vmax.f32 %v2450, %v2498
        %v2547 = vmax.f32 %v2451, %v2499
        %v2548 = vmax.f32 %v2452, %v2500
        %v2549 = vmax.f32 %v2453, %v2501
        %v2550 = vmax.f32 %v2454, %v2502
        %v2551 = vmax.f32 %v2455, %v2503
        %v2552 = vmax.f32 %v2456, %v2504
        %v2553 = vmax.f32 %v2457, %v2505
        %v2554 = vmax.f32 %v2458, %v2506
        %v2555 = vmax.f32 %v2459, %v2507
        %v2556 = vmax.f32 %v2460, %v2508
        %v2557 = vmax.f32 %v2461, %v2509
        %v2558 = vmax.f32 %v2462, %v2510
        %v2559 = vmax.f32 %v2463, %v2511
        %v2560 = vmax.f32 %v2464, %v2512
        %v2561 = vmax.f32 %v2465, %v2513
        %v2562 = vmax.f32 %v2466, %v2514
        %v2563 = vmax.f32 %v2467, %v2515
        %v2564 = vmax.f32 %v2468, %v2516
        %v2565 = vmax.f32 %v2469, %v2517
        %v2566 = vmax.f32 %v2470, %v2518
        %v2567 = vmax.f32 %v2471, %v2519
        %v2568 = vmax.f32 %v2472, %v2520
        %v2569 = vmax.f32 %v2473, %v2521
        %v2570 = vmax.f32 %v2474, %v2522
        %v2571 = vmax.f32 %v2475, %v2523
        %v2572 = vmax.f32 %v2476, %v2524
        %v2573 = vmax.f32 %v2477, %v2525
        %v2574 = vmax.f32 %v2478, %v2526
        %v2575 = vmax.f32 %v2479, %v2527
        %v2576 = vmax.f32 %v2480, %v2528
        %v2577 = vmax.f32 %v2481, %v2529
        %v2578 = vmax.f32 %v2482, %v2530
        %v2579 = vmax.f32 %v2483, %v2531
        %v2580 = vmax.f32 %v2484, %v2532
        %v2581 = vmax.f32 %v2485, %v2533
        %v2582 = vmax.f32 %v2486, %v2534
        %v2583 = vmax.f32 %v2487, %v2535
        %v2584 = vmax.f32 %v2488, %v2536
        %v2585 = vmax.f32 %v2489, %v2537
        %v2586 = vmax.f32 %v2490, %v2538
        %v2587 = vmax.f32 %v2491, %v2539
        %v2588 = vmax.f32 %v2492, %v2540
        %v2589 = vmax.f32 %v2493, %v2541
        %v2590 = vmax.f32 %v2494, %v2542
        %v2591 = vmax.f32 %v2495, %v2543
        %v2592 = vmax.f32 %v2496, %v2544
        %v2593 = vld [vmem:[%s3] sm:$0x7]
        %v2595 = vlaneseq
        %v2596 = vshrl.u32 %v2595, 7
        %v2597 = vsub.s32 0, %v2596
        %v2598 = vrot.slane %v2593, %v2597
        %v2599 = vlaneseq
        %v2600 = vshrl.u32 %v2599, 7
        %v2601 = vsub.s32 1, %v2600
        %v2602 = vrot.slane %v2593, %v2601
        %v2603 = vlaneseq
        %v2604 = vshrl.u32 %v2603, 7
        %v2605 = vsub.s32 2, %v2604
        %v2606 = vrot.slane %v2593, %v2605
        %v2610 = vadd.f32 %v2545, %v2598
        %v2611 = vadd.f32 %v2546, %v2602
        %v2612 = vadd.f32 %v2547, %v2606
        %v2613 = vadd.f32 %v2548, %v2598
        %v2614 = vadd.f32 %v2549, %v2602
        %v2615 = vadd.f32 %v2550, %v2606
        %v2616 = vadd.f32 %v2551, %v2598
        %v2617 = vadd.f32 %v2552, %v2602
        %v2618 = vadd.f32 %v2553, %v2606
        %v2619 = vadd.f32 %v2554, %v2598
        %v2620 = vadd.f32 %v2555, %v2602
        %v2621 = vadd.f32 %v2556, %v2606
        %v2622 = vadd.f32 %v2557, %v2598
        %v2623 = vadd.f32 %v2558, %v2602
        %v2624 = vadd.f32 %v2559, %v2606
        %v2625 = vadd.f32 %v2560, %v2598
        %v2626 = vadd.f32 %v2561, %v2602
        %v2627 = vadd.f32 %v2562, %v2606
        %v2628 = vadd.f32 %v2563, %v2598
        %v2629 = vadd.f32 %v2564, %v2602
        %v2630 = vadd.f32 %v2565, %v2606
        %v2631 = vadd.f32 %v2566, %v2598
        %v2632 = vadd.f32 %v2567, %v2602
        %v2633 = vadd.f32 %v2568, %v2606
        %v2634 = vadd.f32 %v2569, %v2598
        %v2635 = vadd.f32 %v2570, %v2602
        %v2636 = vadd.f32 %v2571, %v2606
        %v2637 = vadd.f32 %v2572, %v2598
        %v2638 = vadd.f32 %v2573, %v2602
        %v2639 = vadd.f32 %v2574, %v2606
        %v2640 = vadd.f32 %v2575, %v2598
        %v2641 = vadd.f32 %v2576, %v2602
        %v2642 = vadd.f32 %v2577, %v2606
        %v2643 = vadd.f32 %v2578, %v2598
        %v2644 = vadd.f32 %v2579, %v2602
        %v2645 = vadd.f32 %v2580, %v2606
        %v2646 = vadd.f32 %v2581, %v2598
        %v2647 = vadd.f32 %v2582, %v2602
        %v2648 = vadd.f32 %v2583, %v2606
        %v2649 = vadd.f32 %v2584, %v2598
        %v2650 = vadd.f32 %v2585, %v2602
        %v2651 = vadd.f32 %v2586, %v2606
        %v2652 = vadd.f32 %v2587, %v2598
        %v2653 = vadd.f32 %v2588, %v2602
        %v2654 = vadd.f32 %v2589, %v2606
        %v2655 = vadd.f32 %v2590, %v2598
        %v2656 = vadd.f32 %v2591, %v2602
        %v2657 = vadd.f32 %v2592, %v2606
        %v2658 = vmax.f32 %v2610, 0.0
        %v2659 = vmax.f32 %v2611, 0.0
        %v2660 = vmax.f32 %v2612, 0.0
        %v2661 = vmax.f32 %v2613, 0.0
        %v2662 = vmax.f32 %v2614, 0.0
        %v2663 = vmax.f32 %v2615, 0.0
        %v2664 = vmax.f32 %v2616, 0.0
        %v2665 = vmax.f32 %v2617, 0.0
        %v2666 = vmax.f32 %v2618, 0.0
        %v2667 = vmax.f32 %v2619, 0.0
        %v2668 = vmax.f32 %v2620, 0.0
        %v2669 = vmax.f32 %v2621, 0.0
        %v2670 = vmax.f32 %v2622, 0.0
        %v2671 = vmax.f32 %v2623, 0.0
        %v2672 = vmax.f32 %v2624, 0.0
        %v2673 = vmax.f32 %v2625, 0.0
        %v2674 = vmax.f32 %v2626, 0.0
        %v2675 = vmax.f32 %v2627, 0.0
        %v2676 = vmax.f32 %v2628, 0.0
        %v2677 = vmax.f32 %v2629, 0.0
        %v2678 = vmax.f32 %v2630, 0.0
        %v2679 = vmax.f32 %v2631, 0.0
        %v2680 = vmax.f32 %v2632, 0.0
        %v2681 = vmax.f32 %v2633, 0.0
        %v2682 = vmax.f32 %v2634, 0.0
        %v2683 = vmax.f32 %v2635, 0.0
        %v2684 = vmax.f32 %v2636, 0.0
        %v2685 = vmax.f32 %v2637, 0.0
        %v2686 = vmax.f32 %v2638, 0.0
        %v2687 = vmax.f32 %v2639, 0.0
        %v2688 = vmax.f32 %v2640, 0.0
        %v2689 = vmax.f32 %v2641, 0.0
        %v2690 = vmax.f32 %v2642, 0.0
        %v2691 = vmax.f32 %v2643, 0.0
        %v2692 = vmax.f32 %v2644, 0.0
        %v2693 = vmax.f32 %v2645, 0.0
        %v2694 = vmax.f32 %v2646, 0.0
        %v2695 = vmax.f32 %v2647, 0.0
        %v2696 = vmax.f32 %v2648, 0.0
        %v2697 = vmax.f32 %v2649, 0.0
        %v2698 = vmax.f32 %v2650, 0.0
        %v2699 = vmax.f32 %v2651, 0.0
        %v2700 = vmax.f32 %v2652, 0.0
        %v2701 = vmax.f32 %v2653, 0.0
        %v2702 = vmax.f32 %v2654, 0.0
        %v2703 = vmax.f32 %v2655, 0.0
        %v2704 = vmax.f32 %v2656, 0.0
        %v2705 = vmax.f32 %v2657, 0.0
        %v2706 = vld [vmem:[#allocation8] sm:$0xff]
        %v2707 = vld [vmem:[#allocation8 + $0x8] sm:$0xff]
        %v2708 = vld [vmem:[#allocation8 + $0x10] sm:$0xff]
        %v2709 = vld [vmem:[#allocation8 + $0x18] sm:$0xff]
        %v2710 = vld [vmem:[#allocation8 + $0x20] sm:$0xff]
        %v2711 = vld [vmem:[#allocation8 + $0x28] sm:$0xff]
        %v2712 = vld [vmem:[#allocation8 + $0x30] sm:$0xff]
        %v2713 = vld [vmem:[#allocation8 + $0x38] sm:$0xff]
        %v2714 = vld [vmem:[#allocation8 + $0x40] sm:$0xff]
        %v2715 = vld [vmem:[#allocation8 + $0x48] sm:$0xff]
        %v2716 = vld [vmem:[#allocation8 + $0x50] sm:$0xff]
        %v2717 = vld [vmem:[#allocation8 + $0x58] sm:$0xff]
        %v2718 = vld [vmem:[#allocation8 + $0x60] sm:$0xff]
        %v2719 = vld [vmem:[#allocation8 + $0x68] sm:$0xff]
        %v2720 = vld [vmem:[#allocation8 + $0x70] sm:$0xff]
        %v2721 = vld [vmem:[#allocation8 + $0x78] sm:$0xff]
        %v2722 = vld [vmem:[#allocation8 + $0x80] sm:$0xff]
        %v2723 = vld [vmem:[#allocation8 + $0x88] sm:$0xff]
        %v2724 = vld [vmem:[#allocation8 + $0x90] sm:$0xff]
        %v2725 = vld [vmem:[#allocation8 + $0x98] sm:$0xff]
        %v2726 = vld [vmem:[#allocation8 + $0xa0] sm:$0xff]
        %v2727 = vld [vmem:[#allocation8 + $0xa8] sm:$0xff]
        %v2728 = vld [vmem:[#allocation8 + $0xb0] sm:$0xff]
        %v2729 = vld [vmem:[#allocation8 + $0xb8] sm:$0xff]
        %v2730 = vld [vmem:[#allocation8 + $0xc0] sm:$0xff]
        %v2731 = vld [vmem:[#allocation8 + $0xc8] sm:$0xff]
        %v2732 = vld [vmem:[#allocation8 + $0xd0] sm:$0xff]
        %v2733 = vld [vmem:[#allocation8 + $0xd8] sm:$0xff]
        %v2734 = vld [vmem:[#allocation8 + $0xe0] sm:$0xff]
        %v2735 = vld [vmem:[#allocation8 + $0xe8] sm:$0xff]
        %v2736 = vld [vmem:[#allocation8 + $0xf0] sm:$0xff]
        %v2737 = vld [vmem:[#allocation8 + $0xf8] sm:$0xff]
        %v2738 = vld [vmem:[#allocation8 + $0x100] sm:$0xff]
        %v2739 = vld [vmem:[#allocation8 + $0x108] sm:$0xff]
        %v2740 = vld [vmem:[#allocation8 + $0x110] sm:$0xff]
        %v2741 = vld [vmem:[#allocation8 + $0x118] sm:$0xff]
        %v2742 = vld [vmem:[#allocation8 + $0x120] sm:$0xff]
        %v2743 = vld [vmem:[#allocation8 + $0x128] sm:$0xff]
        %v2744 = vld [vmem:[#allocation8 + $0x130] sm:$0xff]
        %v2745 = vld [vmem:[#allocation8 + $0x138] sm:$0xff]
        %v2746 = vld [vmem:[#allocation8 + $0x140] sm:$0xff]
        %v2747 = vld [vmem:[#allocation8 + $0x148] sm:$0xff]
        %v2748 = vld [vmem:[#allocation8 + $0x150] sm:$0xff]
        %v2749 = vld [vmem:[#allocation8 + $0x158] sm:$0xff]
        %v2750 = vld [vmem:[#allocation8 + $0x160] sm:$0xff]
        %v2751 = vld [vmem:[#allocation8 + $0x168] sm:$0xff]
        %v2752 = vld [vmem:[#allocation8 + $0x170] sm:$0xff]
        %v2753 = vld [vmem:[#allocation8 + $0x178] sm:$0xff]
        %v2754 = vld [vmem:[#allocation8 + $0x180] sm:$0xff]
        %v2755 = vld [vmem:[#allocation8 + $0x188] sm:$0xff]
        %v2756 = vld [vmem:[#allocation8 + $0x190] sm:$0xff]
        %v2757 = vld [vmem:[#allocation8 + $0x198] sm:$0xff]
        %v2758 = vld [vmem:[#allocation8 + $0x1a0] sm:$0xff]
        %v2759 = vld [vmem:[#allocation8 + $0x1a8] sm:$0xff]
        %v2760 = vld [vmem:[#allocation8 + $0x1b0] sm:$0xff]
        %v2761 = vld [vmem:[#allocation8 + $0x1b8] sm:$0xff]
        %v2762 = vld [vmem:[#allocation8 + $0x1c0] sm:$0xff]
        %v2763 = vld [vmem:[#allocation8 + $0x1c8] sm:$0xff]
        %v2764 = vld [vmem:[#allocation8 + $0x1d0] sm:$0xff]
        %v2765 = vld [vmem:[#allocation8 + $0x1d8] sm:$0xff]
        %v2766 = vld [vmem:[#allocation8 + $0x1e0] sm:$0xff]
        %v2767 = vld [vmem:[#allocation8 + $0x1e8] sm:$0xff]
        %v2768 = vld [vmem:[#allocation8 + $0x1f0] sm:$0xff]
        %v2769 = vld [vmem:[#allocation8 + $0x1f8] sm:$0xff]
        %v2770 = vld [vmem:[#allocation8 + $0x200] sm:$0xff]
        %v2771 = vld [vmem:[#allocation8 + $0x208] sm:$0xff]
        %v2772 = vld [vmem:[#allocation8 + $0x210] sm:$0xff]
        %v2773 = vld [vmem:[#allocation8 + $0x218] sm:$0xff]
        %v2774 = vld [vmem:[#allocation8 + $0x220] sm:$0xff]
        %v2775 = vld [vmem:[#allocation8 + $0x228] sm:$0xff]
        %v2776 = vld [vmem:[#allocation8 + $0x230] sm:$0xff]
        %v2777 = vld [vmem:[#allocation8 + $0x238] sm:$0xff]
        %v2778 = vld [vmem:[#allocation8 + $0x240] sm:$0xff]
        %v2779 = vld [vmem:[#allocation8 + $0x248] sm:$0xff]
        %v2780 = vld [vmem:[#allocation8 + $0x250] sm:$0xff]
        %v2781 = vld [vmem:[#allocation8 + $0x258] sm:$0xff]
        %v2782 = vld [vmem:[#allocation8 + $0x260] sm:$0xff]
        %v2783 = vld [vmem:[#allocation8 + $0x268] sm:$0xff]
        %v2784 = vld [vmem:[#allocation8 + $0x270] sm:$0xff]
        %v2785 = vld [vmem:[#allocation8 + $0x278] sm:$0xff]
        %v2786 = vld [vmem:[#allocation8 + $0x280] sm:$0xff]
        %v2787 = vld [vmem:[#allocation8 + $0x288] sm:$0xff]
        %v2788 = vld [vmem:[#allocation8 + $0x290] sm:$0xff]
        %v2789 = vld [vmem:[#allocation8 + $0x298] sm:$0xff]
        %v2790 = vld [vmem:[#allocation8 + $0x2a0] sm:$0xff]
        %v2791 = vld [vmem:[#allocation8 + $0x2a8] sm:$0xff]
        %v2792 = vld [vmem:[#allocation8 + $0x2b0] sm:$0xff]
        %v2793 = vld [vmem:[#allocation8 + $0x2b8] sm:$0xff]
        %v2794 = vld [vmem:[#allocation8 + $0x2c0] sm:$0xff]
        %v2795 = vld [vmem:[#allocation8 + $0x2c8] sm:$0xff]
        %v2796 = vld [vmem:[#allocation8 + $0x2d0] sm:$0xff]
        %v2797 = vld [vmem:[#allocation8 + $0x2d8] sm:$0xff]
        %v2798 = vld [vmem:[#allocation8 + $0x2e0] sm:$0xff]
        %v2799 = vld [vmem:[#allocation8 + $0x2e8] sm:$0xff]
        %v2800 = vld [vmem:[#allocation8 + $0x2f0] sm:$0xff]
        %v2801 = vld [vmem:[#allocation8 + $0x2f8] sm:$0xff]
        %v2802 = vld [vmem:[#allocation8 + $0x300] sm:$0xff]
        %v2803 = vld [vmem:[#allocation8 + $0x308] sm:$0xff]
        %v2804 = vld [vmem:[#allocation8 + $0x310] sm:$0xff]
        %v2805 = vld [vmem:[#allocation8 + $0x318] sm:$0xff]
        %v2806 = vld [vmem:[#allocation8 + $0x320] sm:$0xff]
        %v2807 = vld [vmem:[#allocation8 + $0x328] sm:$0xff]
        %v2808 = vld [vmem:[#allocation8 + $0x330] sm:$0xff]
        %v2809 = vld [vmem:[#allocation8 + $0x338] sm:$0xff]
        %v2810 = vld [vmem:[#allocation8 + $0x340] sm:$0xff]
        %v2811 = vld [vmem:[#allocation8 + $0x348] sm:$0xff]
        %v2812 = vld [vmem:[#allocation8 + $0x350] sm:$0xff]
        %v2813 = vld [vmem:[#allocation8 + $0x358] sm:$0xff]
        %v2814 = vld [vmem:[#allocation8 + $0x360] sm:$0xff]
        %v2815 = vld [vmem:[#allocation8 + $0x368] sm:$0xff]
        %v2816 = vld [vmem:[#allocation8 + $0x370] sm:$0xff]
        %v2817 = vld [vmem:[#allocation8 + $0x378] sm:$0xff]
        %v2818 = vld [vmem:[#allocation8 + $0x380] sm:$0xff]
        %v2819 = vld [vmem:[#allocation8 + $0x388] sm:$0xff]
        %v2820 = vld [vmem:[#allocation8 + $0x390] sm:$0xff]
        %v2821 = vld [vmem:[#allocation8 + $0x398] sm:$0xff]
        %v2822 = vld [vmem:[#allocation8 + $0x3a0] sm:$0xff]
        %v2823 = vld [vmem:[#allocation8 + $0x3a8] sm:$0xff]
        %v2824 = vld [vmem:[#allocation8 + $0x3b0] sm:$0xff]
        %v2825 = vld [vmem:[#allocation8 + $0x3b8] sm:$0xff]
        %v2826 = vld [vmem:[#allocation8 + $0x3c0] sm:$0xff]
        %v2827 = vld [vmem:[#allocation8 + $0x3c8] sm:$0xff]
        %v2828 = vld [vmem:[#allocation8 + $0x3d0] sm:$0xff]
        %v2829 = vld [vmem:[#allocation8 + $0x3d8] sm:$0xff]
        %v2830 = vld [vmem:[#allocation8 + $0x3e0] sm:$0xff]
        %v2831 = vld [vmem:[#allocation8 + $0x3e8] sm:$0xff]
        %v2832 = vld [vmem:[#allocation8 + $0x3f0] sm:$0xff]
        %v2833 = vld [vmem:[#allocation8 + $0x3f8] sm:$0xff]
        %v2834 = vld [vmem:[#allocation8 + $0x400] sm:$0xff]
        %v2835 = vld [vmem:[#allocation8 + $0x408] sm:$0xff]
        %v2836 = vld [vmem:[#allocation8 + $0x410] sm:$0xff]
        %v2837 = vld [vmem:[#allocation8 + $0x418] sm:$0xff]
        %v2838 = vld [vmem:[#allocation8 + $0x420] sm:$0xff]
        %v2839 = vld [vmem:[#allocation8 + $0x428] sm:$0xff]
        %v2840 = vld [vmem:[#allocation8 + $0x430] sm:$0xff]
        %v2841 = vld [vmem:[#allocation8 + $0x438] sm:$0xff]
        %v2842 = vld [vmem:[#allocation8 + $0x440] sm:$0xff]
        %v2843 = vld [vmem:[#allocation8 + $0x448] sm:$0xff]
        %v2844 = vld [vmem:[#allocation8 + $0x450] sm:$0xff]
        %v2845 = vld [vmem:[#allocation8 + $0x458] sm:$0xff]
        %v2846 = vld [vmem:[#allocation8 + $0x460] sm:$0xff]
        %v2847 = vld [vmem:[#allocation8 + $0x468] sm:$0xff]
        %v2848 = vld [vmem:[#allocation8 + $0x470] sm:$0xff]
        %v2849 = vld [vmem:[#allocation8 + $0x478] sm:$0xff]
        %v2850 = vld [vmem:[#allocation8 + $0x480] sm:$0xff]
        %v2851 = vld [vmem:[#allocation8 + $0x488] sm:$0xff]
        %v2852 = vld [vmem:[#allocation8 + $0x490] sm:$0xff]
        %v2853 = vld [vmem:[#allocation8 + $0x498] sm:$0xff]
        %v2854 = vld [vmem:[#allocation8 + $0x4a0] sm:$0xff]
        %v2855 = vld [vmem:[#allocation8 + $0x4a8] sm:$0xff]
        %v2856 = vld [vmem:[#allocation8 + $0x4b0] sm:$0xff]
        %v2857 = vld [vmem:[#allocation8 + $0x4b8] sm:$0xff]
        %v2858 = vld [vmem:[#allocation8 + $0x4c0] sm:$0xff]
        %v2859 = vld [vmem:[#allocation8 + $0x4c8] sm:$0xff]
        %v2860 = vld [vmem:[#allocation8 + $0x4d0] sm:$0xff]
        %v2861 = vld [vmem:[#allocation8 + $0x4d8] sm:$0xff]
        %v2862 = vld [vmem:[#allocation8 + $0x4e0] sm:$0xff]
        %v2863 = vld [vmem:[#allocation8 + $0x4e8] sm:$0xff]
        %v2864 = vld [vmem:[#allocation8 + $0x4f0] sm:$0xff]
        %v2865 = vld [vmem:[#allocation8 + $0x4f8] sm:$0xff]
        %v2866 = vld [vmem:[#allocation8 + $0x500] sm:$0xff]
        %v2867 = vld [vmem:[#allocation8 + $0x508] sm:$0xff]
        %v2868 = vld [vmem:[#allocation8 + $0x510] sm:$0xff]
        %v2869 = vld [vmem:[#allocation8 + $0x518] sm:$0xff]
        %v2870 = vld [vmem:[#allocation8 + $0x520] sm:$0xff]
        %v2871 = vld [vmem:[#allocation8 + $0x528] sm:$0xff]
        %v2872 = vld [vmem:[#allocation8 + $0x530] sm:$0xff]
        %v2873 = vld [vmem:[#allocation8 + $0x538] sm:$0xff]
        %v2874 = vld [vmem:[#allocation8 + $0x540] sm:$0xff]
        %v2875 = vld [vmem:[#allocation8 + $0x548] sm:$0xff]
        %v2876 = vld [vmem:[#allocation8 + $0x550] sm:$0xff]
        %v2877 = vld [vmem:[#allocation8 + $0x558] sm:$0xff]
        %v2878 = vld [vmem:[#allocation8 + $0x560] sm:$0xff]
        %v2879 = vld [vmem:[#allocation8 + $0x568] sm:$0xff]
        %v2880 = vld [vmem:[#allocation8 + $0x570] sm:$0xff]
        %v2881 = vld [vmem:[#allocation8 + $0x578] sm:$0xff]
        %v2882 = vld [vmem:[#allocation8 + $0x580] sm:$0xff]
        %v2883 = vld [vmem:[#allocation8 + $0x588] sm:$0xff]
        %v2884 = vld [vmem:[#allocation8 + $0x590] sm:$0xff]
        %v2885 = vld [vmem:[#allocation8 + $0x598] sm:$0xff]
        %v2886 = vld [vmem:[#allocation8 + $0x5a0] sm:$0xff]
        %v2887 = vld [vmem:[#allocation8 + $0x5a8] sm:$0xff]
        %v2888 = vld [vmem:[#allocation8 + $0x5b0] sm:$0xff]
        %v2889 = vld [vmem:[#allocation8 + $0x5b8] sm:$0xff]
        %v2890 = vld [vmem:[#allocation8 + $0x5c0] sm:$0xff]
        %v2891 = vld [vmem:[#allocation8 + $0x5c8] sm:$0xff]
        %v2892 = vld [vmem:[#allocation8 + $0x5d0] sm:$0xff]
        %v2893 = vld [vmem:[#allocation8 + $0x5d8] sm:$0xff]
        %v2894 = vld [vmem:[#allocation8 + $0x5e0] sm:$0xff]
        %v2895 = vld [vmem:[#allocation8 + $0x5e8] sm:$0xff]
        %v2896 = vld [vmem:[#allocation8 + $0x5f0] sm:$0xff]
        %v2897 = vld [vmem:[#allocation8 + $0x5f8] sm:$0xff]
        %v3090 = vunpack.c.l.b16 %v2706
        %v3091 = vunpack.c.h.b16 %v2706
        %v3092 = vunpack.c.l.b16 %v2707
        %v3093 = vunpack.c.h.b16 %v2707
        %v3094 = vunpack.c.l.b16 %v2708
        %v3095 = vunpack.c.h.b16 %v2708
        %v3096 = vunpack.c.l.b16 %v2709
        %v3097 = vunpack.c.h.b16 %v2709
        %v3098 = vunpack.c.l.b16 %v2710
        %v3099 = vunpack.c.h.b16 %v2710
        %v3100 = vunpack.c.l.b16 %v2711
        %v3101 = vunpack.c.h.b16 %v2711
        %v3102 = vunpack.c.l.b16 %v2712
        %v3103 = vunpack.c.h.b16 %v2712
        %v3104 = vunpack.c.l.b16 %v2713
        %v3105 = vunpack.c.h.b16 %v2713
        %v3106 = vunpack.c.l.b16 %v2714
        %v3107 = vunpack.c.h.b16 %v2714
        %v3108 = vunpack.c.l.b16 %v2715
        %v3109 = vunpack.c.h.b16 %v2715
        %v3110 = vunpack.c.l.b16 %v2716
        %v3111 = vunpack.c.h.b16 %v2716
        %v3112 = vunpack.c.l.b16 %v2717
        %v3113 = vunpack.c.h.b16 %v2717
        %v3114 = vunpack.c.l.b16 %v2718
        %v3115 = vunpack.c.h.b16 %v2718
        %v3116 = vunpack.c.l.b16 %v2719
        %v3117 = vunpack.c.h.b16 %v2719
        %v3118 = vunpack.c.l.b16 %v2720
        %v3119 = vunpack.c.h.b16 %v2720
        %v3120 = vunpack.c.l.b16 %v2721
        %v3121 = vunpack.c.h.b16 %v2721
        %v3122 = vunpack.c.l.b16 %v2722
        %v3123 = vunpack.c.h.b16 %v2722
        %v3124 = vunpack.c.l.b16 %v2723
        %v3125 = vunpack.c.h.b16 %v2723
        %v3126 = vunpack.c.l.b16 %v2724
        %v3127 = vunpack.c.h.b16 %v2724
        %v3128 = vunpack.c.l.b16 %v2725
        %v3129 = vunpack.c.h.b16 %v2725
        %v3130 = vunpack.c.l.b16 %v2726
        %v3131 = vunpack.c.h.b16 %v2726
        %v3132 = vunpack.c.l.b16 %v2727
        %v3133 = vunpack.c.h.b16 %v2727
        %v3134 = vunpack.c.l.b16 %v2728
        %v3135 = vunpack.c.h.b16 %v2728
        %v3136 = vunpack.c.l.b16 %v2729
        %v3137 = vunpack.c.h.b16 %v2729
        %v3138 = vunpack.c.l.b16 %v2730
        %v3139 = vunpack.c.h.b16 %v2730
        %v3140 = vunpack.c.l.b16 %v2731
        %v3141 = vunpack.c.h.b16 %v2731
        %v3142 = vunpack.c.l.b16 %v2732
        %v3143 = vunpack.c.h.b16 %v2732
        %v3144 = vunpack.c.l.b16 %v2733
        %v3145 = vunpack.c.h.b16 %v2733
        %v3146 = vunpack.c.l.b16 %v2734
        %v3147 = vunpack.c.h.b16 %v2734
        %v3148 = vunpack.c.l.b16 %v2735
        %v3149 = vunpack.c.h.b16 %v2735
        %v3150 = vunpack.c.l.b16 %v2736
        %v3151 = vunpack.c.h.b16 %v2736
        %v3152 = vunpack.c.l.b16 %v2737
        %v3153 = vunpack.c.h.b16 %v2737
        %v3154 = vunpack.c.l.b16 %v2738
        %v3155 = vunpack.c.h.b16 %v2738
        %v3156 = vunpack.c.l.b16 %v2739
        %v3157 = vunpack.c.h.b16 %v2739
        %v3158 = vunpack.c.l.b16 %v2740
        %v3159 = vunpack.c.h.b16 %v2740
        %v3160 = vunpack.c.l.b16 %v2741
        %v3161 = vunpack.c.h.b16 %v2741
        %v3162 = vunpack.c.l.b16 %v2742
        %v3163 = vunpack.c.h.b16 %v2742
        %v3164 = vunpack.c.l.b16 %v2743
        %v3165 = vunpack.c.h.b16 %v2743
        %v3166 = vunpack.c.l.b16 %v2744
        %v3167 = vunpack.c.h.b16 %v2744
        %v3168 = vunpack.c.l.b16 %v2745
        %v3169 = vunpack.c.h.b16 %v2745
        %v3170 = vunpack.c.l.b16 %v2746
        %v3171 = vunpack.c.h.b16 %v2746
        %v3172 = vunpack.c.l.b16 %v2747
        %v3173 = vunpack.c.h.b16 %v2747
        %v3174 = vunpack.c.l.b16 %v2748
        %v3175 = vunpack.c.h.b16 %v2748
        %v3176 = vunpack.c.l.b16 %v2749
        %v3177 = vunpack.c.h.b16 %v2749
        %v3178 = vunpack.c.l.b16 %v2750
        %v3179 = vunpack.c.h.b16 %v2750
        %v3180 = vunpack.c.l.b16 %v2751
        %v3181 = vunpack.c.h.b16 %v2751
        %v3182 = vunpack.c.l.b16 %v2752
        %v3183 = vunpack.c.h.b16 %v2752
        %v3184 = vunpack.c.l.b16 %v2753
        %v3185 = vunpack.c.h.b16 %v2753
        %v3186 = vunpack.c.l.b16 %v2754
        %v3187 = vunpack.c.h.b16 %v2754
        %v3188 = vunpack.c.l.b16 %v2755
        %v3189 = vunpack.c.h.b16 %v2755
        %v3190 = vunpack.c.l.b16 %v2756
        %v3191 = vunpack.c.h.b16 %v2756
        %v3192 = vunpack.c.l.b16 %v2757
        %v3193 = vunpack.c.h.b16 %v2757
        %v3194 = vunpack.c.l.b16 %v2758
        %v3195 = vunpack.c.h.b16 %v2758
        %v3196 = vunpack.c.l.b16 %v2759
        %v3197 = vunpack.c.h.b16 %v2759
        %v3198 = vunpack.c.l.b16 %v2760
        %v3199 = vunpack.c.h.b16 %v2760
        %v3200 = vunpack.c.l.b16 %v2761
        %v3201 = vunpack.c.h.b16 %v2761
        %v3202 = vunpack.c.l.b16 %v2762
        %v3203 = vunpack.c.h.b16 %v2762
        %v3204 = vunpack.c.l.b16 %v2763
        %v3205 = vunpack.c.h.b16 %v2763
        %v3206 = vunpack.c.l.b16 %v2764
        %v3207 = vunpack.c.h.b16 %v2764
        %v3208 = vunpack.c.l.b16 %v2765
        %v3209 = vunpack.c.h.b16 %v2765
        %v3210 = vunpack.c.l.b16 %v2766
        %v3211 = vunpack.c.h.b16 %v2766
        %v3212 = vunpack.c.l.b16 %v2767
        %v3213 = vunpack.c.h.b16 %v2767
        %v3214 = vunpack.c.l.b16 %v2768
        %v3215 = vunpack.c.h.b16 %v2768
        %v3216 = vunpack.c.l.b16 %v2769
        %v3217 = vunpack.c.h.b16 %v2769
        %v3218 = vunpack.c.l.b16 %v2770
        %v3219 = vunpack.c.h.b16 %v2770
        %v3220 = vunpack.c.l.b16 %v2771
        %v3221 = vunpack.c.h.b16 %v2771
        %v3222 = vunpack.c.l.b16 %v2772
        %v3223 = vunpack.c.h.b16 %v2772
        %v3224 = vunpack.c.l.b16 %v2773
        %v3225 = vunpack.c.h.b16 %v2773
        %v3226 = vunpack.c.l.b16 %v2774
        %v3227 = vunpack.c.h.b16 %v2774
        %v3228 = vunpack.c.l.b16 %v2775
        %v3229 = vunpack.c.h.b16 %v2775
        %v3230 = vunpack.c.l.b16 %v2776
        %v3231 = vunpack.c.h.b16 %v2776
        %v3232 = vunpack.c.l.b16 %v2777
        %v3233 = vunpack.c.h.b16 %v2777
        %v3234 = vunpack.c.l.b16 %v2778
        %v3235 = vunpack.c.h.b16 %v2778
        %v3236 = vunpack.c.l.b16 %v2779
        %v3237 = vunpack.c.h.b16 %v2779
        %v3238 = vunpack.c.l.b16 %v2780
        %v3239 = vunpack.c.h.b16 %v2780
        %v3240 = vunpack.c.l.b16 %v2781
        %v3241 = vunpack.c.h.b16 %v2781
        %v3242 = vunpack.c.l.b16 %v2782
        %v3243 = vunpack.c.h.b16 %v2782
        %v3244 = vunpack.c.l.b16 %v2783
        %v3245 = vunpack.c.h.b16 %v2783
        %v3246 = vunpack.c.l.b16 %v2784
        %v3247 = vunpack.c.h.b16 %v2784
        %v3248 = vunpack.c.l.b16 %v2785
        %v3249 = vunpack.c.h.b16 %v2785
        %v3250 = vunpack.c.l.b16 %v2786
        %v3251 = vunpack.c.h.b16 %v2786
        %v3252 = vunpack.c.l.b16 %v2787
        %v3253 = vunpack.c.h.b16 %v2787
        %v3254 = vunpack.c.l.b16 %v2788
        %v3255 = vunpack.c.h.b16 %v2788
        %v3256 = vunpack.c.l.b16 %v2789
        %v3257 = vunpack.c.h.b16 %v2789
        %v3258 = vunpack.c.l.b16 %v2790
        %v3259 = vunpack.c.h.b16 %v2790
        %v3260 = vunpack.c.l.b16 %v2791
        %v3261 = vunpack.c.h.b16 %v2791
        %v3262 = vunpack.c.l.b16 %v2792
        %v3263 = vunpack.c.h.b16 %v2792
        %v3264 = vunpack.c.l.b16 %v2793
        %v3265 = vunpack.c.h.b16 %v2793
        %v3266 = vunpack.c.l.b16 %v2794
        %v3267 = vunpack.c.h.b16 %v2794
        %v3268 = vunpack.c.l.b16 %v2795
        %v3269 = vunpack.c.h.b16 %v2795
        %v3270 = vunpack.c.l.b16 %v2796
        %v3271 = vunpack.c.h.b16 %v2796
        %v3272 = vunpack.c.l.b16 %v2797
        %v3273 = vunpack.c.h.b16 %v2797
        %v3274 = vunpack.c.l.b16 %v2798
        %v3275 = vunpack.c.h.b16 %v2798
        %v3276 = vunpack.c.l.b16 %v2799
        %v3277 = vunpack.c.h.b16 %v2799
        %v3278 = vunpack.c.l.b16 %v2800
        %v3279 = vunpack.c.h.b16 %v2800
        %v3280 = vunpack.c.l.b16 %v2801
        %v3281 = vunpack.c.h.b16 %v2801
        %v3282 = vunpack.c.l.b16 %v2802
        %v3283 = vunpack.c.h.b16 %v2802
        %v3284 = vunpack.c.l.b16 %v2803
        %v3285 = vunpack.c.h.b16 %v2803
        %v3286 = vunpack.c.l.b16 %v2804
        %v3287 = vunpack.c.h.b16 %v2804
        %v3288 = vunpack.c.l.b16 %v2805
        %v3289 = vunpack.c.h.b16 %v2805
        %v3290 = vunpack.c.l.b16 %v2806
        %v3291 = vunpack.c.h.b16 %v2806
        %v3292 = vunpack.c.l.b16 %v2807
        %v3293 = vunpack.c.h.b16 %v2807
        %v3294 = vunpack.c.l.b16 %v2808
        %v3295 = vunpack.c.h.b16 %v2808
        %v3296 = vunpack.c.l.b16 %v2809
        %v3297 = vunpack.c.h.b16 %v2809
        %v3298 = vunpack.c.l.b16 %v2810
        %v3299 = vunpack.c.h.b16 %v2810
        %v3300 = vunpack.c.l.b16 %v2811
        %v3301 = vunpack.c.h.b16 %v2811
        %v3302 = vunpack.c.l.b16 %v2812
        %v3303 = vunpack.c.h.b16 %v2812
        %v3304 = vunpack.c.l.b16 %v2813
        %v3305 = vunpack.c.h.b16 %v2813
        %v3306 = vunpack.c.l.b16 %v2814
        %v3307 = vunpack.c.h.b16 %v2814
        %v3308 = vunpack.c.l.b16 %v2815
        %v3309 = vunpack.c.h.b16 %v2815
        %v3310 = vunpack.c.l.b16 %v2816
        %v3311 = vunpack.c.h.b16 %v2816
        %v3312 = vunpack.c.l.b16 %v2817
        %v3313 = vunpack.c.h.b16 %v2817
        %v3314 = vunpack.c.l.b16 %v2818
        %v3315 = vunpack.c.h.b16 %v2818
        %v3316 = vunpack.c.l.b16 %v2819
        %v3317 = vunpack.c.h.b16 %v2819
        %v3318 = vunpack.c.l.b16 %v2820
        %v3319 = vunpack.c.h.b16 %v2820
        %v3320 = vunpack.c.l.b16 %v2821
        %v3321 = vunpack.c.h.b16 %v2821
        %v3322 = vunpack.c.l.b16 %v2822
        %v3323 = vunpack.c.h.b16 %v2822
        %v3324 = vunpack.c.l.b16 %v2823
        %v3325 = vunpack.c.h.b16 %v2823
        %v3326 = vunpack.c.l.b16 %v2824
        %v3327 = vunpack.c.h.b16 %v2824
        %v3328 = vunpack.c.l.b16 %v2825
        %v3329 = vunpack.c.h.b16 %v2825
        %v3330 = vunpack.c.l.b16 %v2826
        %v3331 = vunpack.c.h.b16 %v2826
        %v3332 = vunpack.c.l.b16 %v2827
        %v3333 = vunpack.c.h.b16 %v2827
        %v3334 = vunpack.c.l.b16 %v2828
        %v3335 = vunpack.c.h.b16 %v2828
        %v3336 = vunpack.c.l.b16 %v2829
        %v3337 = vunpack.c.h.b16 %v2829
        %v3338 = vunpack.c.l.b16 %v2830
        %v3339 = vunpack.c.h.b16 %v2830
        %v3340 = vunpack.c.l.b16 %v2831
        %v3341 = vunpack.c.h.b16 %v2831
        %v3342 = vunpack.c.l.b16 %v2832
        %v3343 = vunpack.c.h.b16 %v2832
        %v3344 = vunpack.c.l.b16 %v2833
        %v3345 = vunpack.c.h.b16 %v2833
        %v3346 = vunpack.c.l.b16 %v2834
        %v3347 = vunpack.c.h.b16 %v2834
        %v3348 = vunpack.c.l.b16 %v2835
        %v3349 = vunpack.c.h.b16 %v2835
        %v3350 = vunpack.c.l.b16 %v2836
        %v3351 = vunpack.c.h.b16 %v2836
        %v3352 = vunpack.c.l.b16 %v2837
        %v3353 = vunpack.c.h.b16 %v2837
        %v3354 = vunpack.c.l.b16 %v2838
        %v3355 = vunpack.c.h.b16 %v2838
        %v3356 = vunpack.c.l.b16 %v2839
        %v3357 = vunpack.c.h.b16 %v2839
        %v3358 = vunpack.c.l.b16 %v2840
        %v3359 = vunpack.c.h.b16 %v2840
        %v3360 = vunpack.c.l.b16 %v2841
        %v3361 = vunpack.c.h.b16 %v2841
        %v3362 = vunpack.c.l.b16 %v2842
        %v3363 = vunpack.c.h.b16 %v2842
        %v3364 = vunpack.c.l.b16 %v2843
        %v3365 = vunpack.c.h.b16 %v2843
        %v3366 = vunpack.c.l.b16 %v2844
        %v3367 = vunpack.c.h.b16 %v2844
        %v3368 = vunpack.c.l.b16 %v2845
        %v3369 = vunpack.c.h.b16 %v2845
        %v3370 = vunpack.c.l.b16 %v2846
        %v3371 = vunpack.c.h.b16 %v2846
        %v3372 = vunpack.c.l.b16 %v2847
        %v3373 = vunpack.c.h.b16 %v2847
        %v3374 = vunpack.c.l.b16 %v2848
        %v3375 = vunpack.c.h.b16 %v2848
        %v3376 = vunpack.c.l.b16 %v2849
        %v3377 = vunpack.c.h.b16 %v2849
        %v3378 = vunpack.c.l.b16 %v2850
        %v3379 = vunpack.c.h.b16 %v2850
        %v3380 = vunpack.c.l.b16 %v2851
        %v3381 = vunpack.c.h.b16 %v2851
        %v3382 = vunpack.c.l.b16 %v2852
        %v3383 = vunpack.c.h.b16 %v2852
        %v3384 = vunpack.c.l.b16 %v2853
        %v3385 = vunpack.c.h.b16 %v2853
        %v3386 = vunpack.c.l.b16 %v2854
        %v3387 = vunpack.c.h.b16 %v2854
        %v3388 = vunpack.c.l.b16 %v2855
        %v3389 = vunpack.c.h.b16 %v2855
        %v3390 = vunpack.c.l.b16 %v2856
        %v3391 = vunpack.c.h.b16 %v2856
        %v3392 = vunpack.c.l.b16 %v2857
        %v3393 = vunpack.c.h.b16 %v2857
        %v3394 = vunpack.c.l.b16 %v2858
        %v3395 = vunpack.c.h.b16 %v2858
        %v3396 = vunpack.c.l.b16 %v2859
        %v3397 = vunpack.c.h.b16 %v2859
        %v3398 = vunpack.c.l.b16 %v2860
        %v3399 = vunpack.c.h.b16 %v2860
        %v3400 = vunpack.c.l.b16 %v2861
        %v3401 = vunpack.c.h.b16 %v2861
        %v3402 = vunpack.c.l.b16 %v2862
        %v3403 = vunpack.c.h.b16 %v2862
        %v3404 = vunpack.c.l.b16 %v2863
        %v3405 = vunpack.c.h.b16 %v2863
        %v3406 = vunpack.c.l.b16 %v2864
        %v3407 = vunpack.c.h.b16 %v2864
        %v3408 = vunpack.c.l.b16 %v2865
        %v3409 = vunpack.c.h.b16 %v2865
        %v3410 = vunpack.c.l.b16 %v2866
        %v3411 = vunpack.c.h.b16 %v2866
        %v3412 = vunpack.c.l.b16 %v2867
        %v3413 = vunpack.c.h.b16 %v2867
        %v3414 = vunpack.c.l.b16 %v2868
        %v3415 = vunpack.c.h.b16 %v2868
        %v3416 = vunpack.c.l.b16 %v2869
        %v3417 = vunpack.c.h.b16 %v2869
        %v3418 = vunpack.c.l.b16 %v2870
        %v3419 = vunpack.c.h.b16 %v2870
        %v3420 = vunpack.c.l.b16 %v2871
        %v3421 = vunpack.c.h.b16 %v2871
        %v3422 = vunpack.c.l.b16 %v2872
        %v3423 = vunpack.c.h.b16 %v2872
        %v3424 = vunpack.c.l.b16 %v2873
        %v3425 = vunpack.c.h.b16 %v2873
        %v3426 = vunpack.c.l.b16 %v2874
        %v3427 = vunpack.c.h.b16 %v2874
        %v3428 = vunpack.c.l.b16 %v2875
        %v3429 = vunpack.c.h.b16 %v2875
        %v3430 = vunpack.c.l.b16 %v2876
        %v3431 = vunpack.c.h.b16 %v2876
        %v3432 = vunpack.c.l.b16 %v2877
        %v3433 = vunpack.c.h.b16 %v2877
        %v3434 = vunpack.c.l.b16 %v2878
        %v3435 = vunpack.c.h.b16 %v2878
        %v3436 = vunpack.c.l.b16 %v2879
        %v3437 = vunpack.c.h.b16 %v2879
        %v3438 = vunpack.c.l.b16 %v2880
        %v3439 = vunpack.c.h.b16 %v2880
        %v3440 = vunpack.c.l.b16 %v2881
        %v3441 = vunpack.c.h.b16 %v2881
        %v3442 = vunpack.c.l.b16 %v2882
        %v3443 = vunpack.c.h.b16 %v2882
        %v3444 = vunpack.c.l.b16 %v2883
        %v3445 = vunpack.c.h.b16 %v2883
        %v3446 = vunpack.c.l.b16 %v2884
        %v3447 = vunpack.c.h.b16 %v2884
        %v3448 = vunpack.c.l.b16 %v2885
        %v3449 = vunpack.c.h.b16 %v2885
        %v3450 = vunpack.c.l.b16 %v2886
        %v3451 = vunpack.c.h.b16 %v2886
        %v3452 = vunpack.c.l.b16 %v2887
        %v3453 = vunpack.c.h.b16 %v2887
        %v3454 = vunpack.c.l.b16 %v2888
        %v3455 = vunpack.c.h.b16 %v2888
        %v3456 = vunpack.c.l.b16 %v2889
        %v3457 = vunpack.c.h.b16 %v2889
        %v3458 = vunpack.c.l.b16 %v2890
        %v3459 = vunpack.c.h.b16 %v2890
        %v3460 = vunpack.c.l.b16 %v2891
        %v3461 = vunpack.c.h.b16 %v2891
        %v3462 = vunpack.c.l.b16 %v2892
        %v3463 = vunpack.c.h.b16 %v2892
        %v3464 = vunpack.c.l.b16 %v2893
        %v3465 = vunpack.c.h.b16 %v2893
        %v3466 = vunpack.c.l.b16 %v2894
        %v3467 = vunpack.c.h.b16 %v2894
        %v3468 = vunpack.c.l.b16 %v2895
        %v3469 = vunpack.c.h.b16 %v2895
        %v3470 = vunpack.c.l.b16 %v2896
        %v3471 = vunpack.c.h.b16 %v2896
        %v3472 = vunpack.c.l.b16 %v2897
        %v3473 = vunpack.c.h.b16 %v2897
        %v3474 = vpack.c.b16 %v3102, %v3090
        %v3475 = vpack.c.b16 %v3103, %v3091
        %v3476 = vpack.c.b16 %v3104, %v3092
        %v3477 = vpack.c.b16 %v3105, %v3093
        %v3478 = vpack.c.b16 %v3106, %v3094
        %v3479 = vpack.c.b16 %v3107, %v3095
        %v3480 = vpack.c.b16 %v3108, %v3096
        %v3481 = vpack.c.b16 %v3109, %v3097
        %v3482 = vpack.c.b16 %v3110, %v3098
        %v3483 = vpack.c.b16 %v3111, %v3099
        %v3484 = vpack.c.b16 %v3112, %v3100
        %v3485 = vpack.c.b16 %v3113, %v3101
        %v3486 = vpack.c.b16 %v3126, %v3114
        %v3487 = vpack.c.b16 %v3127, %v3115
        %v3488 = vpack.c.b16 %v3128, %v3116
        %v3489 = vpack.c.b16 %v3129, %v3117
        %v3490 = vpack.c.b16 %v3130, %v3118
        %v3491 = vpack.c.b16 %v3131, %v3119
        %v3492 = vpack.c.b16 %v3132, %v3120
        %v3493 = vpack.c.b16 %v3133, %v3121
        %v3494 = vpack.c.b16 %v3134, %v3122
        %v3495 = vpack.c.b16 %v3135, %v3123
        %v3496 = vpack.c.b16 %v3136, %v3124
        %v3497 = vpack.c.b16 %v3137, %v3125
        %v3498 = vpack.c.b16 %v3150, %v3138
        %v3499 = vpack.c.b16 %v3151, %v3139
        %v3500 = vpack.c.b16 %v3152, %v3140
        %v3501 = vpack.c.b16 %v3153, %v3141
        %v3502 = vpack.c.b16 %v3154, %v3142
        %v3503 = vpack.c.b16 %v3155, %v3143
        %v3504 = vpack.c.b16 %v3156, %v3144
        %v3505 = vpack.c.b16 %v3157, %v3145
        %v3506 = vpack.c.b16 %v3158, %v3146
        %v3507 = vpack.c.b16 %v3159, %v3147
        %v3508 = vpack.c.b16 %v3160, %v3148
        %v3509 = vpack.c.b16 %v3161, %v3149
        %v3510 = vpack.c.b16 %v3174, %v3162
        %v3511 = vpack.c.b16 %v3175, %v3163
        %v3512 = vpack.c.b16 %v3176, %v3164
        %v3513 = vpack.c.b16 %v3177, %v3165
        %v3514 = vpack.c.b16 %v3178, %v3166
        %v3515 = vpack.c.b16 %v3179, %v3167
        %v3516 = vpack.c.b16 %v3180, %v3168
        %v3517 = vpack.c.b16 %v3181, %v3169
        %v3518 = vpack.c.b16 %v3182, %v3170
        %v3519 = vpack.c.b16 %v3183, %v3171
        %v3520 = vpack.c.b16 %v3184, %v3172
        %v3521 = vpack.c.b16 %v3185, %v3173
        %v3522 = vpack.c.b16 %v3198, %v3186
        %v3523 = vpack.c.b16 %v3199, %v3187
        %v3524 = vpack.c.b16 %v3200, %v3188
        %v3525 = vpack.c.b16 %v3201, %v3189
        %v3526 = vpack.c.b16 %v3202, %v3190
        %v3527 = vpack.c.b16 %v3203, %v3191
        %v3528 = vpack.c.b16 %v3204, %v3192
        %v3529 = vpack.c.b16 %v3205, %v3193
        %v3530 = vpack.c.b16 %v3206, %v3194
        %v3531 = vpack.c.b16 %v3207, %v3195
        %v3532 = vpack.c.b16 %v3208, %v3196
        %v3533 = vpack.c.b16 %v3209, %v3197
        %v3534 = vpack.c.b16 %v3222, %v3210
        %v3535 = vpack.c.b16 %v3223, %v3211
        %v3536 = vpack.c.b16 %v3224, %v3212
        %v3537 = vpack.c.b16 %v3225, %v3213
        %v3538 = vpack.c.b16 %v3226, %v3214
        %v3539 = vpack.c.b16 %v3227, %v3215
        %v3540 = vpack.c.b16 %v3228, %v3216
        %v3541 = vpack.c.b16 %v3229, %v3217
        %v3542 = vpack.c.b16 %v3230, %v3218
        %v3543 = vpack.c.b16 %v3231, %v3219
        %v3544 = vpack.c.b16 %v3232, %v3220
        %v3545 = vpack.c.b16 %v3233, %v3221
        %v3546 = vpack.c.b16 %v3246, %v3234
        %v3547 = vpack.c.b16 %v3247, %v3235
        %v3548 = vpack.c.b16 %v3248, %v3236
        %v3549 = vpack.c.b16 %v3249, %v3237
        %v3550 = vpack.c.b16 %v3250, %v3238
        %v3551 = vpack.c.b16 %v3251, %v3239
        %v3552 = vpack.c.b16 %v3252, %v3240
        %v3553 = vpack.c.b16 %v3253, %v3241
        %v3554 = vpack.c.b16 %v3254, %v3242
        %v3555 = vpack.c.b16 %v3255, %v3243
        %v3556 = vpack.c.b16 %v3256, %v3244
        %v3557 = vpack.c.b16 %v3257, %v3245
        %v3558 = vpack.c.b16 %v3270, %v3258
        %v3559 = vpack.c.b16 %v3271, %v3259
        %v3560 = vpack.c.b16 %v3272, %v3260
        %v3561 = vpack.c.b16 %v3273, %v3261
        %v3562 = vpack.c.b16 %v3274, %v3262
        %v3563 = vpack.c.b16 %v3275, %v3263
        %v3564 = vpack.c.b16 %v3276, %v3264
        %v3565 = vpack.c.b16 %v3277, %v3265
        %v3566 = vpack.c.b16 %v3278, %v3266
        %v3567 = vpack.c.b16 %v3279, %v3267
        %v3568 = vpack.c.b16 %v3280, %v3268
        %v3569 = vpack.c.b16 %v3281, %v3269
        %v3570 = vpack.c.b16 %v3294, %v3282
        %v3571 = vpack.c.b16 %v3295, %v3283
        %v3572 = vpack.c.b16 %v3296, %v3284
        %v3573 = vpack.c.b16 %v3297, %v3285
        %v3574 = vpack.c.b16 %v3298, %v3286
        %v3575 = vpack.c.b16 %v3299, %v3287
        %v3576 = vpack.c.b16 %v3300, %v3288
        %v3577 = vpack.c.b16 %v3301, %v3289
        %v3578 = vpack.c.b16 %v3302, %v3290
        %v3579 = vpack.c.b16 %v3303, %v3291
        %v3580 = vpack.c.b16 %v3304, %v3292
        %v3581 = vpack.c.b16 %v3305, %v3293
        %v3582 = vpack.c.b16 %v3318, %v3306
        %v3583 = vpack.c.b16 %v3319, %v3307
        %v3584 = vpack.c.b16 %v3320, %v3308
        %v3585 = vpack.c.b16 %v3321, %v3309
        %v3586 = vpack.c.b16 %v3322, %v3310
        %v3587 = vpack.c.b16 %v3323, %v3311
        %v3588 = vpack.c.b16 %v3324, %v3312
        %v3589 = vpack.c.b16 %v3325, %v3313
        %v3590 = vpack.c.b16 %v3326, %v3314
        %v3591 = vpack.c.b16 %v3327, %v3315
        %v3592 = vpack.c.b16 %v3328, %v3316
        %v3593 = vpack.c.b16 %v3329, %v3317
        %v3594 = vpack.c.b16 %v3342, %v3330
        %v3595 = vpack.c.b16 %v3343, %v3331
        %v3596 = vpack.c.b16 %v3344, %v3332
        %v3597 = vpack.c.b16 %v3345, %v3333
        %v3598 = vpack.c.b16 %v3346, %v3334
        %v3599 = vpack.c.b16 %v3347, %v3335
        %v3600 = vpack.c.b16 %v3348, %v3336
        %v3601 = vpack.c.b16 %v3349, %v3337
        %v3602 = vpack.c.b16 %v3350, %v3338
        %v3603 = vpack.c.b16 %v3351, %v3339
        %v3604 = vpack.c.b16 %v3352, %v3340
        %v3605 = vpack.c.b16 %v3353, %v3341
        %v3606 = vpack.c.b16 %v3366, %v3354
        %v3607 = vpack.c.b16 %v3367, %v3355
        %v3608 = vpack.c.b16 %v3368, %v3356
        %v3609 = vpack.c.b16 %v3369, %v3357
        %v3610 = vpack.c.b16 %v3370, %v3358
        %v3611 = vpack.c.b16 %v3371, %v3359
        %v3612 = vpack.c.b16 %v3372, %v3360
        %v3613 = vpack.c.b16 %v3373, %v3361
        %v3614 = vpack.c.b16 %v3374, %v3362
        %v3615 = vpack.c.b16 %v3375, %v3363
        %v3616 = vpack.c.b16 %v3376, %v3364
        %v3617 = vpack.c.b16 %v3377, %v3365
        %v3618 = vpack.c.b16 %v3390, %v3378
        %v3619 = vpack.c.b16 %v3391, %v3379
        %v3620 = vpack.c.b16 %v3392, %v3380
        %v3621 = vpack.c.b16 %v3393, %v3381
        %v3622 = vpack.c.b16 %v3394, %v3382
        %v3623 = vpack.c.b16 %v3395, %v3383
        %v3624 = vpack.c.b16 %v3396, %v3384
        %v3625 = vpack.c.b16 %v3397, %v3385
        %v3626 = vpack.c.b16 %v3398, %v3386
        %v3627 = vpack.c.b16 %v3399, %v3387
        %v3628 = vpack.c.b16 %v3400, %v3388
        %v3629 = vpack.c.b16 %v3401, %v3389
        %v3630 = vpack.c.b16 %v3414, %v3402
        %v3631 = vpack.c.b16 %v3415, %v3403
        %v3632 = vpack.c.b16 %v3416, %v3404
        %v3633 = vpack.c.b16 %v3417, %v3405
        %v3634 = vpack.c.b16 %v3418, %v3406
        %v3635 = vpack.c.b16 %v3419, %v3407
        %v3636 = vpack.c.b16 %v3420, %v3408
        %v3637 = vpack.c.b16 %v3421, %v3409
        %v3638 = vpack.c.b16 %v3422, %v3410
        %v3639 = vpack.c.b16 %v3423, %v3411
        %v3640 = vpack.c.b16 %v3424, %v3412
        %v3641 = vpack.c.b16 %v3425, %v3413
        %v3642 = vpack.c.b16 %v3438, %v3426
        %v3643 = vpack.c.b16 %v3439, %v3427
        %v3644 = vpack.c.b16 %v3440, %v3428
        %v3645 = vpack.c.b16 %v3441, %v3429
        %v3646 = vpack.c.b16 %v3442, %v3430
        %v3647 = vpack.c.b16 %v3443, %v3431
        %v3648 = vpack.c.b16 %v3444, %v3432
        %v3649 = vpack.c.b16 %v3445, %v3433
        %v3650 = vpack.c.b16 %v3446, %v3434
        %v3651 = vpack.c.b16 %v3447, %v3435
        %v3652 = vpack.c.b16 %v3448, %v3436
        %v3653 = vpack.c.b16 %v3449, %v3437
        %v3654 = vpack.c.b16 %v3462, %v3450
        %v3655 = vpack.c.b16 %v3463, %v3451
        %v3656 = vpack.c.b16 %v3464, %v3452
        %v3657 = vpack.c.b16 %v3465, %v3453
        %v3658 = vpack.c.b16 %v3466, %v3454
        %v3659 = vpack.c.b16 %v3467, %v3455
        %v3660 = vpack.c.b16 %v3468, %v3456
        %v3661 = vpack.c.b16 %v3469, %v3457
        %v3662 = vpack.c.b16 %v3470, %v3458
        %v3663 = vpack.c.b16 %v3471, %v3459
        %v3664 = vpack.c.b16 %v3472, %v3460
        %v3665 = vpack.c.b16 %v3473, %v3461
        %3858 = vmatprep.subr.bf16.mxu0 %v3475
        %3859 = vmatpush1.bf16.msra.mxu0 %v3474
        %3860 = vmatprep.subr.bf16.mxu0 %v3487
        %3861 = vmatpush1.bf16.msra.mxu0 %v3486
        %3862 = vmatprep.subr.bf16.mxu0 %v3499
        %3863 = vmatpush1.bf16.msra.mxu0 %v3498
        %3864 = vmatprep.subr.bf16.mxu0 %v3511
        %3865 = vmatpush1.bf16.msra.mxu0 %v3510
        %3866 = vmatprep.subr.bf16.mxu0 %v3523
        %3867 = vmatpush1.bf16.msra.mxu0 %v3522
        %3868 = vmatprep.subr.bf16.mxu0 %v3535
        %3869 = vmatpush1.bf16.msra.mxu0 %v3534
        %3870 = vmatprep.subr.bf16.mxu0 %v3547
        %3871 = vmatpush1.bf16.msra.mxu0 %v3546
        %3872 = vmatprep.subr.bf16.mxu0 %v3559
        %3873 = vmatpush1.bf16.msra.mxu0 %v3558
        %3874 = vmatprep.subr.bf16.mxu0 %v3571
        %3875 = vmatpush1.bf16.msra.mxu0 %v3570
        %3876 = vmatprep.subr.bf16.mxu0 %v3583
        %3877 = vmatpush1.bf16.msra.mxu0 %v3582
        %3878 = vmatprep.subr.bf16.mxu0 %v3595
        %3879 = vmatpush1.bf16.msra.mxu0 %v3594
        %3880 = vmatprep.subr.bf16.mxu0 %v3607
        %3881 = vmatpush1.bf16.msra.mxu0 %v3606
        %3882 = vmatprep.subr.bf16.mxu0 %v3619
        %3883 = vmatpush1.bf16.msra.mxu0 %v3618
        %3884 = vmatprep.subr.bf16.mxu0 %v3631
        %3885 = vmatpush1.bf16.msra.mxu0 %v3630
        %3886 = vmatprep.subr.bf16.mxu0 %v3643
        %3887 = vmatpush1.bf16.msra.mxu0 %v3642
        %3888 = vmatprep.subr.bf16.mxu0 %v3655
        %3889 = vmatpush1.bf16.msra.mxu0 %v3654
        %3890 = vmatprep.mubr.bf16.mxu0 %v604
        %3891 = vmatmul.mubr.bf16.gmra.mrb[0].mxu0 %v603
        %v3892 = vpop.f32.mrb[0].mxu0
        %v3893 = vadd.f32 0.0, %v3892
        %v3894 = vpop.f32.mrb[0].mxu0
        %v3895 = vadd.f32 0.0, %v3894
        %v3896 = vpop.f32.mrb[0].mxu0
        %v3897 = vadd.f32 0.0, %v3896
        %v3898 = vpop.f32.mrb[0].mxu0
        %v3899 = vadd.f32 0.0, %v3898
        %3900 = vmatprep.mubr.bf16.mxu0 %v606
        %3901 = vmatmul.mubr.bf16.gmra.mrb[0].mxu0 %v605
        %v3902 = vpop.f32.mrb[0].mxu0
        %v3903 = vadd.f32 0.0, %v3902
        %v3904 = vpop.f32.mrb[0].mxu0
        %v3905 = vadd.f32 0.0, %v3904
        %v3906 = vpop.f32.mrb[0].mxu0
        %v3907 = vadd.f32 0.0, %v3906
        %v3908 = vpop.f32.mrb[0].mxu0
        %v3909 = vadd.f32 0.0, %v3908
        %3910 = vmatprep.mubr.bf16.mxu0 %v608
        %3911 = vmatmul.mubr.bf16.gmra.mrb[0].mxu0 %v607
        %v3912 = vpop.f32.mrb[0].mxu0
        %v3913 = vadd.f32 0.0, %v3912
        %v3914 = vpop.f32.mrb[0].mxu0
        %v3915 = vadd.f32 0.0, %v3914
        %v3916 = vpop.f32.mrb[0].mxu0
        %v3917 = vadd.f32 0.0, %v3916
        %v3918 = vpop.f32.mrb[0].mxu0
        %v3919 = vadd.f32 0.0, %v3918
        %3920 = vmatprep.mubr.bf16.mxu0 %v610
        %3921 = vmatmul.mubr.bf16.gmra.mrb[0].mxu0 %v609
        %v3922 = vpop.f32.mrb[0].mxu0
        %v3923 = vadd.f32 0.0, %v3922
        %v3924 = vpop.f32.mrb[0].mxu0
        %v3925 = vadd.f32 0.0, %v3924
        %v3926 = vpop.f32.mrb[0].mxu0
        %v3927 = vadd.f32 0.0, %v3926
        %v3928 = vpop.f32.mrb[0].mxu0
        %v3929 = vadd.f32 0.0, %v3928
        %3930 = vmatprep.mubr.bf16.mxu0 %v612
        %3931 = vmatmul.mubr.bf16.gmra.mrb[0].mxu0 %v611
        %v3932 = vpop.f32.mrb[0].mxu0
        %v3933 = vadd.f32 0.0, %v3932
        %v3934 = vpop.f32.mrb[0].mxu0
        %v3935 = vadd.f32 0.0, %v3934
        %v3936 = vpop.f32.mrb[0].mxu0
        %v3937 = vadd.f32 0.0, %v3936
        %v3938 = vpop.f32.mrb[0].mxu0
        %v3939 = vadd.f32 0.0, %v3938
        %3940 = vmatprep.mubr.bf16.mxu0 %v614
        %3941 = vmatmul.mubr.bf16.gmra.mrb[0].mxu0 %v613
        %v3942 = vpop.f32.mrb[0].mxu0
        %v3943 = vadd.f32 0.0, %v3942
        %v3944 = vpop.f32.mrb[0].mxu0
        %v3945 = vadd.f32 0.0, %v3944
        %v3946 = vpop.f32.mrb[0].mxu0
        %v3947 = vadd.f32 0.0, %v3946
        %v3948 = vpop.f32.mrb[0].mxu0
        %v3949 = vadd.f32 0.0, %v3948
        %3950 = vmatprep.mubr.bf16.mxu0 %v616
        %3951 = vmatmul.mubr.bf16.gmra.mrb[0].mxu0 %v615
        %v3952 = vpop.f32.mrb[0].mxu0
        %v3953 = vadd.f32 0.0, %v3952
        %v3954 = vpop.f32.mrb[0].mxu0
        %v3955 = vadd.f32 0.0, %v3954
        %v3956 = vpop.f32.mrb[0].mxu0
        %v3957 = vadd.f32 0.0, %v3956
        %v3958 = vpop.f32.mrb[0].mxu0
        %v3959 = vadd.f32 0.0, %v3958
        %3960 = vmatprep.mubr.bf16.mxu0 %v618
        %3961 = vmatmul.mubr.bf16.gmra.mrb[0].mxu0 %v617
        %v3962 = vpop.f32.mrb[0].mxu0
        %v3963 = vadd.f32 0.0, %v3962
        %v3964 = vpop.f32.mrb[0].mxu0
        %v3965 = vadd.f32 0.0, %v3964
        %v3966 = vpop.f32.mrb[0].mxu0
        %v3967 = vadd.f32 0.0, %v3966
        %v3968 = vpop.f32.mrb[0].mxu0
        %v3969 = vadd.f32 0.0, %v3968
        %3970 = vdwg.mxu0
        %3971 = vmatprep.subr.bf16.mxu0 %v3477
        %3972 = vmatpush1.bf16.msra.mxu0 %v3476
        %3973 = vmatprep.subr.bf16.mxu0 %v3489
        %3974 = vmatpush1.bf16.msra.mxu0 %v3488
        %3975 = vmatprep.subr.bf16.mxu0 %v3501
        %3976 = vmatpush1.bf16.msra.mxu0 %v3500
        %3977 = vmatprep.subr.bf16.mxu0 %v3513
        %3978 = vmatpush1.bf16.msra.mxu0 %v3512
        %3979 = vmatprep.subr.bf16.mxu0 %v3525
        %3980 = vmatpush1.bf16.msra.mxu0 %v3524
        %3981 = vmatprep.subr.bf16.mxu0 %v3537
        %3982 = vmatpush1.bf16.msra.mxu0 %v3536
        %3983 = vmatprep.subr.bf16.mxu0 %v3549
        %3984 = vmatpush1.bf16.msra.mxu0 %v3548
        %3985 = vmatprep.subr.bf16.mxu0 %v3561
        %3986 = vmatpush1.bf16.msra.mxu0 %v3560
        %3987 = vmatprep.subr.bf16.mxu0 %v3573
        %3988 = vmatpush1.bf16.msra.mxu0 %v3572
        %3989 = vmatprep.subr.bf16.mxu0 %v3585
        %3990 = vmatpush1.bf16.msra.mxu0 %v3584
        %3991 = vmatprep.subr.bf16.mxu0 %v3597
        %3992 = vmatpush1.bf16.msra.mxu0 %v3596
        %3993 = vmatprep.subr.bf16.mxu0 %v3609
        %3994 = vmatpush1.bf16.msra.mxu0 %v3608
        %3995 = vmatprep.subr.bf16.mxu0 %v3621
        %3996 = vmatpush1.bf16.msra.mxu0 %v3620
        %3997 = vmatprep.subr.bf16.mxu0 %v3633
        %3998 = vmatpush1.bf16.msra.mxu0 %v3632
        %3999 = vmatprep.subr.bf16.mxu0 %v3645
        %4000 = vmatpush1.bf16.msra.mxu0 %v3644
        %4001 = vmatprep.subr.bf16.mxu0 %v3657
        %4002 = vmatpush1.bf16.msra.mxu0 %v3656
        %4003 = vmatprep.mubr.bf16.mxu0 %v604
        %4004 = vmatmul.mubr.bf16.gmra.mrb[0].mxu0 %v603
        %v4005 = vpop.f32.mrb[0].mxu0
        %v4006 = vadd.f32 0.0, %v4005
        %v4007 = vpop.f32.mrb[0].mxu0
        %v4008 = vadd.f32 0.0, %v4007
        %v4009 = vpop.f32.mrb[0].mxu0
        %v4010 = vadd.f32 0.0, %v4009
        %v4011 = vpop.f32.mrb[0].mxu0
        %v4012 = vadd.f32 0.0, %v4011
        %4013 = vmatprep.mubr.bf16.mxu0 %v606
        %4014 = vmatmul.mubr.bf16.gmra.mrb[0].mxu0 %v605
        %v4015 = vpop.f32.mrb[0].mxu0
        %v4016 = vadd.f32 0.0, %v4015
        %v4017 = vpop.f32.mrb[0].mxu0
        %v4018 = vadd.f32 0.0, %v4017
        %v4019 = vpop.f32.mrb[0].mxu0
        %v4020 = vadd.f32 0.0, %v4019
        %v4021 = vpop.f32.mrb[0].mxu0
        %v4022 = vadd.f32 0.0, %v4021
        %4023 = vmatprep.mubr.bf16.mxu0 %v608
        %4024 = vmatmul.mubr.bf16.gmra.mrb[0].mxu0 %v607
        %v4025 = vpop.f32.mrb[0].mxu0
        %v4026 = vadd.f32 0.0, %v4025
        %v4027 = vpop.f32.mrb[0].mxu0
        %v4028 = vadd.f32 0.0, %v4027
        %v4029 = vpop.f32.mrb[0].mxu0
        %v4030 = vadd.f32 0.0, %v4029
        %v4031 = vpop.f32.mrb[0].mxu0
        %v4032 = vadd.f32 0.0, %v4031
        %4033 = vmatprep.mubr.bf16.mxu0 %v610
        %4034 = vmatmul.mubr.bf16.gmra.mrb[0].mxu0 %v609
        %v4035 = vpop.f32.mrb[0].mxu0
        %v4036 = vadd.f32 0.0, %v4035
        %v4037 = vpop.f32.mrb[0].mxu0
        %v4038 = vadd.f32 0.0, %v4037
        %v4039 = vpop.f32.mrb[0].mxu0
        %v4040 = vadd.f32 0.0, %v4039
        %v4041 = vpop.f32.mrb[0].mxu0
        %v4042 = vadd.f32 0.0, %v4041
        %4043 = vmatprep.mubr.bf16.mxu0 %v612
        %4044 = vmatmul.mubr.bf16.gmra.mrb[0].mxu0 %v611
        %v4045 = vpop.f32.mrb[0].mxu0
        %v4046 = vadd.f32 0.0, %v4045
        %v4047 = vpop.f32.mrb[0].mxu0
        %v4048 = vadd.f32 0.0, %v4047
        %v4049 = vpop.f32.mrb[0].mxu0
        %v4050 = vadd.f32 0.0, %v4049
        %v4051 = vpop.f32.mrb[0].mxu0
        %v4052 = vadd.f32 0.0, %v4051
        %4053 = vmatprep.mubr.bf16.mxu0 %v614
        %4054 = vmatmul.mubr.bf16.gmra.mrb[0].mxu0 %v613
        %v4055 = vpop.f32.mrb[0].mxu0
        %v4056 = vadd.f32 0.0, %v4055
        %v4057 = vpop.f32.mrb[0].mxu0
        %v4058 = vadd.f32 0.0, %v4057
        %v4059 = vpop.f32.mrb[0].mxu0
        %v4060 = vadd.f32 0.0, %v4059
        %v4061 = vpop.f32.mrb[0].mxu0
        %v4062 = vadd.f32 0.0, %v4061
        %4063 = vmatprep.mubr.bf16.mxu0 %v616
        %4064 = vmatmul.mubr.bf16.gmra.mrb[0].mxu0 %v615
        %v4065 = vpop.f32.mrb[0].mxu0
        %v4066 = vadd.f32 0.0, %v4065
        %v4067 = vpop.f32.mrb[0].mxu0
        %v4068 = vadd.f32 0.0, %v4067
        %v4069 = vpop.f32.mrb[0].mxu0
        %v4070 = vadd.f32 0.0, %v4069
        %v4071 = vpop.f32.mrb[0].mxu0
        %v4072 = vadd.f32 0.0, %v4071
        %4073 = vmatprep.mubr.bf16.mxu0 %v618
        %4074 = vmatmul.mubr.bf16.gmra.mrb[0].mxu0 %v617
        %v4075 = vpop.f32.mrb[0].mxu0
        %v4076 = vadd.f32 0.0, %v4075
        %v4077 = vpop.f32.mrb[0].mxu0
        %v4078 = vadd.f32 0.0, %v4077
        %v4079 = vpop.f32.mrb[0].mxu0
        %v4080 = vadd.f32 0.0, %v4079
        %v4081 = vpop.f32.mrb[0].mxu0
        %v4082 = vadd.f32 0.0, %v4081
        %4083 = vdwg.mxu0
        %4084 = vmatprep.subr.bf16.mxu0 %v3479
        %4085 = vmatpush1.bf16.msra.mxu0 %v3478
        %4086 = vmatprep.subr.bf16.mxu0 %v3491
        %4087 = vmatpush1.bf16.msra.mxu0 %v3490
        %4088 = vmatprep.subr.bf16.mxu0 %v3503
        %4089 = vmatpush1.bf16.msra.mxu0 %v3502
        %4090 = vmatprep.subr.bf16.mxu0 %v3515
        %4091 = vmatpush1.bf16.msra.mxu0 %v3514
        %4092 = vmatprep.subr.bf16.mxu0 %v3527
        %4093 = vmatpush1.bf16.msra.mxu0 %v3526
        %4094 = vmatprep.subr.bf16.mxu0 %v3539
        %4095 = vmatpush1.bf16.msra.mxu0 %v3538
        %4096 = vmatprep.subr.bf16.mxu0 %v3551
        %4097 = vmatpush1.bf16.msra.mxu0 %v3550
        %4098 = vmatprep.subr.bf16.mxu0 %v3563
        %4099 = vmatpush1.bf16.msra.mxu0 %v3562
        %4100 = vmatprep.subr.bf16.mxu0 %v3575
        %4101 = vmatpush1.bf16.msra.mxu0 %v3574
        %4102 = vmatprep.subr.bf16.mxu0 %v3587
        %4103 = vmatpush1.bf16.msra.mxu0 %v3586
        %4104 = vmatprep.subr.bf16.mxu0 %v3599
        %4105 = vmatpush1.bf16.msra.mxu0 %v3598
        %4106 = vmatprep.subr.bf16.mxu0 %v3611
        %4107 = vmatpush1.bf16.msra.mxu0 %v3610
        %4108 = vmatprep.subr.bf16.mxu0 %v3623
        %4109 = vmatpush1.bf16.msra.mxu0 %v3622
        %4110 = vmatprep.subr.bf16.mxu0 %v3635
        %4111 = vmatpush1.bf16.msra.mxu0 %v3634
        %4112 = vmatprep.subr.bf16.mxu0 %v3647
        %4113 = vmatpush1.bf16.msra.mxu0 %v3646
        %4114 = vmatprep.subr.bf16.mxu0 %v3659
        %4115 = vmatpush1.bf16.msra.mxu0 %v3658
        %4116 = vmatprep.mubr.bf16.mxu0 %v604
        %4117 = vmatmul.mubr.bf16.gmra.mrb[0].mxu0 %v603
        %v4118 = vpop.f32.mrb[0].mxu0
        %v4119 = vadd.f32 0.0, %v4118
        %v4120 = vpop.f32.mrb[0].mxu0
        %v4121 = vadd.f32 0.0, %v4120
        %v4122 = vpop.f32.mrb[0].mxu0
        %v4123 = vadd.f32 0.0, %v4122
        %v4124 = vpop.f32.mrb[0].mxu0
        %v4125 = vadd.f32 0.0, %v4124
        %4126 = vmatprep.mubr.bf16.mxu0 %v606
        %4127 = vmatmul.mubr.bf16.gmra.mrb[0].mxu0 %v605
        %v4128 = vpop.f32.mrb[0].mxu0
        %v4129 = vadd.f32 0.0, %v4128
        %v4130 = vpop.f32.mrb[0].mxu0
        %v4131 = vadd.f32 0.0, %v4130
        %v4132 = vpop.f32.mrb[0].mxu0
        %v4133 = vadd.f32 0.0, %v4132
        %v4134 = vpop.f32.mrb[0].mxu0
        %v4135 = vadd.f32 0.0, %v4134
        %4136 = vmatprep.mubr.bf16.mxu0 %v608
        %4137 = vmatmul.mubr.bf16.gmra.mrb[0].mxu0 %v607
        %v4138 = vpop.f32.mrb[0].mxu0
        %v4139 = vadd.f32 0.0, %v4138
        %v4140 = vpop.f32.mrb[0].mxu0
        %v4141 = vadd.f32 0.0, %v4140
        %v4142 = vpop.f32.mrb[0].mxu0
        %v4143 = vadd.f32 0.0, %v4142
        %v4144 = vpop.f32.mrb[0].mxu0
        %v4145 = vadd.f32 0.0, %v4144
        %4146 = vmatprep.mubr.bf16.mxu0 %v610
        %4147 = vmatmul.mubr.bf16.gmra.mrb[0].mxu0 %v609
        %v4148 = vpop.f32.mrb[0].mxu0
        %v4149 = vadd.f32 0.0, %v4148
        %v4150 = vpop.f32.mrb[0].mxu0
        %v4151 = vadd.f32 0.0, %v4150
        %v4152 = vpop.f32.mrb[0].mxu0
        %v4153 = vadd.f32 0.0, %v4152
        %v4154 = vpop.f32.mrb[0].mxu0
        %v4155 = vadd.f32 0.0, %v4154
        %4156 = vmatprep.mubr.bf16.mxu0 %v612
        %4157 = vmatmul.mubr.bf16.gmra.mrb[0].mxu0 %v611
        %v4158 = vpop.f32.mrb[0].mxu0
        %v4159 = vadd.f32 0.0, %v4158
        %v4160 = vpop.f32.mrb[0].mxu0
        %v4161 = vadd.f32 0.0, %v4160
        %v4162 = vpop.f32.mrb[0].mxu0
        %v4163 = vadd.f32 0.0, %v4162
        %v4164 = vpop.f32.mrb[0].mxu0
        %v4165 = vadd.f32 0.0, %v4164
        %4166 = vmatprep.mubr.bf16.mxu0 %v614
        %4167 = vmatmul.mubr.bf16.gmra.mrb[0].mxu0 %v613
        %v4168 = vpop.f32.mrb[0].mxu0
        %v4169 = vadd.f32 0.0, %v4168
        %v4170 = vpop.f32.mrb[0].mxu0
        %v4171 = vadd.f32 0.0, %v4170
        %v4172 = vpop.f32.mrb[0].mxu0
        %v4173 = vadd.f32 0.0, %v4172
        %v4174 = vpop.f32.mrb[0].mxu0
        %v4175 = vadd.f32 0.0, %v4174
        %4176 = vmatprep.mubr.bf16.mxu0 %v616
        %4177 = vmatmul.mubr.bf16.gmra.mrb[0].mxu0 %v615
        %v4178 = vpop.f32.mrb[0].mxu0
        %v4179 = vadd.f32 0.0, %v4178
        %v4180 = vpop.f32.mrb[0].mxu0
        %v4181 = vadd.f32 0.0, %v4180
        %v4182 = vpop.f32.mrb[0].mxu0
        %v4183 = vadd.f32 0.0, %v4182
        %v4184 = vpop.f32.mrb[0].mxu0
        %v4185 = vadd.f32 0.0, %v4184
        %4186 = vmatprep.mubr.bf16.mxu0 %v618
        %4187 = vmatmul.mubr.bf16.gmra.mrb[0].mxu0 %v617
        %v4188 = vpop.f32.mrb[0].mxu0
        %v4189 = vadd.f32 0.0, %v4188
        %v4190 = vpop.f32.mrb[0].mxu0
        %v4191 = vadd.f32 0.0, %v4190
        %v4192 = vpop.f32.mrb[0].mxu0
        %v4193 = vadd.f32 0.0, %v4192
        %v4194 = vpop.f32.mrb[0].mxu0
        %v4195 = vadd.f32 0.0, %v4194
        %4196 = vdwg.mxu0
        %4197 = vmatprep.subr.bf16.mxu0 %v3481
        %4198 = vmatpush1.bf16.msra.mxu0 %v3480
        %4199 = vmatprep.subr.bf16.mxu0 %v3493
        %4200 = vmatpush1.bf16.msra.mxu0 %v3492
        %4201 = vmatprep.subr.bf16.mxu0 %v3505
        %4202 = vmatpush1.bf16.msra.mxu0 %v3504
        %4203 = vmatprep.subr.bf16.mxu0 %v3517
        %4204 = vmatpush1.bf16.msra.mxu0 %v3516
        %4205 = vmatprep.subr.bf16.mxu0 %v3529
        %4206 = vmatpush1.bf16.msra.mxu0 %v3528
        %4207 = vmatprep.subr.bf16.mxu0 %v3541
        %4208 = vmatpush1.bf16.msra.mxu0 %v3540
        %4209 = vmatprep.subr.bf16.mxu0 %v3553
        %4210 = vmatpush1.bf16.msra.mxu0 %v3552
        %4211 = vmatprep.subr.bf16.mxu0 %v3565
        %4212 = vmatpush1.bf16.msra.mxu0 %v3564
        %4213 = vmatprep.subr.bf16.mxu0 %v3577
        %4214 = vmatpush1.bf16.msra.mxu0 %v3576
        %4215 = vmatprep.subr.bf16.mxu0 %v3589
        %4216 = vmatpush1.bf16.msra.mxu0 %v3588
        %4217 = vmatprep.subr.bf16.mxu0 %v3601
        %4218 = vmatpush1.bf16.msra.mxu0 %v3600
        %4219 = vmatprep.subr.bf16.mxu0 %v3613
        %4220 = vmatpush1.bf16.msra.mxu0 %v3612
        %4221 = vmatprep.subr.bf16.mxu0 %v3625
        %4222 = vmatpush1.bf16.msra.mxu0 %v3624
        %4223 = vmatprep.subr.bf16.mxu0 %v3637
        %4224 = vmatpush1.bf16.msra.mxu0 %v3636
        %4225 = vmatprep.subr.bf16.mxu0 %v3649
        %4226 = vmatpush1.bf16.msra.mxu0 %v3648
        %4227 = vmatprep.subr.bf16.mxu0 %v3661
        %4228 = vmatpush1.bf16.msra.mxu0 %v3660
        %4229 = vmatprep.mubr.bf16.mxu0 %v604
        %4230 = vmatmul.mubr.bf16.gmra.mrb[0].mxu0 %v603
        %v4231 = vpop.f32.mrb[0].mxu0
        %v4232 = vadd.f32 0.0, %v4231
        %v4233 = vpop.f32.mrb[0].mxu0
        %v4234 = vadd.f32 0.0, %v4233
        %v4235 = vpop.f32.mrb[0].mxu0
        %v4236 = vadd.f32 0.0, %v4235
        %v4237 = vpop.f32.mrb[0].mxu0
        %v4238 = vadd.f32 0.0, %v4237
        %4239 = vmatprep.mubr.bf16.mxu0 %v606
        %4240 = vmatmul.mubr.bf16.gmra.mrb[0].mxu0 %v605
        %v4241 = vpop.f32.mrb[0].mxu0
        %v4242 = vadd.f32 0.0, %v4241
        %v4243 = vpop.f32.mrb[0].mxu0
        %v4244 = vadd.f32 0.0, %v4243
        %v4245 = vpop.f32.mrb[0].mxu0
        %v4246 = vadd.f32 0.0, %v4245
        %v4247 = vpop.f32.mrb[0].mxu0
        %v4248 = vadd.f32 0.0, %v4247
        %4249 = vmatprep.mubr.bf16.mxu0 %v608
        %4250 = vmatmul.mubr.bf16.gmra.mrb[0].mxu0 %v607
        %v4251 = vpop.f32.mrb[0].mxu0
        %v4252 = vadd.f32 0.0, %v4251
        %v4253 = vpop.f32.mrb[0].mxu0
        %v4254 = vadd.f32 0.0, %v4253
        %v4255 = vpop.f32.mrb[0].mxu0
        %v4256 = vadd.f32 0.0, %v4255
        %v4257 = vpop.f32.mrb[0].mxu0
        %v4258 = vadd.f32 0.0, %v4257
        %4259 = vmatprep.mubr.bf16.mxu0 %v610
        %4260 = vmatmul.mubr.bf16.gmra.mrb[0].mxu0 %v609
        %v4261 = vpop.f32.mrb[0].mxu0
        %v4262 = vadd.f32 0.0, %v4261
        %v4263 = vpop.f32.mrb[0].mxu0
        %v4264 = vadd.f32 0.0, %v4263
        %v4265 = vpop.f32.mrb[0].mxu0
        %v4266 = vadd.f32 0.0, %v4265
        %v4267 = vpop.f32.mrb[0].mxu0
        %v4268 = vadd.f32 0.0, %v4267
        %4269 = vmatprep.mubr.bf16.mxu0 %v612
        %4270 = vmatmul.mubr.bf16.gmra.mrb[0].mxu0 %v611
        %v4271 = vpop.f32.mrb[0].mxu0
        %v4272 = vadd.f32 0.0, %v4271
        %v4273 = vpop.f32.mrb[0].mxu0
        %v4274 = vadd.f32 0.0, %v4273
        %v4275 = vpop.f32.mrb[0].mxu0
        %v4276 = vadd.f32 0.0, %v4275
        %v4277 = vpop.f32.mrb[0].mxu0
        %v4278 = vadd.f32 0.0, %v4277
        %4279 = vmatprep.mubr.bf16.mxu0 %v614
        %4280 = vmatmul.mubr.bf16.gmra.mrb[0].mxu0 %v613
        %v4281 = vpop.f32.mrb[0].mxu0
        %v4282 = vadd.f32 0.0, %v4281
        %v4283 = vpop.f32.mrb[0].mxu0
        %v4284 = vadd.f32 0.0, %v4283
        %v4285 = vpop.f32.mrb[0].mxu0
        %v4286 = vadd.f32 0.0, %v4285
        %v4287 = vpop.f32.mrb[0].mxu0
        %v4288 = vadd.f32 0.0, %v4287
        %4289 = vmatprep.mubr.bf16.mxu0 %v616
        %4290 = vmatmul.mubr.bf16.gmra.mrb[0].mxu0 %v615
        %v4291 = vpop.f32.mrb[0].mxu0
        %v4292 = vadd.f32 0.0, %v4291
        %v4293 = vpop.f32.mrb[0].mxu0
        %v4294 = vadd.f32 0.0, %v4293
        %v4295 = vpop.f32.mrb[0].mxu0
        %v4296 = vadd.f32 0.0, %v4295
        %v4297 = vpop.f32.mrb[0].mxu0
        %v4298 = vadd.f32 0.0, %v4297
        %4299 = vmatprep.mubr.bf16.mxu0 %v618
        %4300 = vmatmul.mubr.bf16.gmra.mrb[0].mxu0 %v617
        %v4301 = vpop.f32.mrb[0].mxu0
        %v4302 = vadd.f32 0.0, %v4301
        %v4303 = vpop.f32.mrb[0].mxu0
        %v4304 = vadd.f32 0.0, %v4303
        %v4305 = vpop.f32.mrb[0].mxu0
        %v4306 = vadd.f32 0.0, %v4305
        %v4307 = vpop.f32.mrb[0].mxu0
        %v4308 = vadd.f32 0.0, %v4307
        %4309 = vdwg.mxu0
        %4310 = vmatprep.subr.bf16.mxu0 %v3483
        %4311 = vmatpush1.bf16.msra.mxu0 %v3482
        %4312 = vmatprep.subr.bf16.mxu0 %v3495
        %4313 = vmatpush1.bf16.msra.mxu0 %v3494
        %4314 = vmatprep.subr.bf16.mxu0 %v3507
        %4315 = vmatpush1.bf16.msra.mxu0 %v3506
        %4316 = vmatprep.subr.bf16.mxu0 %v3519
        %4317 = vmatpush1.bf16.msra.mxu0 %v3518
        %4318 = vmatprep.subr.bf16.mxu0 %v3531
        %4319 = vmatpush1.bf16.msra.mxu0 %v3530
        %4320 = vmatprep.subr.bf16.mxu0 %v3543
        %4321 = vmatpush1.bf16.msra.mxu0 %v3542
        %4322 = vmatprep.subr.bf16.mxu0 %v3555
        %4323 = vmatpush1.bf16.msra.mxu0 %v3554
        %4324 = vmatprep.subr.bf16.mxu0 %v3567
        %4325 = vmatpush1.bf16.msra.mxu0 %v3566
        %4326 = vmatprep.subr.bf16.mxu0 %v3579
        %4327 = vmatpush1.bf16.msra.mxu0 %v3578
        %4328 = vmatprep.subr.bf16.mxu0 %v3591
        %4329 = vmatpush1.bf16.msra.mxu0 %v3590
        %4330 = vmatprep.subr.bf16.mxu0 %v3603
        %4331 = vmatpush1.bf16.msra.mxu0 %v3602
        %4332 = vmatprep.subr.bf16.mxu0 %v3615
        %4333 = vmatpush1.bf16.msra.mxu0 %v3614
        %4334 = vmatprep.subr.bf16.mxu0 %v3627
        %4335 = vmatpush1.bf16.msra.mxu0 %v3626
        %4336 = vmatprep.subr.bf16.mxu0 %v3639
        %4337 = vmatpush1.bf16.msra.mxu0 %v3638
        %4338 = vmatprep.subr.bf16.mxu0 %v3651
        %4339 = vmatpush1.bf16.msra.mxu0 %v3650
        %4340 = vmatprep.subr.bf16.mxu0 %v3663
        %4341 = vmatpush1.bf16.msra.mxu0 %v3662
        %4342 = vmatprep.mubr.bf16.mxu0 %v604
        %4343 = vmatmul.mubr.bf16.gmra.mrb[0].mxu0 %v603
        %v4344 = vpop.f32.mrb[0].mxu0
        %v4345 = vadd.f32 0.0, %v4344
        %v4346 = vpop.f32.mrb[0].mxu0
        %v4347 = vadd.f32 0.0, %v4346
        %v4348 = vpop.f32.mrb[0].mxu0
        %v4349 = vadd.f32 0.0, %v4348
        %v4350 = vpop.f32.mrb[0].mxu0
        %v4351 = vadd.f32 0.0, %v4350
        %4352 = vmatprep.mubr.bf16.mxu0 %v606
        %4353 = vmatmul.mubr.bf16.gmra.mrb[0].mxu0 %v605
        %v4354 = vpop.f32.mrb[0].mxu0
        %v4355 = vadd.f32 0.0, %v4354
        %v4356 = vpop.f32.mrb[0].mxu0
        %v4357 = vadd.f32 0.0, %v4356
        %v4358 = vpop.f32.mrb[0].mxu0
        %v4359 = vadd.f32 0.0, %v4358
        %v4360 = vpop.f32.mrb[0].mxu0
        %v4361 = vadd.f32 0.0, %v4360
        %4362 = vmatprep.mubr.bf16.mxu0 %v608
        %4363 = vmatmul.mubr.bf16.gmra.mrb[0].mxu0 %v607
        %v4364 = vpop.f32.mrb[0].mxu0
        %v4365 = vadd.f32 0.0, %v4364
        %v4366 = vpop.f32.mrb[0].mxu0
        %v4367 = vadd.f32 0.0, %v4366
        %v4368 = vpop.f32.mrb[0].mxu0
        %v4369 = vadd.f32 0.0, %v4368
        %v4370 = vpop.f32.mrb[0].mxu0
        %v4371 = vadd.f32 0.0, %v4370
        %4372 = vmatprep.mubr.bf16.mxu0 %v610
        %4373 = vmatmul.mubr.bf16.gmra.mrb[0].mxu0 %v609
        %v4374 = vpop.f32.mrb[0].mxu0
        %v4375 = vadd.f32 0.0, %v4374
        %v4376 = vpop.f32.mrb[0].mxu0
        %v4377 = vadd.f32 0.0, %v4376
        %v4378 = vpop.f32.mrb[0].mxu0
        %v4379 = vadd.f32 0.0, %v4378
        %v4380 = vpop.f32.mrb[0].mxu0
        %v4381 = vadd.f32 0.0, %v4380
        %4382 = vmatprep.mubr.bf16.mxu0 %v612
        %4383 = vmatmul.mubr.bf16.gmra.mrb[0].mxu0 %v611
        %v4384 = vpop.f32.mrb[0].mxu0
        %v4385 = vadd.f32 0.0, %v4384
        %v4386 = vpop.f32.mrb[0].mxu0
        %v4387 = vadd.f32 0.0, %v4386
        %v4388 = vpop.f32.mrb[0].mxu0
        %v4389 = vadd.f32 0.0, %v4388
        %v4390 = vpop.f32.mrb[0].mxu0
        %v4391 = vadd.f32 0.0, %v4390
        %4392 = vmatprep.mubr.bf16.mxu0 %v614
        %4393 = vmatmul.mubr.bf16.gmra.mrb[0].mxu0 %v613
        %v4394 = vpop.f32.mrb[0].mxu0
        %v4395 = vadd.f32 0.0, %v4394
        %v4396 = vpop.f32.mrb[0].mxu0
        %v4397 = vadd.f32 0.0, %v4396
        %v4398 = vpop.f32.mrb[0].mxu0
        %v4399 = vadd.f32 0.0, %v4398
        %v4400 = vpop.f32.mrb[0].mxu0
        %v4401 = vadd.f32 0.0, %v4400
        %4402 = vmatprep.mubr.bf16.mxu0 %v616
        %4403 = vmatmul.mubr.bf16.gmra.mrb[0].mxu0 %v615
        %v4404 = vpop.f32.mrb[0].mxu0
        %v4405 = vadd.f32 0.0, %v4404
        %v4406 = vpop.f32.mrb[0].mxu0
        %v4407 = vadd.f32 0.0, %v4406
        %v4408 = vpop.f32.mrb[0].mxu0
        %v4409 = vadd.f32 0.0, %v4408
        %v4410 = vpop.f32.mrb[0].mxu0
        %v4411 = vadd.f32 0.0, %v4410
        %4412 = vmatprep.mubr.bf16.mxu0 %v618
        %4413 = vmatmul.mubr.bf16.gmra.mrb[0].mxu0 %v617
        %v4414 = vpop.f32.mrb[0].mxu0
        %v4415 = vadd.f32 0.0, %v4414
        %v4416 = vpop.f32.mrb[0].mxu0
        %v4417 = vadd.f32 0.0, %v4416
        %v4418 = vpop.f32.mrb[0].mxu0
        %v4419 = vadd.f32 0.0, %v4418
        %v4420 = vpop.f32.mrb[0].mxu0
        %v4421 = vadd.f32 0.0, %v4420
        %4422 = vdwg.mxu0
        %4423 = vmatprep.subr.bf16.mxu0 %v3485
        %4424 = vmatpush1.bf16.msra.mxu0 %v3484
        %4425 = vmatprep.subr.bf16.mxu0 %v3497
        %4426 = vmatpush1.bf16.msra.mxu0 %v3496
        %4427 = vmatprep.subr.bf16.mxu0 %v3509
        %4428 = vmatpush1.bf16.msra.mxu0 %v3508
        %4429 = vmatprep.subr.bf16.mxu0 %v3521
        %4430 = vmatpush1.bf16.msra.mxu0 %v3520
        %4431 = vmatprep.subr.bf16.mxu0 %v3533
        %4432 = vmatpush1.bf16.msra.mxu0 %v3532
        %4433 = vmatprep.subr.bf16.mxu0 %v3545
        %4434 = vmatpush1.bf16.msra.mxu0 %v3544
        %4435 = vmatprep.subr.bf16.mxu0 %v3557
        %4436 = vmatpush1.bf16.msra.mxu0 %v3556
        %4437 = vmatprep.subr.bf16.mxu0 %v3569
        %4438 = vmatpush1.bf16.msra.mxu0 %v3568
        %4439 = vmatprep.subr.bf16.mxu0 %v3581
        %4440 = vmatpush1.bf16.msra.mxu0 %v3580
        %4441 = vmatprep.subr.bf16.mxu0 %v3593
        %4442 = vmatpush1.bf16.msra.mxu0 %v3592
        %4443 = vmatprep.subr.bf16.mxu0 %v3605
        %4444 = vmatpush1.bf16.msra.mxu0 %v3604
        %4445 = vmatprep.subr.bf16.mxu0 %v3617
        %4446 = vmatpush1.bf16.msra.mxu0 %v3616
        %4447 = vmatprep.subr.bf16.mxu0 %v3629
        %4448 = vmatpush1.bf16.msra.mxu0 %v3628
        %4449 = vmatprep.subr.bf16.mxu0 %v3641
        %4450 = vmatpush1.bf16.msra.mxu0 %v3640
        %4451 = vmatprep.subr.bf16.mxu0 %v3653
        %4452 = vmatpush1.bf16.msra.mxu0 %v3652
        %4453 = vmatprep.subr.bf16.mxu0 %v3665
        %4454 = vmatpush1.bf16.msra.mxu0 %v3664
        %4455 = vmatprep.mubr.bf16.mxu0 %v604
        %4456 = vmatmul.mubr.bf16.gmra.mrb[0].mxu0 %v603
        %v4457 = vpop.f32.mrb[0].mxu0
        %v4458 = vadd.f32 0.0, %v4457
        %v4459 = vpop.f32.mrb[0].mxu0
        %v4460 = vadd.f32 0.0, %v4459
        %v4461 = vpop.f32.mrb[0].mxu0
        %v4462 = vadd.f32 0.0, %v4461
        %v4463 = vpop.f32.mrb[0].mxu0
        %v4464 = vadd.f32 0.0, %v4463
        %4465 = vmatprep.mubr.bf16.mxu0 %v606
        %4466 = vmatmul.mubr.bf16.gmra.mrb[0].mxu0 %v605
        %v4467 = vpop.f32.mrb[0].mxu0
        %v4468 = vadd.f32 0.0, %v4467
        %v4469 = vpop.f32.mrb[0].mxu0
        %v4470 = vadd.f32 0.0, %v4469
        %v4471 = vpop.f32.mrb[0].mxu0
        %v4472 = vadd.f32 0.0, %v4471
        %v4473 = vpop.f32.mrb[0].mxu0
        %v4474 = vadd.f32 0.0, %v4473
        %4475 = vmatprep.mubr.bf16.mxu0 %v608
        %4476 = vmatmul.mubr.bf16.gmra.mrb[0].mxu0 %v607
        %v4477 = vpop.f32.mrb[0].mxu0
        %v4478 = vadd.f32 0.0, %v4477
        %v4479 = vpop.f32.mrb[0].mxu0
        %v4480 = vadd.f32 0.0, %v4479
        %v4481 = vpop.f32.mrb[0].mxu0
        %v4482 = vadd.f32 0.0, %v4481
        %v4483 = vpop.f32.mrb[0].mxu0
        %v4484 = vadd.f32 0.0, %v4483
        %4485 = vmatprep.mubr.bf16.mxu0 %v610
        %4486 = vmatmul.mubr.bf16.gmra.mrb[0].mxu0 %v609
        %v4487 = vpop.f32.mrb[0].mxu0
        %v4488 = vadd.f32 0.0, %v4487
        %v4489 = vpop.f32.mrb[0].mxu0
        %v4490 = vadd.f32 0.0, %v4489
        %v4491 = vpop.f32.mrb[0].mxu0
        %v4492 = vadd.f32 0.0, %v4491
        %v4493 = vpop.f32.mrb[0].mxu0
        %v4494 = vadd.f32 0.0, %v4493
        %4495 = vmatprep.mubr.bf16.mxu0 %v612
        %4496 = vmatmul.mubr.bf16.gmra.mrb[0].mxu0 %v611
        %v4497 = vpop.f32.mrb[0].mxu0
        %v4498 = vadd.f32 0.0, %v4497
        %v4499 = vpop.f32.mrb[0].mxu0
        %v4500 = vadd.f32 0.0, %v4499
        %v4501 = vpop.f32.mrb[0].mxu0
        %v4502 = vadd.f32 0.0, %v4501
        %v4503 = vpop.f32.mrb[0].mxu0
        %v4504 = vadd.f32 0.0, %v4503
        %4505 = vmatprep.mubr.bf16.mxu0 %v614
        %4506 = vmatmul.mubr.bf16.gmra.mrb[0].mxu0 %v613
        %v4507 = vpop.f32.mrb[0].mxu0
        %v4508 = vadd.f32 0.0, %v4507
        %v4509 = vpop.f32.mrb[0].mxu0
        %v4510 = vadd.f32 0.0, %v4509
        %v4511 = vpop.f32.mrb[0].mxu0
        %v4512 = vadd.f32 0.0, %v4511
        %v4513 = vpop.f32.mrb[0].mxu0
        %v4514 = vadd.f32 0.0, %v4513
        %4515 = vmatprep.mubr.bf16.mxu0 %v616
        %4516 = vmatmul.mubr.bf16.gmra.mrb[0].mxu0 %v615
        %v4517 = vpop.f32.mrb[0].mxu0
        %v4518 = vadd.f32 0.0, %v4517
        %v4519 = vpop.f32.mrb[0].mxu0
        %v4520 = vadd.f32 0.0, %v4519
        %v4521 = vpop.f32.mrb[0].mxu0
        %v4522 = vadd.f32 0.0, %v4521
        %v4523 = vpop.f32.mrb[0].mxu0
        %v4524 = vadd.f32 0.0, %v4523
        %4525 = vmatprep.mubr.bf16.mxu0 %v618
        %4526 = vmatmul.mubr.bf16.gmra.mrb[0].mxu0 %v617
        %v4527 = vpop.f32.mrb[0].mxu0
        %v4528 = vadd.f32 0.0, %v4527
        %v4529 = vpop.f32.mrb[0].mxu0
        %v4530 = vadd.f32 0.0, %v4529
        %v4531 = vpop.f32.mrb[0].mxu0
        %v4532 = vadd.f32 0.0, %v4531
        %v4533 = vpop.f32.mrb[0].mxu0
        %v4534 = vadd.f32 0.0, %v4533
        %4535 = vdwg.mxu0
        %v4536 = vmax.f32 %v3893, %v4008
        %v4537 = vmax.f32 %v3895, %v4119
        %v4538 = vmax.f32 %v4006, %v4121
        %v4539 = vmax.f32 %v3897, %v4012
        %v4540 = vmax.f32 %v3899, %v4123
        %v4541 = vmax.f32 %v4010, %v4125
        %v4542 = vmax.f32 %v3903, %v4018
        %v4543 = vmax.f32 %v3905, %v4129
        %v4544 = vmax.f32 %v4016, %v4131
        %v4545 = vmax.f32 %v3907, %v4022
        %v4546 = vmax.f32 %v3909, %v4133
        %v4547 = vmax.f32 %v4020, %v4135
        %v4548 = vmax.f32 %v3913, %v4028
        %v4549 = vmax.f32 %v3915, %v4139
        %v4550 = vmax.f32 %v4026, %v4141
        %v4551 = vmax.f32 %v3917, %v4032
        %v4552 = vmax.f32 %v3919, %v4143
        %v4553 = vmax.f32 %v4030, %v4145
        %v4554 = vmax.f32 %v3923, %v4038
        %v4555 = vmax.f32 %v3925, %v4149
        %v4556 = vmax.f32 %v4036, %v4151
        %v4557 = vmax.f32 %v3927, %v4042
        %v4558 = vmax.f32 %v3929, %v4153
        %v4559 = vmax.f32 %v4040, %v4155
        %v4560 = vmax.f32 %v3933, %v4048
        %v4561 = vmax.f32 %v3935, %v4159
        %v4562 = vmax.f32 %v4046, %v4161
        %v4563 = vmax.f32 %v3937, %v4052
        %v4564 = vmax.f32 %v3939, %v4163
        %v4565 = vmax.f32 %v4050, %v4165
        %v4566 = vmax.f32 %v3943, %v4058
        %v4567 = vmax.f32 %v3945, %v4169
        %v4568 = vmax.f32 %v4056, %v4171
        %v4569 = vmax.f32 %v3947, %v4062
        %v4570 = vmax.f32 %v3949, %v4173
        %v4571 = vmax.f32 %v4060, %v4175
        %v4572 = vmax.f32 %v3953, %v4068
        %v4573 = vmax.f32 %v3955, %v4179
        %v4574 = vmax.f32 %v4066, %v4181
        %v4575 = vmax.f32 %v3957, %v4072
        %v4576 = vmax.f32 %v3959, %v4183
        %v4577 = vmax.f32 %v4070, %v4185
        %v4578 = vmax.f32 %v3963, %v4078
        %v4579 = vmax.f32 %v3965, %v4189
        %v4580 = vmax.f32 %v4076, %v4191
        %v4581 = vmax.f32 %v3967, %v4082
        %v4582 = vmax.f32 %v3969, %v4193
        %v4583 = vmax.f32 %v4080, %v4195
        %v4584 = vmax.f32 %v4232, %v4347
        %v4585 = vmax.f32 %v4234, %v4458
        %v4586 = vmax.f32 %v4345, %v4460
        %v4587 = vmax.f32 %v4236, %v4351
        %v4588 = vmax.f32 %v4238, %v4462
        %v4589 = vmax.f32 %v4349, %v4464
        %v4590 = vmax.f32 %v4242, %v4357
        %v4591 = vmax.f32 %v4244, %v4468
        %v4592 = vmax.f32 %v4355, %v4470
        %v4593 = vmax.f32 %v4246, %v4361
        %v4594 = vmax.f32 %v4248, %v4472
        %v4595 = vmax.f32 %v4359, %v4474
        %v4596 = vmax.f32 %v4252, %v4367
        %v4597 = vmax.f32 %v4254, %v4478
        %v4598 = vmax.f32 %v4365, %v4480
        %v4599 = vmax.f32 %v4256, %v4371
        %v4600 = vmax.f32 %v4258, %v4482
        %v4601 = vmax.f32 %v4369, %v4484
        %v4602 = vmax.f32 %v4262, %v4377
        %v4603 = vmax.f32 %v4264, %v4488
        %v4604 = vmax.f32 %v4375, %v4490
        %v4605 = vmax.f32 %v4266, %v4381
        %v4606 = vmax.f32 %v4268, %v4492
        %v4607 = vmax.f32 %v4379, %v4494
        %v4608 = vmax.f32 %v4272, %v4387
        %v4609 = vmax.f32 %v4274, %v4498
        %v4610 = vmax.f32 %v4385, %v4500
        %v4611 = vmax.f32 %v4276, %v4391
        %v4612 = vmax.f32 %v4278, %v4502
        %v4613 = vmax.f32 %v4389, %v4504
        %v4614 = vmax.f32 %v4282, %v4397
        %v4615 = vmax.f32 %v4284, %v4508
        %v4616 = vmax.f32 %v4395, %v4510
        %v4617 = vmax.f32 %v4286, %v4401
        %v4618 = vmax.f32 %v4288, %v4512
        %v4619 = vmax.f32 %v4399, %v4514
        %v4620 = vmax.f32 %v4292, %v4407
        %v4621 = vmax.f32 %v4294, %v4518
        %v4622 = vmax.f32 %v4405, %v4520
        %v4623 = vmax.f32 %v4296, %v4411
        %v4624 = vmax.f32 %v4298, %v4522
        %v4625 = vmax.f32 %v4409, %v4524
        %v4626 = vmax.f32 %v4302, %v4417
        %v4627 = vmax.f32 %v4304, %v4528
        %v4628 = vmax.f32 %v4415, %v4530
        %v4629 = vmax.f32 %v4306, %v4421
        %v4630 = vmax.f32 %v4308, %v4532
        %v4631 = vmax.f32 %v4419, %v4534
        %v4632 = vmax.f32 %v4536, %v4584
        %v4633 = vmax.f32 %v4537, %v4585
        %v4634 = vmax.f32 %v4538, %v4586
        %v4635 = vmax.f32 %v4539, %v4587
        %v4636 = vmax.f32 %v4540, %v4588
        %v4637 = vmax.f32 %v4541, %v4589
        %v4638 = vmax.f32 %v4542, %v4590
        %v4639 = vmax.f32 %v4543, %v4591
        %v4640 = vmax.f32 %v4544, %v4592
        %v4641 = vmax.f32 %v4545, %v4593
        %v4642 = vmax.f32 %v4546, %v4594
        %v4643 = vmax.f32 %v4547, %v4595
        %v4644 = vmax.f32 %v4548, %v4596
        %v4645 = vmax.f32 %v4549, %v4597
        %v4646 = vmax.f32 %v4550, %v4598
        %v4647 = vmax.f32 %v4551, %v4599
        %v4648 = vmax.f32 %v4552, %v4600
        %v4649 = vmax.f32 %v4553, %v4601
        %v4650 = vmax.f32 %v4554, %v4602
        %v4651 = vmax.f32 %v4555, %v4603
        %v4652 = vmax.f32 %v4556, %v4604
        %v4653 = vmax.f32 %v4557, %v4605
        %v4654 = vmax.f32 %v4558, %v4606
        %v4655 = vmax.f32 %v4559, %v4607
        %v4656 = vmax.f32 %v4560, %v4608
        %v4657 = vmax.f32 %v4561, %v4609
        %v4658 = vmax.f32 %v4562, %v4610
        %v4659 = vmax.f32 %v4563, %v4611
        %v4660 = vmax.f32 %v4564, %v4612
        %v4661 = vmax.f32 %v4565, %v4613
        %v4662 = vmax.f32 %v4566, %v4614
        %v4663 = vmax.f32 %v4567, %v4615
        %v4664 = vmax.f32 %v4568, %v4616
        %v4665 = vmax.f32 %v4569, %v4617
        %v4666 = vmax.f32 %v4570, %v4618
        %v4667 = vmax.f32 %v4571, %v4619
        %v4668 = vmax.f32 %v4572, %v4620
        %v4669 = vmax.f32 %v4573, %v4621
        %v4670 = vmax.f32 %v4574, %v4622
        %v4671 = vmax.f32 %v4575, %v4623
        %v4672 = vmax.f32 %v4576, %v4624
        %v4673 = vmax.f32 %v4577, %v4625
        %v4674 = vmax.f32 %v4578, %v4626
        %v4675 = vmax.f32 %v4579, %v4627
        %v4676 = vmax.f32 %v4580, %v4628
        %v4677 = vmax.f32 %v4581, %v4629
        %v4678 = vmax.f32 %v4582, %v4630
        %v4679 = vmax.f32 %v4583, %v4631
        %v4680 = vld [vmem:[%s5] sm:$0x7]
        %v4682 = vlaneseq
        %v4683 = vshrl.u32 %v4682, 7
        %v4684 = vsub.s32 0, %v4683
        %v4685 = vrot.slane %v4680, %v4684
        %v4686 = vlaneseq
        %v4687 = vshrl.u32 %v4686, 7
        %v4688 = vsub.s32 1, %v4687
        %v4689 = vrot.slane %v4680, %v4688
        %v4690 = vlaneseq
        %v4691 = vshrl.u32 %v4690, 7
        %v4692 = vsub.s32 2, %v4691
        %v4693 = vrot.slane %v4680, %v4692
        %v4697 = vadd.f32 %v4632, %v4685
        %v4698 = vadd.f32 %v4633, %v4689
        %v4699 = vadd.f32 %v4634, %v4693
        %v4700 = vadd.f32 %v4635, %v4685
        %v4701 = vadd.f32 %v4636, %v4689
        %v4702 = vadd.f32 %v4637, %v4693
        %v4703 = vadd.f32 %v4638, %v4685
        %v4704 = vadd.f32 %v4639, %v4689
        %v4705 = vadd.f32 %v4640, %v4693
        %v4706 = vadd.f32 %v4641, %v4685
        %v4707 = vadd.f32 %v4642, %v4689
        %v4708 = vadd.f32 %v4643, %v4693
        %v4709 = vadd.f32 %v4644, %v4685
        %v4710 = vadd.f32 %v4645, %v4689
        %v4711 = vadd.f32 %v4646, %v4693
        %v4712 = vadd.f32 %v4647, %v4685
        %v4713 = vadd.f32 %v4648, %v4689
        %v4714 = vadd.f32 %v4649, %v4693
        %v4715 = vadd.f32 %v4650, %v4685
        %v4716 = vadd.f32 %v4651, %v4689
        %v4717 = vadd.f32 %v4652, %v4693
        %v4718 = vadd.f32 %v4653, %v4685
        %v4719 = vadd.f32 %v4654, %v4689
        %v4720 = vadd.f32 %v4655, %v4693
        %v4721 = vadd.f32 %v4656, %v4685
        %v4722 = vadd.f32 %v4657, %v4689
        %v4723 = vadd.f32 %v4658, %v4693
        %v4724 = vadd.f32 %v4659, %v4685
        %v4725 = vadd.f32 %v4660, %v4689
        %v4726 = vadd.f32 %v4661, %v4693
        %v4727 = vadd.f32 %v4662, %v4685
        %v4728 = vadd.f32 %v4663, %v4689
        %v4729 = vadd.f32 %v4664, %v4693
        %v4730 = vadd.f32 %v4665, %v4685
        %v4731 = vadd.f32 %v4666, %v4689
        %v4732 = vadd.f32 %v4667, %v4693
        %v4733 = vadd.f32 %v4668, %v4685
        %v4734 = vadd.f32 %v4669, %v4689
        %v4735 = vadd.f32 %v4670, %v4693
        %v4736 = vadd.f32 %v4671, %v4685
        %v4737 = vadd.f32 %v4672, %v4689
        %v4738 = vadd.f32 %v4673, %v4693
        %v4739 = vadd.f32 %v4674, %v4685
        %v4740 = vadd.f32 %v4675, %v4689
        %v4741 = vadd.f32 %v4676, %v4693
        %v4742 = vadd.f32 %v4677, %v4685
        %v4743 = vadd.f32 %v4678, %v4689
        %v4744 = vadd.f32 %v4679, %v4693
        %v4745 = vmax.f32 %v4697, 0.0
        %v4746 = vmax.f32 %v4698, 0.0
        %v4747 = vmax.f32 %v4699, 0.0
        %v4748 = vmax.f32 %v4700, 0.0
        %v4749 = vmax.f32 %v4701, 0.0
        %v4750 = vmax.f32 %v4702, 0.0
        %v4751 = vmax.f32 %v4703, 0.0
        %v4752 = vmax.f32 %v4704, 0.0
        %v4753 = vmax.f32 %v4705, 0.0
        %v4754 = vmax.f32 %v4706, 0.0
        %v4755 = vmax.f32 %v4707, 0.0
        %v4756 = vmax.f32 %v4708, 0.0
        %v4757 = vmax.f32 %v4709, 0.0
        %v4758 = vmax.f32 %v4710, 0.0
        %v4759 = vmax.f32 %v4711, 0.0
        %v4760 = vmax.f32 %v4712, 0.0
        %v4761 = vmax.f32 %v4713, 0.0
        %v4762 = vmax.f32 %v4714, 0.0
        %v4763 = vmax.f32 %v4715, 0.0
        %v4764 = vmax.f32 %v4716, 0.0
        %v4765 = vmax.f32 %v4717, 0.0
        %v4766 = vmax.f32 %v4718, 0.0
        %v4767 = vmax.f32 %v4719, 0.0
        %v4768 = vmax.f32 %v4720, 0.0
        %v4769 = vmax.f32 %v4721, 0.0
        %v4770 = vmax.f32 %v4722, 0.0
        %v4771 = vmax.f32 %v4723, 0.0
        %v4772 = vmax.f32 %v4724, 0.0
        %v4773 = vmax.f32 %v4725, 0.0
        %v4774 = vmax.f32 %v4726, 0.0
        %v4775 = vmax.f32 %v4727, 0.0
        %v4776 = vmax.f32 %v4728, 0.0
        %v4777 = vmax.f32 %v4729, 0.0
        %v4778 = vmax.f32 %v4730, 0.0
        %v4779 = vmax.f32 %v4731, 0.0
        %v4780 = vmax.f32 %v4732, 0.0
        %v4781 = vmax.f32 %v4733, 0.0
        %v4782 = vmax.f32 %v4734, 0.0
        %v4783 = vmax.f32 %v4735, 0.0
        %v4784 = vmax.f32 %v4736, 0.0
        %v4785 = vmax.f32 %v4737, 0.0
        %v4786 = vmax.f32 %v4738, 0.0
        %v4787 = vmax.f32 %v4739, 0.0
        %v4788 = vmax.f32 %v4740, 0.0
        %v4789 = vmax.f32 %v4741, 0.0
        %v4790 = vmax.f32 %v4742, 0.0
        %v4791 = vmax.f32 %v4743, 0.0
        %v4792 = vmax.f32 %v4744, 0.0
        %v4793 = vpack.c.bf16 %v2661, %v2658
        %v4794 = vpack.c.bf16 %v2662, %v2659
        %v4795 = vpack.c.bf16 %v2663, %v2660
        %v4796 = vpack.c.bf16 %v2667, %v2664
        %v4797 = vpack.c.bf16 %v2668, %v2665
        %v4798 = vpack.c.bf16 %v2669, %v2666
        %v4799 = vpack.c.bf16 %v2673, %v2670
        %v4800 = vpack.c.bf16 %v2674, %v2671
        %v4801 = vpack.c.bf16 %v2675, %v2672
        %v4802 = vpack.c.bf16 %v2679, %v2676
        %v4803 = vpack.c.bf16 %v2680, %v2677
        %v4804 = vpack.c.bf16 %v2681, %v2678
        %v4805 = vpack.c.bf16 %v2685, %v2682
        %v4806 = vpack.c.bf16 %v2686, %v2683
        %v4807 = vpack.c.bf16 %v2687, %v2684
        %v4808 = vpack.c.bf16 %v2691, %v2688
        %v4809 = vpack.c.bf16 %v2692, %v2689
        %v4810 = vpack.c.bf16 %v2693, %v2690
        %v4811 = vpack.c.bf16 %v2697, %v2694
        %v4812 = vpack.c.bf16 %v2698, %v2695
        %v4813 = vpack.c.bf16 %v2699, %v2696
        %v4814 = vpack.c.bf16 %v2703, %v2700
        %v4815 = vpack.c.bf16 %v2704, %v2701
        %v4816 = vpack.c.bf16 %v2705, %v2702
        %v4817 = vld [vmem:[#allocation10] sm:$0xff]
        %v4818 = vld [vmem:[#allocation10 + $0x8] sm:$0xff]
        %v4819 = vld [vmem:[#allocation10 + $0x10] sm:$0xff]
        %v4820 = vld [vmem:[#allocation10 + $0x18] sm:$0xff]
        %v4821 = vld [vmem:[#allocation10 + $0x20] sm:$0xff]
        %v4822 = vld [vmem:[#allocation10 + $0x28] sm:$0xff]
        %v4823 = vld [vmem:[#allocation10 + $0x30] sm:$0xff]
        %v4824 = vld [vmem:[#allocation10 + $0x38] sm:$0xff]
        %v4825 = vld [vmem:[#allocation10 + $0x40] sm:$0xff]
        %v4826 = vld [vmem:[#allocation10 + $0x48] sm:$0xff]
        %v4827 = vld [vmem:[#allocation10 + $0x50] sm:$0xff]
        %v4828 = vld [vmem:[#allocation10 + $0x58] sm:$0xff]
        %v4829 = vld [vmem:[#allocation10 + $0x60] sm:$0xff]
        %v4830 = vld [vmem:[#allocation10 + $0x68] sm:$0xff]
        %v4831 = vld [vmem:[#allocation10 + $0x70] sm:$0xff]
        %v4832 = vld [vmem:[#allocation10 + $0x78] sm:$0xff]
        %v4833 = vld [vmem:[#allocation10 + $0x80] sm:$0xff]
        %v4834 = vld [vmem:[#allocation10 + $0x88] sm:$0xff]
        %v4835 = vld [vmem:[#allocation10 + $0x90] sm:$0xff]
        %v4836 = vld [vmem:[#allocation10 + $0x98] sm:$0xff]
        %v4837 = vld [vmem:[#allocation10 + $0xa0] sm:$0xff]
        %v4838 = vld [vmem:[#allocation10 + $0xa8] sm:$0xff]
        %v4839 = vld [vmem:[#allocation10 + $0xb0] sm:$0xff]
        %v4840 = vld [vmem:[#allocation10 + $0xb8] sm:$0xff]
        %v4841 = vld [vmem:[#allocation10 + $0xc0] sm:$0xff]
        %v4842 = vld [vmem:[#allocation10 + $0xc8] sm:$0xff]
        %v4843 = vld [vmem:[#allocation10 + $0xd0] sm:$0xff]
        %v4844 = vld [vmem:[#allocation10 + $0xd8] sm:$0xff]
        %v4845 = vld [vmem:[#allocation10 + $0xe0] sm:$0xff]
        %v4846 = vld [vmem:[#allocation10 + $0xe8] sm:$0xff]
        %v4847 = vld [vmem:[#allocation10 + $0xf0] sm:$0xff]
        %v4848 = vld [vmem:[#allocation10 + $0xf8] sm:$0xff]
        %v4849 = vld [vmem:[#allocation10 + $0x100] sm:$0xff]
        %v4850 = vld [vmem:[#allocation10 + $0x108] sm:$0xff]
        %v4851 = vld [vmem:[#allocation10 + $0x110] sm:$0xff]
        %v4852 = vld [vmem:[#allocation10 + $0x118] sm:$0xff]
        %v4853 = vld [vmem:[#allocation10 + $0x120] sm:$0xff]
        %v4854 = vld [vmem:[#allocation10 + $0x128] sm:$0xff]
        %v4855 = vld [vmem:[#allocation10 + $0x130] sm:$0xff]
        %v4856 = vld [vmem:[#allocation10 + $0x138] sm:$0xff]
        %v4857 = vld [vmem:[#allocation10 + $0x140] sm:$0xff]
        %v4858 = vld [vmem:[#allocation10 + $0x148] sm:$0xff]
        %v4859 = vld [vmem:[#allocation10 + $0x150] sm:$0xff]
        %v4860 = vld [vmem:[#allocation10 + $0x158] sm:$0xff]
        %v4861 = vld [vmem:[#allocation10 + $0x160] sm:$0xff]
        %v4862 = vld [vmem:[#allocation10 + $0x168] sm:$0xff]
        %v4863 = vld [vmem:[#allocation10 + $0x170] sm:$0xff]
        %v4864 = vld [vmem:[#allocation10 + $0x178] sm:$0xff]
        %v4865 = vpack.c.bf16 %v4748, %v4745
        %v4866 = vpack.c.bf16 %v4749, %v4746
        %v4867 = vpack.c.bf16 %v4750, %v4747
        %v4868 = vpack.c.bf16 %v4754, %v4751
        %v4869 = vpack.c.bf16 %v4755, %v4752
        %v4870 = vpack.c.bf16 %v4756, %v4753
        %v4871 = vpack.c.bf16 %v4760, %v4757
        %v4872 = vpack.c.bf16 %v4761, %v4758
        %v4873 = vpack.c.bf16 %v4762, %v4759
        %v4874 = vpack.c.bf16 %v4766, %v4763
        %v4875 = vpack.c.bf16 %v4767, %v4764
        %v4876 = vpack.c.bf16 %v4768, %v4765
        %v4877 = vpack.c.bf16 %v4772, %v4769
        %v4878 = vpack.c.bf16 %v4773, %v4770
        %v4879 = vpack.c.bf16 %v4774, %v4771
        %v4880 = vpack.c.bf16 %v4778, %v4775
        %v4881 = vpack.c.bf16 %v4779, %v4776
        %v4882 = vpack.c.bf16 %v4780, %v4777
        %v4883 = vpack.c.bf16 %v4784, %v4781
        %v4884 = vpack.c.bf16 %v4785, %v4782
        %v4885 = vpack.c.bf16 %v4786, %v4783
        %v4886 = vpack.c.bf16 %v4790, %v4787
        %v4887 = vpack.c.bf16 %v4791, %v4788
        %v4888 = vpack.c.bf16 %v4792, %v4789
        %v4889 = vld [vmem:[#allocation11] sm:$0xff]
        %v4890 = vld [vmem:[#allocation11 + $0x8] sm:$0xff]
        %v4891 = vld [vmem:[#allocation11 + $0x10] sm:$0xff]
        %v4892 = vld [vmem:[#allocation11 + $0x18] sm:$0xff]
        %v4893 = vld [vmem:[#allocation11 + $0x20] sm:$0xff]
        %v4894 = vld [vmem:[#allocation11 + $0x28] sm:$0xff]
        %v4895 = vld [vmem:[#allocation11 + $0x30] sm:$0xff]
        %v4896 = vld [vmem:[#allocation11 + $0x38] sm:$0xff]
        %v4897 = vld [vmem:[#allocation11 + $0x40] sm:$0xff]
        %v4898 = vld [vmem:[#allocation11 + $0x48] sm:$0xff]
        %v4899 = vld [vmem:[#allocation11 + $0x50] sm:$0xff]
        %v4900 = vld [vmem:[#allocation11 + $0x58] sm:$0xff]
        %v4901 = vld [vmem:[#allocation11 + $0x60] sm:$0xff]
        %v4902 = vld [vmem:[#allocation11 + $0x68] sm:$0xff]
        %v4903 = vld [vmem:[#allocation11 + $0x70] sm:$0xff]
        %v4904 = vld [vmem:[#allocation11 + $0x78] sm:$0xff]
        %v4905 = vld [vmem:[#allocation11 + $0x80] sm:$0xff]
        %v4906 = vld [vmem:[#allocation11 + $0x88] sm:$0xff]
        %v4907 = vld [vmem:[#allocation11 + $0x90] sm:$0xff]
        %v4908 = vld [vmem:[#allocation11 + $0x98] sm:$0xff]
        %v4909 = vld [vmem:[#allocation11 + $0xa0] sm:$0xff]
        %v4910 = vld [vmem:[#allocation11 + $0xa8] sm:$0xff]
        %v4911 = vld [vmem:[#allocation11 + $0xb0] sm:$0xff]
        %v4912 = vld [vmem:[#allocation11 + $0xb8] sm:$0xff]
        %v4913 = vld [vmem:[#allocation11 + $0xc0] sm:$0xff]
        %v4914 = vld [vmem:[#allocation11 + $0xc8] sm:$0xff]
        %v4915 = vld [vmem:[#allocation11 + $0xd0] sm:$0xff]
        %v4916 = vld [vmem:[#allocation11 + $0xd8] sm:$0xff]
        %v4917 = vld [vmem:[#allocation11 + $0xe0] sm:$0xff]
        %v4918 = vld [vmem:[#allocation11 + $0xe8] sm:$0xff]
        %v4919 = vld [vmem:[#allocation11 + $0xf0] sm:$0xff]
        %v4920 = vld [vmem:[#allocation11 + $0xf8] sm:$0xff]
        %v4921 = vld [vmem:[#allocation11 + $0x100] sm:$0xff]
        %v4922 = vld [vmem:[#allocation11 + $0x108] sm:$0xff]
        %v4923 = vld [vmem:[#allocation11 + $0x110] sm:$0xff]
        %v4924 = vld [vmem:[#allocation11 + $0x118] sm:$0xff]
        %v4925 = vld [vmem:[#allocation11 + $0x120] sm:$0xff]
        %v4926 = vld [vmem:[#allocation11 + $0x128] sm:$0xff]
        %v4927 = vld [vmem:[#allocation11 + $0x130] sm:$0xff]
        %v4928 = vld [vmem:[#allocation11 + $0x138] sm:$0xff]
        %v4929 = vld [vmem:[#allocation11 + $0x140] sm:$0xff]
        %v4930 = vld [vmem:[#allocation11 + $0x148] sm:$0xff]
        %v4931 = vld [vmem:[#allocation11 + $0x150] sm:$0xff]
        %v4932 = vld [vmem:[#allocation11 + $0x158] sm:$0xff]
        %v4933 = vld [vmem:[#allocation11 + $0x160] sm:$0xff]
        %v4934 = vld [vmem:[#allocation11 + $0x168] sm:$0xff]
        %v4935 = vld [vmem:[#allocation11 + $0x170] sm:$0xff]
        %v4936 = vld [vmem:[#allocation11 + $0x178] sm:$0xff]
        %v4985 = vunpack.c.l.b16 %v4889
        %v4986 = vunpack.c.h.b16 %v4889
        %v4987 = vunpack.c.l.b16 %v4890
        %v4988 = vunpack.c.h.b16 %v4890
        %v4989 = vunpack.c.l.b16 %v4891
        %v4990 = vunpack.c.h.b16 %v4891
        %v4991 = vunpack.c.l.b16 %v4892
        %v4992 = vunpack.c.h.b16 %v4892
        %v4993 = vunpack.c.l.b16 %v4893
        %v4994 = vunpack.c.h.b16 %v4893
        %v4995 = vunpack.c.l.b16 %v4894
        %v4996 = vunpack.c.h.b16 %v4894
        %v4997 = vunpack.c.l.b16 %v4895
        %v4998 = vunpack.c.h.b16 %v4895
        %v4999 = vunpack.c.l.b16 %v4896
        %v5000 = vunpack.c.h.b16 %v4896
        %v5001 = vunpack.c.l.b16 %v4897
        %v5002 = vunpack.c.h.b16 %v4897
        %v5003 = vunpack.c.l.b16 %v4898
        %v5004 = vunpack.c.h.b16 %v4898
        %v5005 = vunpack.c.l.b16 %v4899
        %v5006 = vunpack.c.h.b16 %v4899
        %v5007 = vunpack.c.l.b16 %v4900
        %v5008 = vunpack.c.h.b16 %v4900
        %v5009 = vunpack.c.l.b16 %v4901
        %v5010 = vunpack.c.h.b16 %v4901
        %v5011 = vunpack.c.l.b16 %v4902
        %v5012 = vunpack.c.h.b16 %v4902
        %v5013 = vunpack.c.l.b16 %v4903
        %v5014 = vunpack.c.h.b16 %v4903
        %v5015 = vunpack.c.l.b16 %v4904
        %v5016 = vunpack.c.h.b16 %v4904
        %v5017 = vunpack.c.l.b16 %v4905
        %v5018 = vunpack.c.h.b16 %v4905
        %v5019 = vunpack.c.l.b16 %v4906
        %v5020 = vunpack.c.h.b16 %v4906
        %v5021 = vunpack.c.l.b16 %v4907
        %v5022 = vunpack.c.h.b16 %v4907
        %v5023 = vunpack.c.l.b16 %v4908
        %v5024 = vunpack.c.h.b16 %v4908
        %v5025 = vunpack.c.l.b16 %v4909
        %v5026 = vunpack.c.h.b16 %v4909
        %v5027 = vunpack.c.l.b16 %v4910
        %v5028 = vunpack.c.h.b16 %v4910
        %v5029 = vunpack.c.l.b16 %v4911
        %v5030 = vunpack.c.h.b16 %v4911
        %v5031 = vunpack.c.l.b16 %v4912
        %v5032 = vunpack.c.h.b16 %v4912
        %v5033 = vunpack.c.l.b16 %v4913
        %v5034 = vunpack.c.h.b16 %v4913
        %v5035 = vunpack.c.l.b16 %v4914
        %v5036 = vunpack.c.h.b16 %v4914
        %v5037 = vunpack.c.l.b16 %v4915
        %v5038 = vunpack.c.h.b16 %v4915
        %v5039 = vunpack.c.l.b16 %v4916
        %v5040 = vunpack.c.h.b16 %v4916
        %v5041 = vunpack.c.l.b16 %v4917
        %v5042 = vunpack.c.h.b16 %v4917
        %v5043 = vunpack.c.l.b16 %v4918
        %v5044 = vunpack.c.h.b16 %v4918
        %v5045 = vunpack.c.l.b16 %v4919
        %v5046 = vunpack.c.h.b16 %v4919
        %v5047 = vunpack.c.l.b16 %v4920
        %v5048 = vunpack.c.h.b16 %v4920
        %v5049 = vunpack.c.l.b16 %v4921
        %v5050 = vunpack.c.h.b16 %v4921
        %v5051 = vunpack.c.l.b16 %v4922
        %v5052 = vunpack.c.h.b16 %v4922
        %v5053 = vunpack.c.l.b16 %v4923
        %v5054 = vunpack.c.h.b16 %v4923
        %v5055 = vunpack.c.l.b16 %v4924
        %v5056 = vunpack.c.h.b16 %v4924
        %v5057 = vunpack.c.l.b16 %v4925
        %v5058 = vunpack.c.h.b16 %v4925
        %v5059 = vunpack.c.l.b16 %v4926
        %v5060 = vunpack.c.h.b16 %v4926
        %v5061 = vunpack.c.l.b16 %v4927
        %v5062 = vunpack.c.h.b16 %v4927
        %v5063 = vunpack.c.l.b16 %v4928
        %v5064 = vunpack.c.h.b16 %v4928
        %v5065 = vunpack.c.l.b16 %v4929
        %v5066 = vunpack.c.h.b16 %v4929
        %v5067 = vunpack.c.l.b16 %v4930
        %v5068 = vunpack.c.h.b16 %v4930
        %v5069 = vunpack.c.l.b16 %v4931
        %v5070 = vunpack.c.h.b16 %v4931
        %v5071 = vunpack.c.l.b16 %v4932
        %v5072 = vunpack.c.h.b16 %v4932
        %v5073 = vunpack.c.l.b16 %v4933
        %v5074 = vunpack.c.h.b16 %v4933
        %v5075 = vunpack.c.l.b16 %v4934
        %v5076 = vunpack.c.h.b16 %v4934
        %v5077 = vunpack.c.l.b16 %v4935
        %v5078 = vunpack.c.h.b16 %v4935
        %v5079 = vunpack.c.l.b16 %v4936
        %v5080 = vunpack.c.h.b16 %v4936
        %v5081 = vpack.c.b16 %v4987, %v4985
        %v5082 = vpack.c.b16 %v4988, %v4986
        %v5083 = vpack.c.b16 %v4991, %v4989
        %v5084 = vpack.c.b16 %v4992, %v4990
        %v5085 = vpack.c.b16 %v4995, %v4993
        %v5086 = vpack.c.b16 %v4996, %v4994
        %v5087 = vpack.c.b16 %v4999, %v4997
        %v5088 = vpack.c.b16 %v5000, %v4998
        %v5089 = vpack.c.b16 %v5003, %v5001
        %v5090 = vpack.c.b16 %v5004, %v5002
        %v5091 = vpack.c.b16 %v5007, %v5005
        %v5092 = vpack.c.b16 %v5008, %v5006
        %v5093 = vpack.c.b16 %v5011, %v5009
        %v5094 = vpack.c.b16 %v5012, %v5010
        %v5095 = vpack.c.b16 %v5015, %v5013
        %v5096 = vpack.c.b16 %v5016, %v5014
        %v5097 = vpack.c.b16 %v5019, %v5017
        %v5098 = vpack.c.b16 %v5020, %v5018
        %v5099 = vpack.c.b16 %v5023, %v5021
        %v5100 = vpack.c.b16 %v5024, %v5022
        %v5101 = vpack.c.b16 %v5027, %v5025
        %v5102 = vpack.c.b16 %v5028, %v5026
        %v5103 = vpack.c.b16 %v5031, %v5029
        %v5104 = vpack.c.b16 %v5032, %v5030
        %v5105 = vpack.c.b16 %v5035, %v5033
        %v5106 = vpack.c.b16 %v5036, %v5034
        %v5107 = vpack.c.b16 %v5039, %v5037
        %v5108 = vpack.c.b16 %v5040, %v5038
        %v5109 = vpack.c.b16 %v5043, %v5041
        %v5110 = vpack.c.b16 %v5044, %v5042
        %v5111 = vpack.c.b16 %v5047, %v5045
        %v5112 = vpack.c.b16 %v5048, %v5046
        %v5113 = vpack.c.b16 %v5051, %v5049
        %v5114 = vpack.c.b16 %v5052, %v5050
        %v5115 = vpack.c.b16 %v5055, %v5053
        %v5116 = vpack.c.b16 %v5056, %v5054
        %v5117 = vpack.c.b16 %v5059, %v5057
        %v5118 = vpack.c.b16 %v5060, %v5058
        %v5119 = vpack.c.b16 %v5063, %v5061
        %v5120 = vpack.c.b16 %v5064, %v5062
        %v5121 = vpack.c.b16 %v5067, %v5065
        %v5122 = vpack.c.b16 %v5068, %v5066
        %v5123 = vpack.c.b16 %v5071, %v5069
        %v5124 = vpack.c.b16 %v5072, %v5070
        %v5125 = vpack.c.b16 %v5075, %v5073
        %v5126 = vpack.c.b16 %v5076, %v5074
        %v5127 = vpack.c.b16 %v5079, %v5077
        %v5128 = vpack.c.b16 %v5080, %v5078
        %5177 = vmatprep.subr.bf16.mxu0 %v5082
        %5178 = vmatpush1.bf16.msra.mxu0 %v5081
        %5179 = vmatprep.subr.bf16.mxu0 %v5084
        %5180 = vmatpush1.bf16.msra.mxu0 %v5083
        %5181 = vmatprep.subr.bf16.mxu0 %v5086
        %5182 = vmatpush1.bf16.msra.mxu0 %v5085
        %5183 = vmatprep.subr.bf16.mxu0 %v5088
        %5184 = vmatpush1.bf16.msra.mxu0 %v5087
        %5185 = vmatprep.subr.bf16.mxu0 %v5090
        %5186 = vmatpush1.bf16.msra.mxu0 %v5089
        %5187 = vmatprep.subr.bf16.mxu0 %v5092
        %5188 = vmatpush1.bf16.msra.mxu0 %v5091
        %5189 = vmatprep.subr.bf16.mxu0 %v5094
        %5190 = vmatpush1.bf16.msra.mxu0 %v5093
        %5191 = vmatprep.subr.bf16.mxu0 %v5096
        %5192 = vmatpush1.bf16.msra.mxu0 %v5095
        %5193 = vmatprep.subr.bf16.mxu0 %v5098
        %5194 = vmatpush1.bf16.msra.mxu0 %v5097
        %5195 = vmatprep.subr.bf16.mxu0 %v5100
        %5196 = vmatpush1.bf16.msra.mxu0 %v5099
        %5197 = vmatprep.subr.bf16.mxu0 %v5102
        %5198 = vmatpush1.bf16.msra.mxu0 %v5101
        %5199 = vmatprep.subr.bf16.mxu0 %v5104
        %5200 = vmatpush1.bf16.msra.mxu0 %v5103
        %5201 = vmatprep.subr.bf16.mxu0 %v5106
        %5202 = vmatpush1.bf16.msra.mxu0 %v5105
        %5203 = vmatprep.subr.bf16.mxu0 %v5108
        %5204 = vmatpush1.bf16.msra.mxu0 %v5107
        %5205 = vmatprep.subr.bf16.mxu0 %v5110
        %5206 = vmatpush1.bf16.msra.mxu0 %v5109
        %5207 = vmatprep.subr.bf16.mxu0 %v5112
        %5208 = vmatpush1.bf16.msra.mxu0 %v5111
        %5209 = vmatprep.mubr.bf16.mxu0 %v4866
        %5210 = vmatmul.mubr.bf16.gmra.mrb[0].mxu0 %v4865
        %v5211 = vpop.f32.mrb[0].mxu0
        %v5212 = vadd.f32 0.0, %v5211
        %v5213 = vpop.f32.mrb[0].mxu0
        %v5214 = vadd.f32 0.0, %v5213
        %v5215 = vpop.f32.mrb[0].mxu0
        %v5216 = vadd.f32 0.0, %v5215
        %v5217 = vpop.f32.mrb[0].mxu0
        %v5218 = vadd.f32 0.0, %v5217
        %5219 = vmatprep.mubr.bf16.mxu0 %v4869
        %5220 = vmatmul.mubr.bf16.gmra.mrb[0].mxu0 %v4868
        %v5221 = vpop.f32.mrb[0].mxu0
        %v5222 = vadd.f32 0.0, %v5221
        %v5223 = vpop.f32.mrb[0].mxu0
        %v5224 = vadd.f32 0.0, %v5223
        %v5225 = vpop.f32.mrb[0].mxu0
        %v5226 = vadd.f32 0.0, %v5225
        %v5227 = vpop.f32.mrb[0].mxu0
        %v5228 = vadd.f32 0.0, %v5227
        %5229 = vmatprep.mubr.bf16.mxu0 %v4872
        %5230 = vmatmul.mubr.bf16.gmra.mrb[0].mxu0 %v4871
        %v5231 = vpop.f32.mrb[0].mxu0
        %v5232 = vadd.f32 0.0, %v5231
        %v5233 = vpop.f32.mrb[0].mxu0
        %v5234 = vadd.f32 0.0, %v5233
        %v5235 = vpop.f32.mrb[0].mxu0
        %v5236 = vadd.f32 0.0, %v5235
        %v5237 = vpop.f32.mrb[0].mxu0
        %v5238 = vadd.f32 0.0, %v5237
        %5239 = vmatprep.mubr.bf16.mxu0 %v4875
        %5240 = vmatmul.mubr.bf16.gmra.mrb[0].mxu0 %v4874
        %v5241 = vpop.f32.mrb[0].mxu0
        %v5242 = vadd.f32 0.0, %v5241
        %v5243 = vpop.f32.mrb[0].mxu0
        %v5244 = vadd.f32 0.0, %v5243
        %v5245 = vpop.f32.mrb[0].mxu0
        %v5246 = vadd.f32 0.0, %v5245
        %v5247 = vpop.f32.mrb[0].mxu0
        %v5248 = vadd.f32 0.0, %v5247
        %5249 = vmatprep.mubr.bf16.mxu0 %v4878
        %5250 = vmatmul.mubr.bf16.gmra.mrb[0].mxu0 %v4877
        %v5251 = vpop.f32.mrb[0].mxu0
        %v5252 = vadd.f32 0.0, %v5251
        %v5253 = vpop.f32.mrb[0].mxu0
        %v5254 = vadd.f32 0.0, %v5253
        %v5255 = vpop.f32.mrb[0].mxu0
        %v5256 = vadd.f32 0.0, %v5255
        %v5257 = vpop.f32.mrb[0].mxu0
        %v5258 = vadd.f32 0.0, %v5257
        %5259 = vmatprep.mubr.bf16.mxu0 %v4881
        %5260 = vmatmul.mubr.bf16.gmra.mrb[0].mxu0 %v4880
        %v5261 = vpop.f32.mrb[0].mxu0
        %v5262 = vadd.f32 0.0, %v5261
        %v5263 = vpop.f32.mrb[0].mxu0
        %v5264 = vadd.f32 0.0, %v5263
        %v5265 = vpop.f32.mrb[0].mxu0
        %v5266 = vadd.f32 0.0, %v5265
        %v5267 = vpop.f32.mrb[0].mxu0
        %v5268 = vadd.f32 0.0, %v5267
        %5269 = vmatprep.mubr.bf16.mxu0 %v4884
        %5270 = vmatmul.mubr.bf16.gmra.mrb[0].mxu0 %v4883
        %v5271 = vpop.f32.mrb[0].mxu0
        %v5272 = vadd.f32 0.0, %v5271
        %v5273 = vpop.f32.mrb[0].mxu0
        %v5274 = vadd.f32 0.0, %v5273
        %v5275 = vpop.f32.mrb[0].mxu0
        %v5276 = vadd.f32 0.0, %v5275
        %v5277 = vpop.f32.mrb[0].mxu0
        %v5278 = vadd.f32 0.0, %v5277
        %5279 = vmatprep.mubr.bf16.mxu0 %v4887
        %5280 = vmatmul.mubr.bf16.gmra.mrb[0].mxu0 %v4886
        %v5281 = vpop.f32.mrb[0].mxu0
        %v5282 = vadd.f32 0.0, %v5281
        %v5283 = vpop.f32.mrb[0].mxu0
        %v5284 = vadd.f32 0.0, %v5283
        %v5285 = vpop.f32.mrb[0].mxu0
        %v5286 = vadd.f32 0.0, %v5285
        %v5287 = vpop.f32.mrb[0].mxu0
        %v5288 = vadd.f32 0.0, %v5287
        %5289 = vdwg.mxu0
        %5290 = vmatprep.subr.bf16.mxu0 %v5114
        %5291 = vmatpush1.bf16.msra.mxu0 %v5113
        %5292 = vmatprep.subr.bf16.mxu0 %v5116
        %5293 = vmatpush1.bf16.msra.mxu0 %v5115
        %5294 = vmatprep.subr.bf16.mxu0 %v5118
        %5295 = vmatpush1.bf16.msra.mxu0 %v5117
        %5296 = vmatprep.subr.bf16.mxu0 %v5120
        %5297 = vmatpush1.bf16.msra.mxu0 %v5119
        %5298 = vmatprep.subr.bf16.mxu0 %v5122
        %5299 = vmatpush1.bf16.msra.mxu0 %v5121
        %5300 = vmatprep.subr.bf16.mxu0 %v5124
        %5301 = vmatpush1.bf16.msra.mxu0 %v5123
        %5302 = vmatprep.subr.bf16.mxu0 %v5126
        %5303 = vmatpush1.bf16.msra.mxu0 %v5125
        %5304 = vmatprep.subr.bf16.mxu0 %v5128
        %5305 = vmatpush1.bf16.msra.mxu0 %v5127
        %5306 = vmatprep.subr.bf16.mxu0 0
        %5307 = vmatpush1.bf16.msra.mxu0 0
        %5308 = vmatprep.subr.bf16.mxu0 0
        %5309 = vmatpush1.bf16.msra.mxu0 0
        %5310 = vmatprep.subr.bf16.mxu0 0
        %5311 = vmatpush1.bf16.msra.mxu0 0
        %5312 = vmatprep.subr.bf16.mxu0 0
        %5313 = vmatpush1.bf16.msra.mxu0 0
        %5314 = vmatprep.subr.bf16.mxu0 0
        %5315 = vmatpush1.bf16.msra.mxu0 0
        %5316 = vmatprep.subr.bf16.mxu0 0
        %5317 = vmatpush1.bf16.msra.mxu0 0
        %5318 = vmatprep.subr.bf16.mxu0 0
        %5319 = vmatpush1.bf16.msra.mxu0 0
        %5320 = vmatprep.subr.bf16.mxu0 0
        %5321 = vmatpush1.bf16.msra.mxu0 0
        %5322 = vmatprep.mubr.bf16.mxu0 0
        %5323 = vmatmul.mubr.bf16.gmra.mrb[0].mxu0 %v4867
        %v5324 = vpop.f32.mrb[0].mxu0
        %v5325 = vadd.f32 %v5212, %v5324
        %v5326 = vpop.f32.mrb[0].mxu0
        %v5327 = vadd.f32 %v5214, %v5326
        %v5328 = vpop.f32.mrb[0].mxu0
        %v5329 = vadd.f32 %v5216, %v5328
        %v5330 = vpop.f32.mrb[0].mxu0
        %v5331 = vadd.f32 %v5218, %v5330
        %5332 = vmatprep.mubr.bf16.mxu0 0
        %5333 = vmatmul.mubr.bf16.gmra.mrb[0].mxu0 %v4870
        %v5334 = vpop.f32.mrb[0].mxu0
        %v5335 = vadd.f32 %v5222, %v5334
        %v5336 = vpop.f32.mrb[0].mxu0
        %v5337 = vadd.f32 %v5224, %v5336
        %v5338 = vpop.f32.mrb[0].mxu0
        %v5339 = vadd.f32 %v5226, %v5338
        %v5340 = vpop.f32.mrb[0].mxu0
        %v5341 = vadd.f32 %v5228, %v5340
        %5342 = vmatprep.mubr.bf16.mxu0 0
        %5343 = vmatmul.mubr.bf16.gmra.mrb[0].mxu0 %v4873
        %v5344 = vpop.f32.mrb[0].mxu0
        %v5345 = vadd.f32 %v5232, %v5344
        %v5346 = vpop.f32.mrb[0].mxu0
        %v5347 = vadd.f32 %v5234, %v5346
        %v5348 = vpop.f32.mrb[0].mxu0
        %v5349 = vadd.f32 %v5236, %v5348
        %v5350 = vpop.f32.mrb[0].mxu0
        %v5351 = vadd.f32 %v5238, %v5350
        %5352 = vmatprep.mubr.bf16.mxu0 0
        %5353 = vmatmul.mubr.bf16.gmra.mrb[0].mxu0 %v4876
        %v5354 = vpop.f32.mrb[0].mxu0
        %v5355 = vadd.f32 %v5242, %v5354
        %v5356 = vpop.f32.mrb[0].mxu0
        %v5357 = vadd.f32 %v5244, %v5356
        %v5358 = vpop.f32.mrb[0].mxu0
        %v5359 = vadd.f32 %v5246, %v5358
        %v5360 = vpop.f32.mrb[0].mxu0
        %v5361 = vadd.f32 %v5248, %v5360
        %5362 = vmatprep.mubr.bf16.mxu0 0
        %5363 = vmatmul.mubr.bf16.gmra.mrb[0].mxu0 %v4879
        %v5364 = vpop.f32.mrb[0].mxu0
        %v5365 = vadd.f32 %v5252, %v5364
        %v5366 = vpop.f32.mrb[0].mxu0
        %v5367 = vadd.f32 %v5254, %v5366
        %v5368 = vpop.f32.mrb[0].mxu0
        %v5369 = vadd.f32 %v5256, %v5368
        %v5370 = vpop.f32.mrb[0].mxu0
        %v5371 = vadd.f32 %v5258, %v5370
        %5372 = vmatprep.mubr.bf16.mxu0 0
        %5373 = vmatmul.mubr.bf16.gmra.mrb[0].mxu0 %v4882
        %v5374 = vpop.f32.mrb[0].mxu0
        %v5375 = vadd.f32 %v5262, %v5374
        %v5376 = vpop.f32.mrb[0].mxu0
        %v5377 = vadd.f32 %v5264, %v5376
        %v5378 = vpop.f32.mrb[0].mxu0
        %v5379 = vadd.f32 %v5266, %v5378
        %v5380 = vpop.f32.mrb[0].mxu0
        %v5381 = vadd.f32 %v5268, %v5380
        %5382 = vmatprep.mubr.bf16.mxu0 0
        %5383 = vmatmul.mubr.bf16.gmra.mrb[0].mxu0 %v4885
        %v5384 = vpop.f32.mrb[0].mxu0
        %v5385 = vadd.f32 %v5272, %v5384
        %v5386 = vpop.f32.mrb[0].mxu0
        %v5387 = vadd.f32 %v5274, %v5386
        %v5388 = vpop.f32.mrb[0].mxu0
        %v5389 = vadd.f32 %v5276, %v5388
        %v5390 = vpop.f32.mrb[0].mxu0
        %v5391 = vadd.f32 %v5278, %v5390
        %5392 = vmatprep.mubr.bf16.mxu0 0
        %5393 = vmatmul.mubr.bf16.gmra.mrb[0].mxu0 %v4888
        %v5394 = vpop.f32.mrb[0].mxu0
        %v5395 = vadd.f32 %v5282, %v5394
        %v5396 = vpop.f32.mrb[0].mxu0
        %v5397 = vadd.f32 %v5284, %v5396
        %v5398 = vpop.f32.mrb[0].mxu0
        %v5399 = vadd.f32 %v5286, %v5398
        %v5400 = vpop.f32.mrb[0].mxu0
        %v5401 = vadd.f32 %v5288, %v5400
        %5402 = vdwg.mxu0
        %v5451 = vunpack.c.l.b16 %v4817
        %v5452 = vunpack.c.h.b16 %v4817
        %v5453 = vunpack.c.l.b16 %v4818
        %v5454 = vunpack.c.h.b16 %v4818
        %v5455 = vunpack.c.l.b16 %v4819
        %v5456 = vunpack.c.h.b16 %v4819
        %v5457 = vunpack.c.l.b16 %v4820
        %v5458 = vunpack.c.h.b16 %v4820
        %v5459 = vunpack.c.l.b16 %v4821
        %v5460 = vunpack.c.h.b16 %v4821
        %v5461 = vunpack.c.l.b16 %v4822
        %v5462 = vunpack.c.h.b16 %v4822
        %v5463 = vunpack.c.l.b16 %v4823
        %v5464 = vunpack.c.h.b16 %v4823
        %v5465 = vunpack.c.l.b16 %v4824
        %v5466 = vunpack.c.h.b16 %v4824
        %v5467 = vunpack.c.l.b16 %v4825
        %v5468 = vunpack.c.h.b16 %v4825
        %v5469 = vunpack.c.l.b16 %v4826
        %v5470 = vunpack.c.h.b16 %v4826
        %v5471 = vunpack.c.l.b16 %v4827
        %v5472 = vunpack.c.h.b16 %v4827
        %v5473 = vunpack.c.l.b16 %v4828
        %v5474 = vunpack.c.h.b16 %v4828
        %v5475 = vunpack.c.l.b16 %v4829
        %v5476 = vunpack.c.h.b16 %v4829
        %v5477 = vunpack.c.l.b16 %v4830
        %v5478 = vunpack.c.h.b16 %v4830
        %v5479 = vunpack.c.l.b16 %v4831
        %v5480 = vunpack.c.h.b16 %v4831
        %v5481 = vunpack.c.l.b16 %v4832
        %v5482 = vunpack.c.h.b16 %v4832
        %v5483 = vunpack.c.l.b16 %v4833
        %v5484 = vunpack.c.h.b16 %v4833
        %v5485 = vunpack.c.l.b16 %v4834
        %v5486 = vunpack.c.h.b16 %v4834
        %v5487 = vunpack.c.l.b16 %v4835
        %v5488 = vunpack.c.h.b16 %v4835
        %v5489 = vunpack.c.l.b16 %v4836
        %v5490 = vunpack.c.h.b16 %v4836
        %v5491 = vunpack.c.l.b16 %v4837
        %v5492 = vunpack.c.h.b16 %v4837
        %v5493 = vunpack.c.l.b16 %v4838
        %v5494 = vunpack.c.h.b16 %v4838
        %v5495 = vunpack.c.l.b16 %v4839
        %v5496 = vunpack.c.h.b16 %v4839
        %v5497 = vunpack.c.l.b16 %v4840
        %v5498 = vunpack.c.h.b16 %v4840
        %v5499 = vunpack.c.l.b16 %v4841
        %v5500 = vunpack.c.h.b16 %v4841
        %v5501 = vunpack.c.l.b16 %v4842
        %v5502 = vunpack.c.h.b16 %v4842
        %v5503 = vunpack.c.l.b16 %v4843
        %v5504 = vunpack.c.h.b16 %v4843
        %v5505 = vunpack.c.l.b16 %v4844
        %v5506 = vunpack.c.h.b16 %v4844
        %v5507 = vunpack.c.l.b16 %v4845
        %v5508 = vunpack.c.h.b16 %v4845
        %v5509 = vunpack.c.l.b16 %v4846
        %v5510 = vunpack.c.h.b16 %v4846
        %v5511 = vunpack.c.l.b16 %v4847
        %v5512 = vunpack.c.h.b16 %v4847
        %v5513 = vunpack.c.l.b16 %v4848
        %v5514 = vunpack.c.h.b16 %v4848
        %v5515 = vunpack.c.l.b16 %v4849
        %v5516 = vunpack.c.h.b16 %v4849
        %v5517 = vunpack.c.l.b16 %v4850
        %v5518 = vunpack.c.h.b16 %v4850
        %v5519 = vunpack.c.l.b16 %v4851
        %v5520 = vunpack.c.h.b16 %v4851
        %v5521 = vunpack.c.l.b16 %v4852
        %v5522 = vunpack.c.h.b16 %v4852
        %v5523 = vunpack.c.l.b16 %v4853
        %v5524 = vunpack.c.h.b16 %v4853
        %v5525 = vunpack.c.l.b16 %v4854
        %v5526 = vunpack.c.h.b16 %v4854
        %v5527 = vunpack.c.l.b16 %v4855
        %v5528 = vunpack.c.h.b16 %v4855
        %v5529 = vunpack.c.l.b16 %v4856
        %v5530 = vunpack.c.h.b16 %v4856
        %v5531 = vunpack.c.l.b16 %v4857
        %v5532 = vunpack.c.h.b16 %v4857
        %v5533 = vunpack.c.l.b16 %v4858
        %v5534 = vunpack.c.h.b16 %v4858
        %v5535 = vunpack.c.l.b16 %v4859
        %v5536 = vunpack.c.h.b16 %v4859
        %v5537 = vunpack.c.l.b16 %v4860
        %v5538 = vunpack.c.h.b16 %v4860
        %v5539 = vunpack.c.l.b16 %v4861
        %v5540 = vunpack.c.h.b16 %v4861
        %v5541 = vunpack.c.l.b16 %v4862
        %v5542 = vunpack.c.h.b16 %v4862
        %v5543 = vunpack.c.l.b16 %v4863
        %v5544 = vunpack.c.h.b16 %v4863
        %v5545 = vunpack.c.l.b16 %v4864
        %v5546 = vunpack.c.h.b16 %v4864
        %v5547 = vpack.c.b16 %v5453, %v5451
        %v5548 = vpack.c.b16 %v5454, %v5452
        %v5549 = vpack.c.b16 %v5457, %v5455
        %v5550 = vpack.c.b16 %v5458, %v5456
        %v5551 = vpack.c.b16 %v5461, %v5459
        %v5552 = vpack.c.b16 %v5462, %v5460
        %v5553 = vpack.c.b16 %v5465, %v5463
        %v5554 = vpack.c.b16 %v5466, %v5464
        %v5555 = vpack.c.b16 %v5469, %v5467
        %v5556 = vpack.c.b16 %v5470, %v5468
        %v5557 = vpack.c.b16 %v5473, %v5471
        %v5558 = vpack.c.b16 %v5474, %v5472
        %v5559 = vpack.c.b16 %v5477, %v5475
        %v5560 = vpack.c.b16 %v5478, %v5476
        %v5561 = vpack.c.b16 %v5481, %v5479
        %v5562 = vpack.c.b16 %v5482, %v5480
        %v5563 = vpack.c.b16 %v5485, %v5483
        %v5564 = vpack.c.b16 %v5486, %v5484
        %v5565 = vpack.c.b16 %v5489, %v5487
        %v5566 = vpack.c.b16 %v5490, %v5488
        %v5567 = vpack.c.b16 %v5493, %v5491
        %v5568 = vpack.c.b16 %v5494, %v5492
        %v5569 = vpack.c.b16 %v5497, %v5495
        %v5570 = vpack.c.b16 %v5498, %v5496
        %v5571 = vpack.c.b16 %v5501, %v5499
        %v5572 = vpack.c.b16 %v5502, %v5500
        %v5573 = vpack.c.b16 %v5505, %v5503
        %v5574 = vpack.c.b16 %v5506, %v5504
        %v5575 = vpack.c.b16 %v5509, %v5507
        %v5576 = vpack.c.b16 %v5510, %v5508
        %v5577 = vpack.c.b16 %v5513, %v5511
        %v5578 = vpack.c.b16 %v5514, %v5512
        %v5579 = vpack.c.b16 %v5517, %v5515
        %v5580 = vpack.c.b16 %v5518, %v5516
        %v5581 = vpack.c.b16 %v5521, %v5519
        %v5582 = vpack.c.b16 %v5522, %v5520
        %v5583 = vpack.c.b16 %v5525, %v5523
        %v5584 = vpack.c.b16 %v5526, %v5524
        %v5585 = vpack.c.b16 %v5529, %v5527
        %v5586 = vpack.c.b16 %v5530, %v5528
        %v5587 = vpack.c.b16 %v5533, %v5531
        %v5588 = vpack.c.b16 %v5534, %v5532
        %v5589 = vpack.c.b16 %v5537, %v5535
        %v5590 = vpack.c.b16 %v5538, %v5536
        %v5591 = vpack.c.b16 %v5541, %v5539
        %v5592 = vpack.c.b16 %v5542, %v5540
        %v5593 = vpack.c.b16 %v5545, %v5543
        %v5594 = vpack.c.b16 %v5546, %v5544
        %5643 = vmatprep.subr.bf16.mxu0 %v5548
        %5644 = vmatpush1.bf16.msra.mxu0 %v5547
        %5645 = vmatprep.subr.bf16.mxu0 %v5550
        %5646 = vmatpush1.bf16.msra.mxu0 %v5549
        %5647 = vmatprep.subr.bf16.mxu0 %v5552
        %5648 = vmatpush1.bf16.msra.mxu0 %v5551
        %5649 = vmatprep.subr.bf16.mxu0 %v5554
        %5650 = vmatpush1.bf16.msra.mxu0 %v5553
        %5651 = vmatprep.subr.bf16.mxu0 %v5556
        %5652 = vmatpush1.bf16.msra.mxu0 %v5555
        %5653 = vmatprep.subr.bf16.mxu0 %v5558
        %5654 = vmatpush1.bf16.msra.mxu0 %v5557
        %5655 = vmatprep.subr.bf16.mxu0 %v5560
        %5656 = vmatpush1.bf16.msra.mxu0 %v5559
        %5657 = vmatprep.subr.bf16.mxu0 %v5562
        %5658 = vmatpush1.bf16.msra.mxu0 %v5561
        %5659 = vmatprep.subr.bf16.mxu0 %v5564
        %5660 = vmatpush1.bf16.msra.mxu0 %v5563
        %5661 = vmatprep.subr.bf16.mxu0 %v5566
        %5662 = vmatpush1.bf16.msra.mxu0 %v5565
        %5663 = vmatprep.subr.bf16.mxu0 %v5568
        %5664 = vmatpush1.bf16.msra.mxu0 %v5567
        %5665 = vmatprep.subr.bf16.mxu0 %v5570
        %5666 = vmatpush1.bf16.msra.mxu0 %v5569
        %5667 = vmatprep.subr.bf16.mxu0 %v5572
        %5668 = vmatpush1.bf16.msra.mxu0 %v5571
        %5669 = vmatprep.subr.bf16.mxu0 %v5574
        %5670 = vmatpush1.bf16.msra.mxu0 %v5573
        %5671 = vmatprep.subr.bf16.mxu0 %v5576
        %5672 = vmatpush1.bf16.msra.mxu0 %v5575
        %5673 = vmatprep.subr.bf16.mxu0 %v5578
        %5674 = vmatpush1.bf16.msra.mxu0 %v5577
        %5675 = vmatprep.mubr.bf16.mxu0 %v4794
        %5676 = vmatmul.mubr.bf16.gmra.mrb[0].mxu0 %v4793
        %v5677 = vpop.f32.mrb[0].mxu0
        %v5678 = vadd.f32 %v5325, %v5677
        %v5679 = vpop.f32.mrb[0].mxu0
        %v5680 = vadd.f32 %v5327, %v5679
        %v5681 = vpop.f32.mrb[0].mxu0
        %v5682 = vadd.f32 %v5329, %v5681
        %v5683 = vpop.f32.mrb[0].mxu0
        %v5684 = vadd.f32 %v5331, %v5683
        %5685 = vmatprep.mubr.bf16.mxu0 %v4797
        %5686 = vmatmul.mubr.bf16.gmra.mrb[0].mxu0 %v4796
        %v5687 = vpop.f32.mrb[0].mxu0
        %v5688 = vadd.f32 %v5335, %v5687
        %v5689 = vpop.f32.mrb[0].mxu0
        %v5690 = vadd.f32 %v5337, %v5689
        %v5691 = vpop.f32.mrb[0].mxu0
        %v5692 = vadd.f32 %v5339, %v5691
        %v5693 = vpop.f32.mrb[0].mxu0
        %v5694 = vadd.f32 %v5341, %v5693
        %5695 = vmatprep.mubr.bf16.mxu0 %v4800
        %5696 = vmatmul.mubr.bf16.gmra.mrb[0].mxu0 %v4799
        %v5697 = vpop.f32.mrb[0].mxu0
        %v5698 = vadd.f32 %v5345, %v5697
        %v5699 = vpop.f32.mrb[0].mxu0
        %v5700 = vadd.f32 %v5347, %v5699
        %v5701 = vpop.f32.mrb[0].mxu0
        %v5702 = vadd.f32 %v5349, %v5701
        %v5703 = vpop.f32.mrb[0].mxu0
        %v5704 = vadd.f32 %v5351, %v5703
        %5705 = vmatprep.mubr.bf16.mxu0 %v4803
        %5706 = vmatmul.mubr.bf16.gmra.mrb[0].mxu0 %v4802
        %v5707 = vpop.f32.mrb[0].mxu0
        %v5708 = vadd.f32 %v5355, %v5707
        %v5709 = vpop.f32.mrb[0].mxu0
        %v5710 = vadd.f32 %v5357, %v5709
        %v5711 = vpop.f32.mrb[0].mxu0
        %v5712 = vadd.f32 %v5359, %v5711
        %v5713 = vpop.f32.mrb[0].mxu0
        %v5714 = vadd.f32 %v5361, %v5713
        %5715 = vmatprep.mubr.bf16.mxu0 %v4806
        %5716 = vmatmul.mubr.bf16.gmra.mrb[0].mxu0 %v4805
        %v5717 = vpop.f32.mrb[0].mxu0
        %v5718 = vadd.f32 %v5365, %v5717
        %v5719 = vpop.f32.mrb[0].mxu0
        %v5720 = vadd.f32 %v5367, %v5719
        %v5721 = vpop.f32.mrb[0].mxu0
        %v5722 = vadd.f32 %v5369, %v5721
        %v5723 = vpop.f32.mrb[0].mxu0
        %v5724 = vadd.f32 %v5371, %v5723
        %5725 = vmatprep.mubr.bf16.mxu0 %v4809
        %5726 = vmatmul.mubr.bf16.gmra.mrb[0].mxu0 %v4808
        %v5727 = vpop.f32.mrb[0].mxu0
        %v5728 = vadd.f32 %v5375, %v5727
        %v5729 = vpop.f32.mrb[0].mxu0
        %v5730 = vadd.f32 %v5377, %v5729
        %v5731 = vpop.f32.mrb[0].mxu0
        %v5732 = vadd.f32 %v5379, %v5731
        %v5733 = vpop.f32.mrb[0].mxu0
        %v5734 = vadd.f32 %v5381, %v5733
        %5735 = vmatprep.mubr.bf16.mxu0 %v4812
        %5736 = vmatmul.mubr.bf16.gmra.mrb[0].mxu0 %v4811
        %v5737 = vpop.f32.mrb[0].mxu0
        %v5738 = vadd.f32 %v5385, %v5737
        %v5739 = vpop.f32.mrb[0].mxu0
        %v5740 = vadd.f32 %v5387, %v5739
        %v5741 = vpop.f32.mrb[0].mxu0
        %v5742 = vadd.f32 %v5389, %v5741
        %v5743 = vpop.f32.mrb[0].mxu0
        %v5744 = vadd.f32 %v5391, %v5743
        %5745 = vmatprep.mubr.bf16.mxu0 %v4815
        %5746 = vmatmul.mubr.bf16.gmra.mrb[0].mxu0 %v4814
        %v5747 = vpop.f32.mrb[0].mxu0
        %v5748 = vadd.f32 %v5395, %v5747
        %v5749 = vpop.f32.mrb[0].mxu0
        %v5750 = vadd.f32 %v5397, %v5749
        %v5751 = vpop.f32.mrb[0].mxu0
        %v5752 = vadd.f32 %v5399, %v5751
        %v5753 = vpop.f32.mrb[0].mxu0
        %v5754 = vadd.f32 %v5401, %v5753
        %5755 = vdwg.mxu0
        %5756 = vmatprep.subr.bf16.mxu0 %v5580
        %5757 = vmatpush1.bf16.msra.mxu0 %v5579
        %5758 = vmatprep.subr.bf16.mxu0 %v5582
        %5759 = vmatpush1.bf16.msra.mxu0 %v5581
        %5760 = vmatprep.subr.bf16.mxu0 %v5584
        %5761 = vmatpush1.bf16.msra.mxu0 %v5583
        %5762 = vmatprep.subr.bf16.mxu0 %v5586
        %5763 = vmatpush1.bf16.msra.mxu0 %v5585
        %5764 = vmatprep.subr.bf16.mxu0 %v5588
        %5765 = vmatpush1.bf16.msra.mxu0 %v5587
        %5766 = vmatprep.subr.bf16.mxu0 %v5590
        %5767 = vmatpush1.bf16.msra.mxu0 %v5589
        %5768 = vmatprep.subr.bf16.mxu0 %v5592
        %5769 = vmatpush1.bf16.msra.mxu0 %v5591
        %5770 = vmatprep.subr.bf16.mxu0 %v5594
        %5771 = vmatpush1.bf16.msra.mxu0 %v5593
        %5772 = vmatprep.subr.bf16.mxu0 0
        %5773 = vmatpush1.bf16.msra.mxu0 0
        %5774 = vmatprep.subr.bf16.mxu0 0
        %5775 = vmatpush1.bf16.msra.mxu0 0
        %5776 = vmatprep.subr.bf16.mxu0 0
        %5777 = vmatpush1.bf16.msra.mxu0 0
        %5778 = vmatprep.subr.bf16.mxu0 0
        %5779 = vmatpush1.bf16.msra.mxu0 0
        %5780 = vmatprep.subr.bf16.mxu0 0
        %5781 = vmatpush1.bf16.msra.mxu0 0
        %5782 = vmatprep.subr.bf16.mxu0 0
        %5783 = vmatpush1.bf16.msra.mxu0 0
        %5784 = vmatprep.subr.bf16.mxu0 0
        %5785 = vmatpush1.bf16.msra.mxu0 0
        %5786 = vmatprep.subr.bf16.mxu0 0
        %5787 = vmatpush1.bf16.msra.mxu0 0
        %5788 = vmatprep.mubr.bf16.mxu0 0
        %5789 = vmatmul.mubr.bf16.gmra.mrb[0].mxu0 %v4795
        %v5790 = vpop.f32.mrb[0].mxu0
        %v5791 = vadd.f32 %v5678, %v5790
        %v5792 = vpop.f32.mrb[0].mxu0
        %v5793 = vadd.f32 %v5680, %v5792
        %v5794 = vpop.f32.mrb[0].mxu0
        %v5795 = vadd.f32 %v5682, %v5794
        %v5796 = vpop.f32.mrb[0].mxu0
        %v5797 = vadd.f32 %v5684, %v5796
        %5798 = vmatprep.mubr.bf16.mxu0 0
        %5799 = vmatmul.mubr.bf16.gmra.mrb[0].mxu0 %v4798
        %v5800 = vpop.f32.mrb[0].mxu0
        %v5801 = vadd.f32 %v5688, %v5800
        %v5802 = vpop.f32.mrb[0].mxu0
        %v5803 = vadd.f32 %v5690, %v5802
        %v5804 = vpop.f32.mrb[0].mxu0
        %v5805 = vadd.f32 %v5692, %v5804
        %v5806 = vpop.f32.mrb[0].mxu0
        %v5807 = vadd.f32 %v5694, %v5806
        %5808 = vmatprep.mubr.bf16.mxu0 0
        %5809 = vmatmul.mubr.bf16.gmra.mrb[0].mxu0 %v4801
        %v5810 = vpop.f32.mrb[0].mxu0
        %v5811 = vadd.f32 %v5698, %v5810
        %v5812 = vpop.f32.mrb[0].mxu0
        %v5813 = vadd.f32 %v5700, %v5812
        %v5814 = vpop.f32.mrb[0].mxu0
        %v5815 = vadd.f32 %v5702, %v5814
        %v5816 = vpop.f32.mrb[0].mxu0
        %v5817 = vadd.f32 %v5704, %v5816
        %5818 = vmatprep.mubr.bf16.mxu0 0
        %5819 = vmatmul.mubr.bf16.gmra.mrb[0].mxu0 %v4804
        %v5820 = vpop.f32.mrb[0].mxu0
        %v5821 = vadd.f32 %v5708, %v5820
        %v5822 = vpop.f32.mrb[0].mxu0
        %v5823 = vadd.f32 %v5710, %v5822
        %v5824 = vpop.f32.mrb[0].mxu0
        %v5825 = vadd.f32 %v5712, %v5824
        %v5826 = vpop.f32.mrb[0].mxu0
        %v5827 = vadd.f32 %v5714, %v5826
        %5828 = vmatprep.mubr.bf16.mxu0 0
        %5829 = vmatmul.mubr.bf16.gmra.mrb[0].mxu0 %v4807
        %v5830 = vpop.f32.mrb[0].mxu0
        %v5831 = vadd.f32 %v5718, %v5830
        %v5832 = vpop.f32.mrb[0].mxu0
        %v5833 = vadd.f32 %v5720, %v5832
        %v5834 = vpop.f32.mrb[0].mxu0
        %v5835 = vadd.f32 %v5722, %v5834
        %v5836 = vpop.f32.mrb[0].mxu0
        %v5837 = vadd.f32 %v5724, %v5836
        %5838 = vmatprep.mubr.bf16.mxu0 0
        %5839 = vmatmul.mubr.bf16.gmra.mrb[0].mxu0 %v4810
        %v5840 = vpop.f32.mrb[0].mxu0
        %v5841 = vadd.f32 %v5728, %v5840
        %v5842 = vpop.f32.mrb[0].mxu0
        %v5843 = vadd.f32 %v5730, %v5842
        %v5844 = vpop.f32.mrb[0].mxu0
        %v5845 = vadd.f32 %v5732, %v5844
        %v5846 = vpop.f32.mrb[0].mxu0
        %v5847 = vadd.f32 %v5734, %v5846
        %5848 = vmatprep.mubr.bf16.mxu0 0
        %5849 = vmatmul.mubr.bf16.gmra.mrb[0].mxu0 %v4813
        %v5850 = vpop.f32.mrb[0].mxu0
        %v5851 = vadd.f32 %v5738, %v5850
        %v5852 = vpop.f32.mrb[0].mxu0
        %v5853 = vadd.f32 %v5740, %v5852
        %v5854 = vpop.f32.mrb[0].mxu0
        %v5855 = vadd.f32 %v5742, %v5854
        %v5856 = vpop.f32.mrb[0].mxu0
        %v5857 = vadd.f32 %v5744, %v5856
        %5858 = vmatprep.mubr.bf16.mxu0 0
        %5859 = vmatmul.mubr.bf16.gmra.mrb[0].mxu0 %v4816
        %v5860 = vpop.f32.mrb[0].mxu0
        %v5861 = vadd.f32 %v5748, %v5860
        %v5862 = vpop.f32.mrb[0].mxu0
        %v5863 = vadd.f32 %v5750, %v5862
        %v5864 = vpop.f32.mrb[0].mxu0
        %v5865 = vadd.f32 %v5752, %v5864
        %v5866 = vpop.f32.mrb[0].mxu0
        %v5867 = vadd.f32 %v5754, %v5866
        %5868 = vdwg.mxu0
        %v5869 = vld [vmem:[%s8] sm:$0x3]
        %v5871 = vlaneseq
        %v5872 = vshrl.u32 %v5871, 7
        %v5873 = vsub.s32 0, %v5872
        %v5874 = vrot.slane %v5869, %v5873
        %v5875 = vlaneseq
        %v5876 = vshrl.u32 %v5875, 7
        %v5877 = vsub.s32 1, %v5876
        %v5878 = vrot.slane %v5869, %v5877
        %v5881 = vadd.f32 %v5791, %v5874
        %v5882 = vadd.f32 %v5793, %v5878
        %v5883 = vadd.f32 %v5795, %v5874
        %v5884 = vadd.f32 %v5797, %v5878
        %v5885 = vadd.f32 %v5801, %v5874
        %v5886 = vadd.f32 %v5803, %v5878
        %v5887 = vadd.f32 %v5805, %v5874
        %v5888 = vadd.f32 %v5807, %v5878
        %v5889 = vadd.f32 %v5811, %v5874
        %v5890 = vadd.f32 %v5813, %v5878
        %v5891 = vadd.f32 %v5815, %v5874
        %v5892 = vadd.f32 %v5817, %v5878
        %v5893 = vadd.f32 %v5821, %v5874
        %v5894 = vadd.f32 %v5823, %v5878
        %v5895 = vadd.f32 %v5825, %v5874
        %v5896 = vadd.f32 %v5827, %v5878
        %v5897 = vadd.f32 %v5831, %v5874
        %v5898 = vadd.f32 %v5833, %v5878
        %v5899 = vadd.f32 %v5835, %v5874
        %v5900 = vadd.f32 %v5837, %v5878
        %v5901 = vadd.f32 %v5841, %v5874
        %v5902 = vadd.f32 %v5843, %v5878
        %v5903 = vadd.f32 %v5845, %v5874
        %v5904 = vadd.f32 %v5847, %v5878
        %v5905 = vadd.f32 %v5851, %v5874
        %v5906 = vadd.f32 %v5853, %v5878
        %v5907 = vadd.f32 %v5855, %v5874
        %v5908 = vadd.f32 %v5857, %v5878
        %v5909 = vadd.f32 %v5861, %v5874
        %v5910 = vadd.f32 %v5863, %v5878
        %v5911 = vadd.f32 %v5865, %v5874
        %v5912 = vadd.f32 %v5867, %v5878
        %v5913 = vmax.f32 %v5881, 0.0
        %v5914 = vmax.f32 %v5882, 0.0
        %v5915 = vmax.f32 %v5883, 0.0
        %v5916 = vmax.f32 %v5884, 0.0
        %v5917 = vmax.f32 %v5885, 0.0
        %v5918 = vmax.f32 %v5886, 0.0
        %v5919 = vmax.f32 %v5887, 0.0
        %v5920 = vmax.f32 %v5888, 0.0
        %v5921 = vmax.f32 %v5889, 0.0
        %v5922 = vmax.f32 %v5890, 0.0
        %v5923 = vmax.f32 %v5891, 0.0
        %v5924 = vmax.f32 %v5892, 0.0
        %v5925 = vmax.f32 %v5893, 0.0
        %v5926 = vmax.f32 %v5894, 0.0
        %v5927 = vmax.f32 %v5895, 0.0
        %v5928 = vmax.f32 %v5896, 0.0
        %v5929 = vmax.f32 %v5897, 0.0
        %v5930 = vmax.f32 %v5898, 0.0
        %v5931 = vmax.f32 %v5899, 0.0
        %v5932 = vmax.f32 %v5900, 0.0
        %v5933 = vmax.f32 %v5901, 0.0
        %v5934 = vmax.f32 %v5902, 0.0
        %v5935 = vmax.f32 %v5903, 0.0
        %v5936 = vmax.f32 %v5904, 0.0
        %v5937 = vmax.f32 %v5905, 0.0
        %v5938 = vmax.f32 %v5906, 0.0
        %v5939 = vmax.f32 %v5907, 0.0
        %v5940 = vmax.f32 %v5908, 0.0
        %v5941 = vmax.f32 %v5909, 0.0
        %v5942 = vmax.f32 %v5910, 0.0
        %v5943 = vmax.f32 %v5911, 0.0
        %v5944 = vmax.f32 %v5912, 0.0
        %v5945 = vadd.f32 %v5913, %v555
        %v5946 = vadd.f32 %v5914, %v556
        %v5947 = vadd.f32 %v5915, %v557
        %v5948 = vadd.f32 %v5916, %v558
        %v5949 = vadd.f32 %v5917, %v559
        %v5950 = vadd.f32 %v5918, %v560
        %v5951 = vadd.f32 %v5919, %v561
        %v5952 = vadd.f32 %v5920, %v562
        %v5953 = vadd.f32 %v5921, %v563
        %v5954 = vadd.f32 %v5922, %v564
        %v5955 = vadd.f32 %v5923, %v565
        %v5956 = vadd.f32 %v5924, %v566
        %v5957 = vadd.f32 %v5925, %v567
        %v5958 = vadd.f32 %v5926, %v568
        %v5959 = vadd.f32 %v5927, %v569
        %v5960 = vadd.f32 %v5928, %v570
        %v5961 = vadd.f32 %v5929, %v571
        %v5962 = vadd.f32 %v5930, %v572
        %v5963 = vadd.f32 %v5931, %v573
        %v5964 = vadd.f32 %v5932, %v574
        %v5965 = vadd.f32 %v5933, %v575
        %v5966 = vadd.f32 %v5934, %v576
        %v5967 = vadd.f32 %v5935, %v577
        %v5968 = vadd.f32 %v5936, %v578
        %v5969 = vadd.f32 %v5937, %v579
        %v5970 = vadd.f32 %v5938, %v580
        %v5971 = vadd.f32 %v5939, %v581
        %v5972 = vadd.f32 %v5940, %v582
        %v5973 = vadd.f32 %v5941, %v583
        %v5974 = vadd.f32 %v5942, %v584
        %v5975 = vadd.f32 %v5943, %v585
        %v5976 = vadd.f32 %v5944, %v586
        %v5977 = vpack.c.bf16 %v5947, %v5945
        %v5978 = vpack.c.bf16 %v5948, %v5946
        %v5979 = vpack.c.bf16 %v5951, %v5949
        %v5980 = vpack.c.bf16 %v5952, %v5950
        %v5981 = vpack.c.bf16 %v5955, %v5953
        %v5982 = vpack.c.bf16 %v5956, %v5954
        %v5983 = vpack.c.bf16 %v5959, %v5957
        %v5984 = vpack.c.bf16 %v5960, %v5958
        %v5985 = vpack.c.bf16 %v5963, %v5961
        %v5986 = vpack.c.bf16 %v5964, %v5962
        %v5987 = vpack.c.bf16 %v5967, %v5965
        %v5988 = vpack.c.bf16 %v5968, %v5966
        %v5989 = vpack.c.bf16 %v5971, %v5969
        %v5990 = vpack.c.bf16 %v5972, %v5970
        %v5991 = vpack.c.bf16 %v5975, %v5973
        %v5992 = vpack.c.bf16 %v5976, %v5974
        %v5993 = vld [vmem:[#allocation13] sm:$0xff]
        %v5994 = vld [vmem:[#allocation13 + $0x8] sm:$0xff]
        %v5995 = vld [vmem:[#allocation13 + $0x10] sm:$0xff]
        %v5996 = vld [vmem:[#allocation13 + $0x18] sm:$0xff]
        %v5997 = vld [vmem:[#allocation13 + $0x20] sm:$0xff]
        %v5998 = vld [vmem:[#allocation13 + $0x28] sm:$0xff]
        %v5999 = vld [vmem:[#allocation13 + $0x30] sm:$0xff]
        %v6000 = vld [vmem:[#allocation13 + $0x38] sm:$0xff]
        %v6001 = vld [vmem:[#allocation13 + $0x40] sm:$0xff]
        %v6002 = vld [vmem:[#allocation13 + $0x48] sm:$0xff]
        %v6003 = vld [vmem:[#allocation13 + $0x50] sm:$0xff]
        %v6004 = vld [vmem:[#allocation13 + $0x58] sm:$0xff]
        %v6005 = vld [vmem:[#allocation13 + $0x60] sm:$0xff]
        %v6006 = vld [vmem:[#allocation13 + $0x68] sm:$0xff]
        %v6007 = vld [vmem:[#allocation13 + $0x70] sm:$0xff]
        %v6008 = vld [vmem:[#allocation13 + $0x78] sm:$0xff]
        %v6009 = vld [vmem:[#allocation13 + $0x80] sm:$0xff]
        %v6010 = vld [vmem:[#allocation13 + $0x88] sm:$0xff]
        %v6011 = vld [vmem:[#allocation13 + $0x90] sm:$0xff]
        %v6012 = vld [vmem:[#allocation13 + $0x98] sm:$0xff]
        %v6013 = vld [vmem:[#allocation13 + $0xa0] sm:$0xff]
        %v6014 = vld [vmem:[#allocation13 + $0xa8] sm:$0xff]
        %v6015 = vld [vmem:[#allocation13 + $0xb0] sm:$0xff]
        %v6016 = vld [vmem:[#allocation13 + $0xb8] sm:$0xff]
        %v6017 = vld [vmem:[#allocation13 + $0xc0] sm:$0xff]
        %v6018 = vld [vmem:[#allocation13 + $0xc8] sm:$0xff]
        %v6019 = vld [vmem:[#allocation13 + $0xd0] sm:$0xff]
        %v6020 = vld [vmem:[#allocation13 + $0xd8] sm:$0xff]
        %v6021 = vld [vmem:[#allocation13 + $0xe0] sm:$0xff]
        %v6022 = vld [vmem:[#allocation13 + $0xe8] sm:$0xff]
        %v6023 = vld [vmem:[#allocation13 + $0xf0] sm:$0xff]
        %v6024 = vld [vmem:[#allocation13 + $0xf8] sm:$0xff]
        %v6025 = vld [vmem:[%s10] sm:$0x3]
        %v6027 = vlaneseq
        %v6028 = vshrl.u32 %v6027, 7
        %v6029 = vsub.s32 0, %v6028
        %v6030 = vrot.slane %v6025, %v6029
        %v6031 = vlaneseq
        %v6032 = vshrl.u32 %v6031, 7
        %v6033 = vsub.s32 1, %v6032
        %v6034 = vrot.slane %v6025, %v6033
        %v6069 = vunpack.c.l.b16 %v5993
        %v6070 = vunpack.c.h.b16 %v5993
        %v6071 = vunpack.c.l.b16 %v5994
        %v6072 = vunpack.c.h.b16 %v5994
        %v6073 = vunpack.c.l.b16 %v5995
        %v6074 = vunpack.c.h.b16 %v5995
        %v6075 = vunpack.c.l.b16 %v5996
        %v6076 = vunpack.c.h.b16 %v5996
        %v6077 = vunpack.c.l.b16 %v5997
        %v6078 = vunpack.c.h.b16 %v5997
        %v6079 = vunpack.c.l.b16 %v5998
        %v6080 = vunpack.c.h.b16 %v5998
        %v6081 = vunpack.c.l.b16 %v5999
        %v6082 = vunpack.c.h.b16 %v5999
        %v6083 = vunpack.c.l.b16 %v6000
        %v6084 = vunpack.c.h.b16 %v6000
        %v6085 = vunpack.c.l.b16 %v6001
        %v6086 = vunpack.c.h.b16 %v6001
        %v6087 = vunpack.c.l.b16 %v6002
        %v6088 = vunpack.c.h.b16 %v6002
        %v6089 = vunpack.c.l.b16 %v6003
        %v6090 = vunpack.c.h.b16 %v6003
        %v6091 = vunpack.c.l.b16 %v6004
        %v6092 = vunpack.c.h.b16 %v6004
        %v6093 = vunpack.c.l.b16 %v6005
        %v6094 = vunpack.c.h.b16 %v6005
        %v6095 = vunpack.c.l.b16 %v6006
        %v6096 = vunpack.c.h.b16 %v6006
        %v6097 = vunpack.c.l.b16 %v6007
        %v6098 = vunpack.c.h.b16 %v6007
        %v6099 = vunpack.c.l.b16 %v6008
        %v6100 = vunpack.c.h.b16 %v6008
        %v6101 = vunpack.c.l.b16 %v6009
        %v6102 = vunpack.c.h.b16 %v6009
        %v6103 = vunpack.c.l.b16 %v6010
        %v6104 = vunpack.c.h.b16 %v6010
        %v6105 = vunpack.c.l.b16 %v6011
        %v6106 = vunpack.c.h.b16 %v6011
        %v6107 = vunpack.c.l.b16 %v6012
        %v6108 = vunpack.c.h.b16 %v6012
        %v6109 = vunpack.c.l.b16 %v6013
        %v6110 = vunpack.c.h.b16 %v6013
        %v6111 = vunpack.c.l.b16 %v6014
        %v6112 = vunpack.c.h.b16 %v6014
        %v6113 = vunpack.c.l.b16 %v6015
        %v6114 = vunpack.c.h.b16 %v6015
        %v6115 = vunpack.c.l.b16 %v6016
        %v6116 = vunpack.c.h.b16 %v6016
        %v6117 = vunpack.c.l.b16 %v6017
        %v6118 = vunpack.c.h.b16 %v6017
        %v6119 = vunpack.c.l.b16 %v6018
        %v6120 = vunpack.c.h.b16 %v6018
        %v6121 = vunpack.c.l.b16 %v6019
        %v6122 = vunpack.c.h.b16 %v6019
        %v6123 = vunpack.c.l.b16 %v6020
        %v6124 = vunpack.c.h.b16 %v6020
        %v6125 = vunpack.c.l.b16 %v6021
        %v6126 = vunpack.c.h.b16 %v6021
        %v6127 = vunpack.c.l.b16 %v6022
        %v6128 = vunpack.c.h.b16 %v6022
        %v6129 = vunpack.c.l.b16 %v6023
        %v6130 = vunpack.c.h.b16 %v6023
        %v6131 = vunpack.c.l.b16 %v6024
        %v6132 = vunpack.c.h.b16 %v6024
        %v6133 = vpack.c.b16 %v6071, %v6069
        %v6134 = vpack.c.b16 %v6072, %v6070
        %v6135 = vpack.c.b16 %v6075, %v6073
        %v6136 = vpack.c.b16 %v6076, %v6074
        %v6137 = vpack.c.b16 %v6079, %v6077
        %v6138 = vpack.c.b16 %v6080, %v6078
        %v6139 = vpack.c.b16 %v6083, %v6081
        %v6140 = vpack.c.b16 %v6084, %v6082
        %v6141 = vpack.c.b16 %v6087, %v6085
        %v6142 = vpack.c.b16 %v6088, %v6086
        %v6143 = vpack.c.b16 %v6091, %v6089
        %v6144 = vpack.c.b16 %v6092, %v6090
        %v6145 = vpack.c.b16 %v6095, %v6093
        %v6146 = vpack.c.b16 %v6096, %v6094
        %v6147 = vpack.c.b16 %v6099, %v6097
        %v6148 = vpack.c.b16 %v6100, %v6098
        %v6149 = vpack.c.b16 %v6103, %v6101
        %v6150 = vpack.c.b16 %v6104, %v6102
        %v6151 = vpack.c.b16 %v6107, %v6105
        %v6152 = vpack.c.b16 %v6108, %v6106
        %v6153 = vpack.c.b16 %v6111, %v6109
        %v6154 = vpack.c.b16 %v6112, %v6110
        %v6155 = vpack.c.b16 %v6115, %v6113
        %v6156 = vpack.c.b16 %v6116, %v6114
        %v6157 = vpack.c.b16 %v6119, %v6117
        %v6158 = vpack.c.b16 %v6120, %v6118
        %v6159 = vpack.c.b16 %v6123, %v6121
        %v6160 = vpack.c.b16 %v6124, %v6122
        %v6161 = vpack.c.b16 %v6127, %v6125
        %v6162 = vpack.c.b16 %v6128, %v6126
        %v6163 = vpack.c.b16 %v6131, %v6129
        %v6164 = vpack.c.b16 %v6132, %v6130
        %6197 = vmatprep.subr.bf16.mxu0 %v6134
        %6198 = vmatpush1.bf16.msra.mxu0 %v6133
        %6199 = vmatprep.subr.bf16.mxu0 %v6136
        %6200 = vmatpush1.bf16.msra.mxu0 %v6135
        %6201 = vmatprep.subr.bf16.mxu0 %v6138
        %6202 = vmatpush1.bf16.msra.mxu0 %v6137
        %6203 = vmatprep.subr.bf16.mxu0 %v6140
        %6204 = vmatpush1.bf16.msra.mxu0 %v6139
        %6205 = vmatprep.subr.bf16.mxu0 %v6142
        %6206 = vmatpush1.bf16.msra.mxu0 %v6141
        %6207 = vmatprep.subr.bf16.mxu0 %v6144
        %6208 = vmatpush1.bf16.msra.mxu0 %v6143
        %6209 = vmatprep.subr.bf16.mxu0 %v6146
        %6210 = vmatpush1.bf16.msra.mxu0 %v6145
        %6211 = vmatprep.subr.bf16.mxu0 %v6148
        %6212 = vmatpush1.bf16.msra.mxu0 %v6147
        %6213 = vmatprep.subr.bf16.mxu0 %v6150
        %6214 = vmatpush1.bf16.msra.mxu0 %v6149
        %6215 = vmatprep.subr.bf16.mxu0 %v6152
        %6216 = vmatpush1.bf16.msra.mxu0 %v6151
        %6217 = vmatprep.subr.bf16.mxu0 %v6154
        %6218 = vmatpush1.bf16.msra.mxu0 %v6153
        %6219 = vmatprep.subr.bf16.mxu0 %v6156
        %6220 = vmatpush1.bf16.msra.mxu0 %v6155
        %6221 = vmatprep.subr.bf16.mxu0 %v6158
        %6222 = vmatpush1.bf16.msra.mxu0 %v6157
        %6223 = vmatprep.subr.bf16.mxu0 %v6160
        %6224 = vmatpush1.bf16.msra.mxu0 %v6159
        %6225 = vmatprep.subr.bf16.mxu0 %v6162
        %6226 = vmatpush1.bf16.msra.mxu0 %v6161
        %6227 = vmatprep.subr.bf16.mxu0 %v6164
        %6228 = vmatpush1.bf16.msra.mxu0 %v6163
        %6229 = vmatprep.mubr.bf16.mxu0 %v5978
        %6230 = vmatmul.mubr.bf16.gmra.mrb[0].mxu0 %v5977
        %v6231 = vpop.f32.mrb[0].mxu0
        %v6232 = vadd.f32 %v6030, %v6231
        %v6233 = vpop.f32.mrb[0].mxu0
        %v6234 = vadd.f32 %v6034, %v6233
        %v6235 = vpop.f32.mrb[0].mxu0
        %v6236 = vadd.f32 %v6030, %v6235
        %v6237 = vpop.f32.mrb[0].mxu0
        %v6238 = vadd.f32 %v6034, %v6237
        %6239 = vmatprep.mubr.bf16.mxu0 %v5980
        %6240 = vmatmul.mubr.bf16.gmra.mrb[0].mxu0 %v5979
        %v6241 = vpop.f32.mrb[0].mxu0
        %v6242 = vadd.f32 %v6030, %v6241
        %v6243 = vpop.f32.mrb[0].mxu0
        %v6244 = vadd.f32 %v6034, %v6243
        %v6245 = vpop.f32.mrb[0].mxu0
        %v6246 = vadd.f32 %v6030, %v6245
        %v6247 = vpop.f32.mrb[0].mxu0
        %v6248 = vadd.f32 %v6034, %v6247
        %6249 = vmatprep.mubr.bf16.mxu0 %v5982
        %6250 = vmatmul.mubr.bf16.gmra.mrb[0].mxu0 %v5981
        %v6251 = vpop.f32.mrb[0].mxu0
        %v6252 = vadd.f32 %v6030, %v6251
        %v6253 = vpop.f32.mrb[0].mxu0
        %v6254 = vadd.f32 %v6034, %v6253
        %v6255 = vpop.f32.mrb[0].mxu0
        %v6256 = vadd.f32 %v6030, %v6255
        %v6257 = vpop.f32.mrb[0].mxu0
        %v6258 = vadd.f32 %v6034, %v6257
        %6259 = vmatprep.mubr.bf16.mxu0 %v5984
        %6260 = vmatmul.mubr.bf16.gmra.mrb[0].mxu0 %v5983
        %v6261 = vpop.f32.mrb[0].mxu0
        %v6262 = vadd.f32 %v6030, %v6261
        %v6263 = vpop.f32.mrb[0].mxu0
        %v6264 = vadd.f32 %v6034, %v6263
        %v6265 = vpop.f32.mrb[0].mxu0
        %v6266 = vadd.f32 %v6030, %v6265
        %v6267 = vpop.f32.mrb[0].mxu0
        %v6268 = vadd.f32 %v6034, %v6267
        %6269 = vmatprep.mubr.bf16.mxu0 %v5986
        %6270 = vmatmul.mubr.bf16.gmra.mrb[0].mxu0 %v5985
        %v6271 = vpop.f32.mrb[0].mxu0
        %v6272 = vadd.f32 %v6030, %v6271
        %v6273 = vpop.f32.mrb[0].mxu0
        %v6274 = vadd.f32 %v6034, %v6273
        %v6275 = vpop.f32.mrb[0].mxu0
        %v6276 = vadd.f32 %v6030, %v6275
        %v6277 = vpop.f32.mrb[0].mxu0
        %v6278 = vadd.f32 %v6034, %v6277
        %6279 = vmatprep.mubr.bf16.mxu0 %v5988
        %6280 = vmatmul.mubr.bf16.gmra.mrb[0].mxu0 %v5987
        %v6281 = vpop.f32.mrb[0].mxu0
        %v6282 = vadd.f32 %v6030, %v6281
        %v6283 = vpop.f32.mrb[0].mxu0
        %v6284 = vadd.f32 %v6034, %v6283
        %v6285 = vpop.f32.mrb[0].mxu0
        %v6286 = vadd.f32 %v6030, %v6285
        %v6287 = vpop.f32.mrb[0].mxu0
        %v6288 = vadd.f32 %v6034, %v6287
        %6289 = vmatprep.mubr.bf16.mxu0 %v5990
        %6290 = vmatmul.mubr.bf16.gmra.mrb[0].mxu0 %v5989
        %v6291 = vpop.f32.mrb[0].mxu0
        %v6292 = vadd.f32 %v6030, %v6291
        %v6293 = vpop.f32.mrb[0].mxu0
        %v6294 = vadd.f32 %v6034, %v6293
        %v6295 = vpop.f32.mrb[0].mxu0
        %v6296 = vadd.f32 %v6030, %v6295
        %v6297 = vpop.f32.mrb[0].mxu0
        %v6298 = vadd.f32 %v6034, %v6297
        %6299 = vmatprep.mubr.bf16.mxu0 %v5992
        %6300 = vmatmul.mubr.bf16.gmra.mrb[0].mxu0 %v5991
        %v6301 = vpop.f32.mrb[0].mxu0
        %v6302 = vadd.f32 %v6030, %v6301
        %v6303 = vpop.f32.mrb[0].mxu0
        %v6304 = vadd.f32 %v6034, %v6303
        %v6305 = vpop.f32.mrb[0].mxu0
        %v6306 = vadd.f32 %v6030, %v6305
        %v6307 = vpop.f32.mrb[0].mxu0
        %v6308 = vadd.f32 %v6034, %v6307
        %6309 = vdwg.mxu0
        %v6310 = vadd.f32 %v6232, %v523
        %v6311 = vadd.f32 %v6234, %v524
        %v6312 = vadd.f32 %v6236, %v525
        %v6313 = vadd.f32 %v6238, %v526
        %v6314 = vadd.f32 %v6242, %v527
        %v6315 = vadd.f32 %v6244, %v528
        %v6316 = vadd.f32 %v6246, %v529
        %v6317 = vadd.f32 %v6248, %v530
        %v6318 = vadd.f32 %v6252, %v531
        %v6319 = vadd.f32 %v6254, %v532
        %v6320 = vadd.f32 %v6256, %v533
        %v6321 = vadd.f32 %v6258, %v534
        %v6322 = vadd.f32 %v6262, %v535
        %v6323 = vadd.f32 %v6264, %v536
        %v6324 = vadd.f32 %v6266, %v537
        %v6325 = vadd.f32 %v6268, %v538
        %v6326 = vadd.f32 %v6272, %v539
        %v6327 = vadd.f32 %v6274, %v540
        %v6328 = vadd.f32 %v6276, %v541
        %v6329 = vadd.f32 %v6278, %v542
        %v6330 = vadd.f32 %v6282, %v543
        %v6331 = vadd.f32 %v6284, %v544
        %v6332 = vadd.f32 %v6286, %v545
        %v6333 = vadd.f32 %v6288, %v546
        %v6334 = vadd.f32 %v6292, %v547
        %v6335 = vadd.f32 %v6294, %v548
        %v6336 = vadd.f32 %v6296, %v549
        %v6337 = vadd.f32 %v6298, %v550
        %v6338 = vadd.f32 %v6302, %v551
        %v6339 = vadd.f32 %v6304, %v552
        %v6340 = vadd.f32 %v6306, %v553
        %v6341 = vadd.f32 %v6308, %v554
        %v6342 = vsub.f32 %v6310, 0.5
        %v6343 = vsub.f32 %v6311, 0.5
        %v6344 = vsub.f32 %v6312, 0.5
        %v6345 = vsub.f32 %v6313, 0.5
        %v6346 = vsub.f32 %v6314, 0.5
        %v6347 = vsub.f32 %v6315, 0.5
        %v6348 = vsub.f32 %v6316, 0.5
        %v6349 = vsub.f32 %v6317, 0.5
        %v6350 = vsub.f32 %v6318, 0.5
        %v6351 = vsub.f32 %v6319, 0.5
        %v6352 = vsub.f32 %v6320, 0.5
        %v6353 = vsub.f32 %v6321, 0.5
        %v6354 = vsub.f32 %v6322, 0.5
        %v6355 = vsub.f32 %v6323, 0.5
        %v6356 = vsub.f32 %v6324, 0.5
        %v6357 = vsub.f32 %v6325, 0.5
        %v6358 = vsub.f32 %v6326, 0.5
        %v6359 = vsub.f32 %v6327, 0.5
        %v6360 = vsub.f32 %v6328, 0.5
        %v6361 = vsub.f32 %v6329, 0.5
        %v6362 = vsub.f32 %v6330, 0.5
        %v6363 = vsub.f32 %v6331, 0.5
        %v6364 = vsub.f32 %v6332, 0.5
        %v6365 = vsub.f32 %v6333, 0.5
        %v6366 = vsub.f32 %v6334, 0.5
        %v6367 = vsub.f32 %v6335, 0.5
        %v6368 = vsub.f32 %v6336, 0.5
        %v6369 = vsub.f32 %v6337, 0.5
        %v6370 = vsub.f32 %v6338, 0.5
        %v6371 = vsub.f32 %v6339, 0.5
        %v6372 = vsub.f32 %v6340, 0.5
        %v6373 = vsub.f32 %v6341, 0.5
        %v6374 = vmul.f32 %v6342, 5.0
        %v6375 = vmul.f32 %v6343, 5.0
        %v6376 = vmul.f32 %v6344, 5.0
        %v6377 = vmul.f32 %v6345, 5.0
        %v6378 = vmul.f32 %v6346, 5.0
        %v6379 = vmul.f32 %v6347, 5.0
        %v6380 = vmul.f32 %v6348, 5.0
        %v6381 = vmul.f32 %v6349, 5.0
        %v6382 = vmul.f32 %v6350, 5.0
        %v6383 = vmul.f32 %v6351, 5.0
        %v6384 = vmul.f32 %v6352, 5.0
        %v6385 = vmul.f32 %v6353, 5.0
        %v6386 = vmul.f32 %v6354, 5.0
        %v6387 = vmul.f32 %v6355, 5.0
        %v6388 = vmul.f32 %v6356, 5.0
        %v6389 = vmul.f32 %v6357, 5.0
        %v6390 = vmul.f32 %v6358, 5.0
        %v6391 = vmul.f32 %v6359, 5.0
        %v6392 = vmul.f32 %v6360, 5.0
        %v6393 = vmul.f32 %v6361, 5.0
        %v6394 = vmul.f32 %v6362, 5.0
        %v6395 = vmul.f32 %v6363, 5.0
        %v6396 = vmul.f32 %v6364, 5.0
        %v6397 = vmul.f32 %v6365, 5.0
        %v6398 = vmul.f32 %v6366, 5.0
        %v6399 = vmul.f32 %v6367, 5.0
        %v6400 = vmul.f32 %v6368, 5.0
        %v6401 = vmul.f32 %v6369, 5.0
        %v6402 = vmul.f32 %v6370, 5.0
        %v6403 = vmul.f32 %v6371, 5.0
        %v6404 = vmul.f32 %v6372, 5.0
        %v6405 = vmul.f32 %v6373, 5.0
        %v6406 = vxor.u32 %v6374, 2147483648
        %v6407 = vxor.u32 %v6375, 2147483648
        %v6408 = vxor.u32 %v6376, 2147483648
        %v6409 = vxor.u32 %v6377, 2147483648
        %v6410 = vxor.u32 %v6378, 2147483648
        %v6411 = vxor.u32 %v6379, 2147483648
        %v6412 = vxor.u32 %v6380, 2147483648
        %v6413 = vxor.u32 %v6381, 2147483648
        %v6414 = vxor.u32 %v6382, 2147483648
        %v6415 = vxor.u32 %v6383, 2147483648
        %v6416 = vxor.u32 %v6384, 2147483648
        %v6417 = vxor.u32 %v6385, 2147483648
        %v6418 = vxor.u32 %v6386, 2147483648
        %v6419 = vxor.u32 %v6387, 2147483648
        %v6420 = vxor.u32 %v6388, 2147483648
        %v6421 = vxor.u32 %v6389, 2147483648
        %v6422 = vxor.u32 %v6390, 2147483648
        %v6423 = vxor.u32 %v6391, 2147483648
        %v6424 = vxor.u32 %v6392, 2147483648
        %v6425 = vxor.u32 %v6393, 2147483648
        %v6426 = vxor.u32 %v6394, 2147483648
        %v6427 = vxor.u32 %v6395, 2147483648
        %v6428 = vxor.u32 %v6396, 2147483648
        %v6429 = vxor.u32 %v6397, 2147483648
        %v6430 = vxor.u32 %v6398, 2147483648
        %v6431 = vxor.u32 %v6399, 2147483648
        %v6432 = vxor.u32 %v6400, 2147483648
        %v6433 = vxor.u32 %v6401, 2147483648
        %v6434 = vxor.u32 %v6402, 2147483648
        %v6435 = vxor.u32 %v6403, 2147483648
        %v6436 = vxor.u32 %v6404, 2147483648
        %v6437 = vxor.u32 %v6405, 2147483648
        %v6438 = vmul.f32 %v6406, 1.442695
        %v6439 = vpow.pop %v6438
        %v6440 = vmul.f32 %v6407, 1.442695
        %v6441 = vpow.pop %v6440
        %v6442 = vmul.f32 %v6408, 1.442695
        %v6443 = vpow.pop %v6442
        %v6444 = vmul.f32 %v6409, 1.442695
        %v6445 = vpow.pop %v6444
        %v6446 = vmul.f32 %v6410, 1.442695
        %v6447 = vpow.pop %v6446
        %v6448 = vmul.f32 %v6411, 1.442695
        %v6449 = vpow.pop %v6448
        %v6450 = vmul.f32 %v6412, 1.442695
        %v6451 = vpow.pop %v6450
        %v6452 = vmul.f32 %v6413, 1.442695
        %v6453 = vpow.pop %v6452
        %v6454 = vmul.f32 %v6414, 1.442695
        %v6455 = vpow.pop %v6454
        %v6456 = vmul.f32 %v6415, 1.442695
        %v6457 = vpow.pop %v6456
        %v6458 = vmul.f32 %v6416, 1.442695
        %v6459 = vpow.pop %v6458
        %v6460 = vmul.f32 %v6417, 1.442695
        %v6461 = vpow.pop %v6460
        %v6462 = vmul.f32 %v6418, 1.442695
        %v6463 = vpow.pop %v6462
        %v6464 = vmul.f32 %v6419, 1.442695
        %v6465 = vpow.pop %v6464
        %v6466 = vmul.f32 %v6420, 1.442695
        %v6467 = vpow.pop %v6466
        %v6468 = vmul.f32 %v6421, 1.442695
        %v6469 = vpow.pop %v6468
        %v6470 = vmul.f32 %v6422, 1.442695
        %v6471 = vpow.pop %v6470
        %v6472 = vmul.f32 %v6423, 1.442695
        %v6473 = vpow.pop %v6472
        %v6474 = vmul.f32 %v6424, 1.442695
        %v6475 = vpow.pop %v6474
        %v6476 = vmul.f32 %v6425, 1.442695
        %v6477 = vpow.pop %v6476
        %v6478 = vmul.f32 %v6426, 1.442695
        %v6479 = vpow.pop %v6478
        %v6480 = vmul.f32 %v6427, 1.442695
        %v6481 = vpow.pop %v6480
        %v6482 = vmul.f32 %v6428, 1.442695
        %v6483 = vpow.pop %v6482
        %v6484 = vmul.f32 %v6429, 1.442695
        %v6485 = vpow.pop %v6484
        %v6486 = vmul.f32 %v6430, 1.442695
        %v6487 = vpow.pop %v6486
        %v6488 = vmul.f32 %v6431, 1.442695
        %v6489 = vpow.pop %v6488
        %v6490 = vmul.f32 %v6432, 1.442695
        %v6491 = vpow.pop %v6490
        %v6492 = vmul.f32 %v6433, 1.442695
        %v6493 = vpow.pop %v6492
        %v6494 = vmul.f32 %v6434, 1.442695
        %v6495 = vpow.pop %v6494
        %v6496 = vmul.f32 %v6435, 1.442695
        %v6497 = vpow.pop %v6496
        %v6498 = vmul.f32 %v6436, 1.442695
        %v6499 = vpow.pop %v6498
        %v6500 = vmul.f32 %v6437, 1.442695
        %v6501 = vpow.pop %v6500
        %v6502 = vadd.f32 %v6439, 1.0
        %v6503 = vadd.f32 %v6441, 1.0
        %v6504 = vadd.f32 %v6443, 1.0
        %v6505 = vadd.f32 %v6445, 1.0
        %v6506 = vadd.f32 %v6447, 1.0
        %v6507 = vadd.f32 %v6449, 1.0
        %v6508 = vadd.f32 %v6451, 1.0
        %v6509 = vadd.f32 %v6453, 1.0
        %v6510 = vadd.f32 %v6455, 1.0
        %v6511 = vadd.f32 %v6457, 1.0
        %v6512 = vadd.f32 %v6459, 1.0
        %v6513 = vadd.f32 %v6461, 1.0
        %v6514 = vadd.f32 %v6463, 1.0
        %v6515 = vadd.f32 %v6465, 1.0
        %v6516 = vadd.f32 %v6467, 1.0
        %v6517 = vadd.f32 %v6469, 1.0
        %v6518 = vadd.f32 %v6471, 1.0
        %v6519 = vadd.f32 %v6473, 1.0
        %v6520 = vadd.f32 %v6475, 1.0
        %v6521 = vadd.f32 %v6477, 1.0
        %v6522 = vadd.f32 %v6479, 1.0
        %v6523 = vadd.f32 %v6481, 1.0
        %v6524 = vadd.f32 %v6483, 1.0
        %v6525 = vadd.f32 %v6485, 1.0
        %v6526 = vadd.f32 %v6487, 1.0
        %v6527 = vadd.f32 %v6489, 1.0
        %v6528 = vadd.f32 %v6491, 1.0
        %v6529 = vadd.f32 %v6493, 1.0
        %v6530 = vadd.f32 %v6495, 1.0
        %v6531 = vadd.f32 %v6497, 1.0
        %v6532 = vadd.f32 %v6499, 1.0
        %v6533 = vadd.f32 %v6501, 1.0
        %v6534 = vrcp.pop %v6502
        %v6535 = vmul.f32 1.0, %v6534
        %v6536 = vrcp.pop %v6503
        %v6537 = vmul.f32 1.0, %v6536
        %v6538 = vrcp.pop %v6504
        %v6539 = vmul.f32 1.0, %v6538
        %v6540 = vrcp.pop %v6505
        %v6541 = vmul.f32 1.0, %v6540
        %v6542 = vrcp.pop %v6506
        %v6543 = vmul.f32 1.0, %v6542
        %v6544 = vrcp.pop %v6507
        %v6545 = vmul.f32 1.0, %v6544
        %v6546 = vrcp.pop %v6508
        %v6547 = vmul.f32 1.0, %v6546
        %v6548 = vrcp.pop %v6509
        %v6549 = vmul.f32 1.0, %v6548
        %v6550 = vrcp.pop %v6510
        %v6551 = vmul.f32 1.0, %v6550
        %v6552 = vrcp.pop %v6511
        %v6553 = vmul.f32 1.0, %v6552
        %v6554 = vrcp.pop %v6512
        %v6555 = vmul.f32 1.0, %v6554
        %v6556 = vrcp.pop %v6513
        %v6557 = vmul.f32 1.0, %v6556
        %v6558 = vrcp.pop %v6514
        %v6559 = vmul.f32 1.0, %v6558
        %v6560 = vrcp.pop %v6515
        %v6561 = vmul.f32 1.0, %v6560
        %v6562 = vrcp.pop %v6516
        %v6563 = vmul.f32 1.0, %v6562
        %v6564 = vrcp.pop %v6517
        %v6565 = vmul.f32 1.0, %v6564
        %v6566 = vrcp.pop %v6518
        %v6567 = vmul.f32 1.0, %v6566
        %v6568 = vrcp.pop %v6519
        %v6569 = vmul.f32 1.0, %v6568
        %v6570 = vrcp.pop %v6520
        %v6571 = vmul.f32 1.0, %v6570
        %v6572 = vrcp.pop %v6521
        %v6573 = vmul.f32 1.0, %v6572
        %v6574 = vrcp.pop %v6522
        %v6575 = vmul.f32 1.0, %v6574
        %v6576 = vrcp.pop %v6523
        %v6577 = vmul.f32 1.0, %v6576
        %v6578 = vrcp.pop %v6524
        %v6579 = vmul.f32 1.0, %v6578
        %v6580 = vrcp.pop %v6525
        %v6581 = vmul.f32 1.0, %v6580
        %v6582 = vrcp.pop %v6526
        %v6583 = vmul.f32 1.0, %v6582
        %v6584 = vrcp.pop %v6527
        %v6585 = vmul.f32 1.0, %v6584
        %v6586 = vrcp.pop %v6528
        %v6587 = vmul.f32 1.0, %v6586
        %v6588 = vrcp.pop %v6529
        %v6589 = vmul.f32 1.0, %v6588
        %v6590 = vrcp.pop %v6530
        %v6591 = vmul.f32 1.0, %v6590
        %v6592 = vrcp.pop %v6531
        %v6593 = vmul.f32 1.0, %v6592
        %v6594 = vrcp.pop %v6532
        %v6595 = vmul.f32 1.0, %v6594
        %v6596 = vrcp.pop %v6533
        %v6597 = vmul.f32 1.0, %v6596
        %6598 = vst [vmem:[%s518] sm:$0xff] %v6535
        %6599 = vst [vmem:[%s518 + $0x8] sm:$0xff] %v6537
        %6600 = vst [vmem:[%s518 + $0x10] sm:$0xff] %v6539
        %6601 = vst [vmem:[%s518 + $0x18] sm:$0xff] %v6541
        %6602 = vst [vmem:[%s518 + $0x20] sm:$0xff] %v6543
        %6603 = vst [vmem:[%s518 + $0x28] sm:$0xff] %v6545
        %6604 = vst [vmem:[%s518 + $0x30] sm:$0xff] %v6547
        %6605 = vst [vmem:[%s518 + $0x38] sm:$0xff] %v6549
        %6606 = vst [vmem:[%s518 + $0x40] sm:$0xff] %v6551
        %6607 = vst [vmem:[%s518 + $0x48] sm:$0xff] %v6553
        %6608 = vst [vmem:[%s518 + $0x50] sm:$0xff] %v6555
        %6609 = vst [vmem:[%s518 + $0x58] sm:$0xff] %v6557
        %6610 = vst [vmem:[%s518 + $0x60] sm:$0xff] %v6559
        %6611 = vst [vmem:[%s518 + $0x68] sm:$0xff] %v6561
        %6612 = vst [vmem:[%s518 + $0x70] sm:$0xff] %v6563
        %6613 = vst [vmem:[%s518 + $0x78] sm:$0xff] %v6565
        %6614 = vst [vmem:[%s518 + $0x80] sm:$0xff] %v6567
        %6615 = vst [vmem:[%s518 + $0x88] sm:$0xff] %v6569
        %6616 = vst [vmem:[%s518 + $0x90] sm:$0xff] %v6571
        %6617 = vst [vmem:[%s518 + $0x98] sm:$0xff] %v6573
        %6618 = vst [vmem:[%s518 + $0xa0] sm:$0xff] %v6575
        %6619 = vst [vmem:[%s518 + $0xa8] sm:$0xff] %v6577
        %6620 = vst [vmem:[%s518 + $0xb0] sm:$0xff] %v6579
        %6621 = vst [vmem:[%s518 + $0xb8] sm:$0xff] %v6581
        %6622 = vst [vmem:[%s518 + $0xc0] sm:$0xff] %v6583
        %6623 = vst [vmem:[%s518 + $0xc8] sm:$0xff] %v6585
        %6624 = vst [vmem:[%s518 + $0xd0] sm:$0xff] %v6587
        %6625 = vst [vmem:[%s518 + $0xd8] sm:$0xff] %v6589
        %6626 = vst [vmem:[%s518 + $0xe0] sm:$0xff] %v6591
        %6627 = vst [vmem:[%s518 + $0xe8] sm:$0xff] %v6593
        %6628 = vst [vmem:[%s518 + $0xf0] sm:$0xff] %v6595
        %6629 = vst [vmem:[%s518 + $0xf8] sm:$0xff] %v6597
        %s6630 = sand.u32 %s282, 1
        %s6631 = scalar_lea.sflag [#allocation4], %s6630
        %s6632 = sand.u32 %s282, 1
        %s6633 = smul.addr %s6632, 256
        %s6634 = scalar_lea.vmem [#allocation14], %s6633
        // Predicated region
        $region93: #{tpu_custom_call.1} parent=63 // pred_check
          %p6635 = pneg %p292
        $region94: #{tpu_custom_call.1} parent=63 // pred_check_branch
          %6637 = sbr.rel (%p6635) target = $region96
        $region95: #{tpu_custom_call.1} parent=63 // pred_region
          %s6638 = smul.u32 16, %s33
          %s6640 = ssub.s32 4096, 4096
          %6641 = vsyncadd %s6631, %s6640
          %s6642 = smul.addr %s6638, 2
          %s6643 = smul.addr %s6642, 128
          %s6644 = scalar_lea.hbm %s11, %s6643
          %s6645 = sshll.u32 %s6634, 4
          %s6646 = int_to_ptr.vmem [resolvable:$true] %s6645
          %6651 = dma.vmem_to_hbm [thread:$0]  %s6646, 4096, %s6644, %s6631, 256, 256, 16
        $region96: #{tpu_custom_call.1} parent=63 // pred_fallthru
          _
      $region64: #{tpu_custom_call.1} parent=5 // pred_fallthru
        _
      %p6652 = scmp.le.s32.totalorder 2, %s28
      // Predicated region
      $region97: #{tpu_custom_call.1} parent=5 // pred_check
        %p6653 = pneg %p6652
      $region98: #{tpu_custom_call.1} parent=5 // pred_check_branch
        %6655 = sbr.rel (%p6653) target = $region100
      $region99: #{tpu_custom_call.1} parent=5 // pred_region
        %s6656 = ssub.s32 %s28, 2
        // Predicated region
        $region101: #{tpu_custom_call.1} parent=99 // pred_check
          %p6657 = pneg %p298
        $region102: #{tpu_custom_call.1} parent=99 // pred_check_branch
          %6659 = sbr.rel (%p6657) target = $region104
        $region103: #{tpu_custom_call.1} parent=99 // pred_region
          %s6660 = sand.u32 %s283, 1
          %s6661 = scalar_lea.sflag [#allocation4], %s6660
          %s6662 = sand.u32 %s283, 1
          %s6663 = smul.addr %s6662, 256
          %s6664 = scalar_lea.vmem [#allocation14], %s6663
          %6665 = dma.done %s6661, 4096
        $region104: #{tpu_custom_call.1} parent=99 // pred_fallthru
          _
      $region100: #{tpu_custom_call.1} parent=5 // pred_fallthru
        _
    $region6: #{tpu_custom_call.1} parent=1 // loop_footer
      %s32 = sadd.s32 1, %s28
    $region7: #{tpu_custom_call.1} parent=1 // loop_footer_branch
      %27 = sbr.rel target = $region3
    $region8: #{tpu_custom_call.1} parent=1 // loop_exit
      _
    %6666 = vsyncpa [#allocation3], 1
    %s6667 = scalar_lea.sflag [#allocation3], 1
    %6668 = vsyncpa %s6667, 1
    %6669 = vsyncpa [#allocation6], 1
    %s6670 = scalar_lea.sflag [#allocation6], 1
    %6671 = vsyncpa %s6670, 1
    %6672 = vsyncpa [#allocation9], 1
    %6673 = vsyncpa [#allocation12], 1
    %6674 = vsyncpa [#allocation4], 1
    %s6675 = scalar_lea.sflag [#allocation4], 1
    %6676 = vsyncpa %s6675, 1

</llo_original>
